<compile_context>
chip_gen: v6e
topology: v6e:2x2x1
jax: 0.10.0
libtpu: 0.0.40
codegen_flags: <defaults>
</compile_context>

<pallas_src>
import jax
import jax.numpy as jnp
from jax.experimental import pallas as pl
from jax.experimental.pallas import tpu as pltpu


def _vmem():
    return pl.BlockSpec(memory_space=pltpu.MemorySpace.VMEM)


# ----------------------------- in-kernel helpers -----------------------------

def _im2col_3x3_into(p_ref, x, cin):
    """Write 3x3 / pad-1 im2col patches of x into the scratch p_ref.

    p_ref: (N, H, W, 9*cin) VMEM scratch; x: (N, H, W, cin) value.
    Column block t = ky*3+kx holds the input shifted by (ky-1, kx-1); border
    positions that fall outside the image keep the scratch's zero fill, which
    implements the conv's zero padding with no separate XLA pad pass.
    """
    _, H, W, _ = p_ref.shape
    p_ref[...] = jnp.zeros(p_ref.shape, jnp.float32)
    for t in range(9):
        ky, kx = t // 3, t % 3
        oy, ox = ky - 1, kx - 1
        h0, h1 = max(0, -oy), H - max(0, oy)
        w0, w1 = max(0, -ox), W - max(0, ox)
        p_ref[:, h0:h1, w0:w1, t * cin:(t + 1) * cin] = (
            x[:, h0 + oy:h1 + oy, w0 + ox:w1 + ox, :])


def _maxpool2x2(y, wp_ref, n, h, w, c):
    """2x2 / stride-2 max pool, fused in-kernel.

    y: (n*h*w, c) conv output, rows in (n, h, w) order.
    Returns (n*(h//2)*(w//2), c), rows in (n, h', w') order.
    H direction: split the leading row index (pure layout no-op reshape).
    W direction: adjacent-row pairs selected with sublane-strided reads of a
    small 2D VMEM scratch.
    """
    y5 = y.reshape(n, h // 2, 2, w, c)                    # leading-dim split only
    hp = jnp.maximum(y5[:, :, 0], y5[:, :, 1])            # (n, h//2, w, c)
    rows = n * (h // 2) * w
    wp_ref[...] = hp.reshape(rows, c)
    even = wp_ref[pl.ds(0, rows // 2, 2), :]
    odd = wp_ref[pl.ds(1, rows // 2, 2), :]
    return jnp.maximum(even, odd)                         # (rows // 2, c)


# ------------------------------- fused kernel --------------------------------

def _fused_kernel(x_ref, w1_ref, b1_ref, w2_ref, b2_ref,
                  fc1w_ref, fc1b_ref, fc2w_ref, fc2b_ref,
                  o_ref,
                  pat1_ref, wp1_ref, pat2_ref, wp2_ref, feat_ref):
    N, H, W, CIN = x_ref.shape           # (N, 16, 16, 3) NHWC
    C1 = w1_ref.shape[1]                 # 8
    C2 = w2_ref.shape[1]                 # 16

    # features[0:2]: conv 3x3 (pad 1) + ReLU  --  one K=9*CIN im2col matmul.
    _im2col_3x3_into(pat1_ref, x_ref[...], CIN)
    pm1 = pat1_ref[...].reshape(N * H * W, 9 * CIN)                 # (512, 27)
    y1 = jnp.dot(pm1, w1_ref[...], preferred_element_type=jnp.float32) + b1_ref[...]
    y1 = jnp.maximum(y1, 0.0)                                       # (N*16*16, 8)

    # features[2]: maxpool 2x2/2, fused (VMEM resident, no extra HBM pass).
    a1 = _maxpool2x2(y1, wp1_ref, N, H, W, C1)                      # (N*8*8, 8)
    a1 = a1.reshape(N, H // 2, W // 2, C1)                          # (N, 8, 8, 8)

    # features[3:5]: conv 3x3 (pad 1) + ReLU  --  one K=9*C1 im2col matmul.
    _im2col_3x3_into(pat2_ref, a1, C1)
    pm2 = pat2_ref[...].reshape(N * (H // 2) * (W // 2), 9 * C1)    # (128, 72)
    y2 = jnp.dot(pm2, w2_ref[...], preferred_element_type=jnp.float32) + b2_ref[...]
    y2 = jnp.maximum(y2, 0.0)                                       # (N*8*8, 16)

    # features[5]: maxpool 2x2/2 -> 4x4 spatial map, rows stay (n, h, w).
    a2 = _maxpool2x2(y2, wp2_ref, N, H // 2, W // 2, C2)            # (N*4*4, 16)

    # avgpool: AdaptiveAvgPool2d((2,2)) on a 4x4 map == fixed 2x2/stride-2 window.
    # flatten: emitted directly in NHWC (h', w', c) lane order; the matching NCHW
    # (c, h', w') permutation is folded into fc1_w at init time (no runtime transpose).
    # TODO(synk): general AdaptiveAvgPool2d (inputs other than 16x16) not implemented.
    x3 = a2.reshape(N, (H // 4) * (W // 4), C2)                     # (N, 16, 16)
    for p_idx in range(4):
        ph, pw = p_idx // 2, p_idx % 2
        r = 8 * ph + 2 * pw
        blk = (x3[:, r, :] + x3[:, r + 1, :] +
               x3[:, r + 4, :] + x3[:, r + 5, :]) * 0.25            # (N, 16)
        feat_ref[:, p_idx * C2:(p_idx + 1) * C2] = blk

    # classifier[:4]: Linear -> ReLU -> Dropout -> Linear.
    # TODO(synk): training-mode dropout (p=0.5 RNG mask) not implemented (eval identity).
    feat = feat_ref[...]                                            # (N, 64)
    hid = jnp.dot(feat, fc1w_ref[...], preferred_element_type=jnp.float32) + fc1b_ref[...]
    hid = jnp.maximum(hid, 0.0)
    o_ref[...] = jnp.dot(hid, fc2w_ref[...], preferred_element_type=jnp.float32) + fc2b_ref[...]


# ------------------------------ public wrapper --------------------------------

def feature_extractor(x_nchw, p):
    """FeatureExtractor.forward. x_nchw: (N, 3, 16, 16) float32 (PyTorch NCHW)."""
    N, CIN, H, W = x_nchw.shape
    assert (CIN, H, W) == (3, 16, 16), "kernel is specialized to 3x16x16 inputs"
    x = jnp.transpose(x_nchw, (0, 2, 3, 1)).astype(jnp.float32)     # NHWC at the boundary
    C1, C2, FEAT, OUT = 8, 16, 64, 32
    # Whole network in one gridless pallas_call: total weights+activations are a
    # few hundred KiB, far under VMEM on v5e/v6e/v7x.  For large batches, add a
    # grid=(N,) over batch with dimension_semantics=("parallel",) to use both
    # v7x TensorCores; at toy batch sizes the extra grid steps only add overhead.
    return pl.pallas_call(
        _fused_kernel,
        out_shape=jax.ShapeDtypeStruct((N, OUT), jnp.float32),
        in_specs=[_vmem()] * 9,
        out_specs=_vmem(),
        scratch_shapes=[
            pltpu.VMEM((N, H, W, 9 * CIN), jnp.float32),             # conv1 im2col patches
            pltpu.VMEM((N * (H // 2) * W, C1), jnp.float32),         # conv1 W-pool staging
            pltpu.VMEM((N, H // 2, W // 2, 9 * C1), jnp.float32),    # conv2 im2col patches
            pltpu.VMEM((N * (H // 4) * (W // 2), C2), jnp.float32),  # conv2 W-pool staging
            pltpu.VMEM((N, FEAT), jnp.float32),                      # avgpool+flatten features
        ],
    )(x, p["conv1_w"], p["conv1_b"], p["conv2_w"], p["conv2_b"],
      p["fc1_w"], p["fc1_b"], p["fc2_w"], p["fc2_b"])


# --------------------------------- parameters ---------------------------------

def init_params(key):
    """Random parameters generated in PyTorch layouts, converted to kernel layouts."""
    ks = jax.random.split(key, 8)

    def conv_w(k, cout, cin):
        # PyTorch (Cout, Cin, kh, kw) -> im2col layout (9*Cin, Cout), row = (ky, kx, cin).
        w = jax.random.normal(k, (cout, cin, 3, 3), jnp.float32) * 0.1
        return jnp.transpose(w, (2, 3, 1, 0)).reshape(9 * cin, cout)

    def fc1_w(k):
        # PyTorch (out=32, in=64), input index c*4 + h*2 + w (NCHW flatten) ->
        # kernel layout (64, 32), row index h*32 + w*16 + c (NHWC flatten):
        # the flatten/transpose permutation is folded into the weights (free at runtime).
        w = jax.random.normal(k, (32, 64), jnp.float32) * 0.1
        w = jnp.transpose(w).reshape(16, 2, 2, 32)                   # (c, h, w, out)
        return jnp.transpose(w, (1, 2, 0, 3)).reshape(64, 32)        # (h, w, c) x out

    def fc2_w(k):
        w = jax.random.normal(k, (32, 32), jnp.float32) * 0.1        # PyTorch (out, in)
        return jnp.transpose(w)                                      # (in, out)

    return {
        "conv1_w": conv_w(ks[0], 8, 3),
        "conv1_b": jax.random.normal(ks[1], (1, 8), jnp.float32) * 0.1,
        "conv2_w": conv_w(ks[2], 16, 8),
        "conv2_b": jax.random.normal(ks[3], (1, 16), jnp.float32) * 0.1,
        "fc1_w": fc1_w(ks[4]),
        "fc1_b": jax.random.normal(ks[5], (1, 32), jnp.float32) * 0.1,
        "fc2_w": fc2_w(ks[6]),
        "fc2_b": jax.random.normal(ks[7], (1, 32), jnp.float32) * 0.1,
    }


if __name__ == "__main__":
    key = jax.random.PRNGKey(0)
    k_x, k_p = jax.random.split(key)
    x = jax.random.normal(k_x, (2, 3, 16, 16), jnp.float32)   # NCHW, like the PyTorch module
    params = init_params(k_p)

    out = jax.jit(feature_extractor)(x, params)
    out = jax.block_until_ready(out)
    assert out.shape == (2, 32) and out.dtype == jnp.float32
    assert bool(jnp.isfinite(out).all())
    print("KERNEL_OK")
</pallas_src>

<mosaic_0001>
module attributes {stable_mosaic.version = 11 : i64} {
  func.func @_fused_kernel(%arg0: memref<2x16x16x3xf32, #tpu.memory_space<vmem>>, %arg1: memref<27x8xf32, #tpu.memory_space<vmem>>, %arg2: memref<1x8xf32, #tpu.memory_space<vmem>>, %arg3: memref<72x16xf32, #tpu.memory_space<vmem>>, %arg4: memref<1x16xf32, #tpu.memory_space<vmem>>, %arg5: memref<64x32xf32, #tpu.memory_space<vmem>>, %arg6: memref<1x32xf32, #tpu.memory_space<vmem>>, %arg7: memref<32x32xf32, #tpu.memory_space<vmem>>, %arg8: memref<1x32xf32, #tpu.memory_space<vmem>>, %arg9: memref<2x32xf32, #tpu.memory_space<vmem>>, %arg10: memref<2x16x16x27xf32, #tpu.memory_space<vmem>>, %arg11: memref<256x8xf32, #tpu.memory_space<vmem>>, %arg12: memref<2x8x8x72xf32, #tpu.memory_space<vmem>>, %arg13: memref<64x16xf32, #tpu.memory_space<vmem>>, %arg14: memref<2x64xf32, #tpu.memory_space<vmem>>) attributes {dimension_semantics = [], scalar_prefetch = 0 : i64, scratch_operands = 5 : i64, tpu.core_type = #tpu.core_type<tc>} {
    %c0 = arith.constant 0 : index
    %c0_0 = arith.constant 0 : index
    %c0_1 = arith.constant 0 : index
    %c0_2 = arith.constant 0 : index
    %0 = vector.load %arg0[%c0, %c0_0, %c0_1, %c0_2] : memref<2x16x16x3xf32, #tpu.memory_space<vmem>>, vector<2x16x16x3xf32>
    %cst = arith.constant 0.000000e+00 : f32
    %1 = vector.broadcast %cst : f32 to vector<2x16x16x27xf32>
    %c0_3 = arith.constant 0 : index
    %c0_4 = arith.constant 0 : index
    %c0_5 = arith.constant 0 : index
    %c0_6 = arith.constant 0 : index
    %2 = vector.load %arg10[%c0_3, %c0_4, %c0_5, %c0_6] : memref<2x16x16x27xf32, #tpu.memory_space<vmem>>, vector<2x16x16x27xf32>
    tpu.vector_store %arg10[%c0_3, %c0_4, %c0_5, %c0_6], %1 {strides = array<i32>} : memref<2x16x16x27xf32, #tpu.memory_space<vmem>>, vector<2x16x16x27xf32>,
    %3 = vector.extract_strided_slice %0 {offsets = [0, 0, 0, 0], sizes = [2, 15, 15, 3], strides = [1, 1, 1, 1]} : vector<2x16x16x3xf32> to vector<2x15x15x3xf32>
    %c0_7 = arith.constant 0 : index
    %c1 = arith.constant 1 : index
    %c1_8 = arith.constant 1 : index
    %c0_9 = arith.constant 0 : index
    %4 = vector.load %arg10[%c0_7, %c1, %c1_8, %c0_9] : memref<2x16x16x27xf32, #tpu.memory_space<vmem>>, vector<2x15x15x3xf32>
    tpu.vector_store %arg10[%c0_7, %c1, %c1_8, %c0_9], %3 {strides = array<i32>} : memref<2x16x16x27xf32, #tpu.memory_space<vmem>>, vector<2x15x15x3xf32>,
    %5 = vector.extract_strided_slice %0 {offsets = [0, 0, 0, 0], sizes = [2, 15, 16, 3], strides = [1, 1, 1, 1]} : vector<2x16x16x3xf32> to vector<2x15x16x3xf32>
    %c0_10 = arith.constant 0 : index
    %c1_11 = arith.constant 1 : index
    %c0_12 = arith.constant 0 : index
    %c3 = arith.constant 3 : index
    %6 = vector.load %arg10[%c0_10, %c1_11, %c0_12, %c3] : memref<2x16x16x27xf32, #tpu.memory_space<vmem>>, vector<2x15x16x3xf32>
    tpu.vector_store %arg10[%c0_10, %c1_11, %c0_12, %c3], %5 {strides = array<i32>} : memref<2x16x16x27xf32, #tpu.memory_space<vmem>>, vector<2x15x16x3xf32>,
    %7 = vector.extract_strided_slice %0 {offsets = [0, 0, 1, 0], sizes = [2, 15, 15, 3], strides = [1, 1, 1, 1]} : vector<2x16x16x3xf32> to vector<2x15x15x3xf32>
    %c0_13 = arith.constant 0 : index
    %c1_14 = arith.constant 1 : index
    %c0_15 = arith.constant 0 : index
    %c6 = arith.constant 6 : index
    %8 = vector.load %arg10[%c0_13, %c1_14, %c0_15, %c6] : memref<2x16x16x27xf32, #tpu.memory_space<vmem>>, vector<2x15x15x3xf32>
    tpu.vector_store %arg10[%c0_13, %c1_14, %c0_15, %c6], %7 {strides = array<i32>} : memref<2x16x16x27xf32, #tpu.memory_space<vmem>>, vector<2x15x15x3xf32>,
    %9 = vector.extract_strided_slice %0 {offsets = [0, 0, 0, 0], sizes = [2, 16, 15, 3], strides = [1, 1, 1, 1]} : vector<2x16x16x3xf32> to vector<2x16x15x3xf32>
    %c0_16 = arith.constant 0 : index
    %c0_17 = arith.constant 0 : index
    %c1_18 = arith.constant 1 : index
    %c9 = arith.constant 9 : index
    %10 = vector.load %arg10[%c0_16, %c0_17, %c1_18, %c9] : memref<2x16x16x27xf32, #tpu.memory_space<vmem>>, vector<2x16x15x3xf32>
    tpu.vector_store %arg10[%c0_16, %c0_17, %c1_18, %c9], %9 {strides = array<i32>} : memref<2x16x16x27xf32, #tpu.memory_space<vmem>>, vector<2x16x15x3xf32>,
    %c0_19 = arith.constant 0 : index
    %c0_20 = arith.constant 0 : index
    %c0_21 = arith.constant 0 : index
    %c12 = arith.constant 12 : index
    %11 = vector.load %arg10[%c0_19, %c0_20, %c0_21, %c12] : memref<2x16x16x27xf32, #tpu.memory_space<vmem>>, vector<2x16x16x3xf32>
    tpu.vector_store %arg10[%c0_19, %c0_20, %c0_21, %c12], %0 {strides = array<i32>} : memref<2x16x16x27xf32, #tpu.memory_space<vmem>>, vector<2x16x16x3xf32>,
    %12 = vector.extract_strided_slice %0 {offsets = [0, 0, 1, 0], sizes = [2, 16, 15, 3], strides = [1, 1, 1, 1]} : vector<2x16x16x3xf32> to vector<2x16x15x3xf32>
    %c0_22 = arith.constant 0 : index
    %c0_23 = arith.constant 0 : index
    %c0_24 = arith.constant 0 : index
    %c15 = arith.constant 15 : index
    %13 = vector.load %arg10[%c0_22, %c0_23, %c0_24, %c15] : memref<2x16x16x27xf32, #tpu.memory_space<vmem>>, vector<2x16x15x3xf32>
    tpu.vector_store %arg10[%c0_22, %c0_23, %c0_24, %c15], %12 {strides = array<i32>} : memref<2x16x16x27xf32, #tpu.memory_space<vmem>>, vector<2x16x15x3xf32>,
    %14 = vector.extract_strided_slice %0 {offsets = [0, 1, 0, 0], sizes = [2, 15, 15, 3], strides = [1, 1, 1, 1]} : vector<2x16x16x3xf32> to vector<2x15x15x3xf32>
    %c0_25 = arith.constant 0 : index
    %c0_26 = arith.constant 0 : index
    %c1_27 = arith.constant 1 : index
    %c18 = arith.constant 18 : index
    %15 = vector.load %arg10[%c0_25, %c0_26, %c1_27, %c18] : memref<2x16x16x27xf32, #tpu.memory_space<vmem>>, vector<2x15x15x3xf32>
    tpu.vector_store %arg10[%c0_25, %c0_26, %c1_27, %c18], %14 {strides = array<i32>} : memref<2x16x16x27xf32, #tpu.memory_space<vmem>>, vector<2x15x15x3xf32>,
    %16 = vector.extract_strided_slice %0 {offsets = [0, 1, 0, 0], sizes = [2, 15, 16, 3], strides = [1, 1, 1, 1]} : vector<2x16x16x3xf32> to vector<2x15x16x3xf32>
    %c0_28 = arith.constant 0 : index
    %c0_29 = arith.constant 0 : index
    %c0_30 = arith.constant 0 : index
    %c21 = arith.constant 21 : index
    %17 = vector.load %arg10[%c0_28, %c0_29, %c0_30, %c21] : memref<2x16x16x27xf32, #tpu.memory_space<vmem>>, vector<2x15x16x3xf32>
    tpu.vector_store %arg10[%c0_28, %c0_29, %c0_30, %c21], %16 {strides = array<i32>} : memref<2x16x16x27xf32, #tpu.memory_space<vmem>>, vector<2x15x16x3xf32>,
    %18 = vector.extract_strided_slice %0 {offsets = [0, 1, 1, 0], sizes = [2, 15, 15, 3], strides = [1, 1, 1, 1]} : vector<2x16x16x3xf32> to vector<2x15x15x3xf32>
    %c0_31 = arith.constant 0 : index
    %c0_32 = arith.constant 0 : index
    %c0_33 = arith.constant 0 : index
    %c24 = arith.constant 24 : index
    %19 = vector.load %arg10[%c0_31, %c0_32, %c0_33, %c24] : memref<2x16x16x27xf32, #tpu.memory_space<vmem>>, vector<2x15x15x3xf32>
    tpu.vector_store %arg10[%c0_31, %c0_32, %c0_33, %c24], %18 {strides = array<i32>} : memref<2x16x16x27xf32, #tpu.memory_space<vmem>>, vector<2x15x15x3xf32>,
    %c0_34 = arith.constant 0 : index
    %c0_35 = arith.constant 0 : index
    %c0_36 = arith.constant 0 : index
    %c0_37 = arith.constant 0 : index
    %20 = vector.load %arg10[%c0_34, %c0_35, %c0_36, %c0_37] : memref<2x16x16x27xf32, #tpu.memory_space<vmem>>, vector<2x16x16x27xf32>
    %21 = vector.shape_cast %20 : vector<2x16x16x27xf32> to vector<512x27xf32>
    %c0_38 = arith.constant 0 : index
    %c0_39 = arith.constant 0 : index
    %22 = vector.load %arg1[%c0_38, %c0_39] : memref<27x8xf32, #tpu.memory_space<vmem>>, vector<27x8xf32>
    %cst_40 = arith.constant dense<0.000000e+00> : vector<512x8xf32>
    %23 = tpu.matmul %21, %22, %cst_40 {dimension_numbers = #tpu.dot_dimension_numbers<[1], [0], [0], [1], [0, 0, 1, 1], [], []>} : vector<512x27xf32>, vector<27x8xf32>, vector<512x8xf32> -> vector<512x8xf32>
    %c0_41 = arith.constant 0 : index
    %c0_42 = arith.constant 0 : index
    %24 = vector.load %arg2[%c0_41, %c0_42] : memref<1x8xf32, #tpu.memory_space<vmem>>, vector<1x8xf32>
    %25 = vector.broadcast %24 : vector<1x8xf32> to vector<512x8xf32>
    %26 = arith.addf %23, %25 : vector<512x8xf32>
    %cst_43 = arith.constant 0.000000e+00 : f32
    %27 = vector.broadcast %cst_43 : f32 to vector<512x8xf32>
    %28 = arith.maximumf %26, %27 : vector<512x8xf32>
    %29 = vector.shape_cast %28 : vector<512x8xf32> to vector<2x8x2x16x8xf32>
    %30 = vector.extract_strided_slice %29 {offsets = [0, 0, 0, 0, 0], sizes = [2, 8, 1, 16, 8], strides = [1, 1, 1, 1, 1]} : vector<2x8x2x16x8xf32> to vector<2x8x1x16x8xf32>
    %31 = vector.shape_cast %30 : vector<2x8x1x16x8xf32> to vector<2x8x16x8xf32>
    %32 = vector.extract_strided_slice %29 {offsets = [0, 0, 1, 0, 0], sizes = [2, 8, 1, 16, 8], strides = [1, 1, 1, 1, 1]} : vector<2x8x2x16x8xf32> to vector<2x8x1x16x8xf32>
    %33 = vector.shape_cast %32 : vector<2x8x1x16x8xf32> to vector<2x8x16x8xf32>
    %34 = arith.maximumf %31, %33 : vector<2x8x16x8xf32>
    %35 = vector.shape_cast %34 : vector<2x8x16x8xf32> to vector<256x8xf32>
    %c0_44 = arith.constant 0 : index
    %c0_45 = arith.constant 0 : index
    %36 = vector.load %arg11[%c0_44, %c0_45] : memref<256x8xf32, #tpu.memory_space<vmem>>, vector<256x8xf32>
    tpu.vector_store %arg11[%c0_44, %c0_45], %35 {strides = array<i32>} : memref<256x8xf32, #tpu.memory_space<vmem>>, vector<256x8xf32>,
    %c0_46 = arith.constant 0 : index
    %c0_47 = arith.constant 0 : index
    %37 = tpu.strided_load %arg11[%c0_46, %c0_47] {strides = array<i32: 2, 1>} : memref<256x8xf32, #tpu.memory_space<vmem>>, vector<128x8xf32>
    %c1_48 = arith.constant 1 : index
    %c0_49 = arith.constant 0 : index
    %38 = tpu.strided_load %arg11[%c1_48, %c0_49] {strides = array<i32: 2, 1>} : memref<256x8xf32, #tpu.memory_space<vmem>>, vector<128x8xf32>
    %39 = arith.maximumf %37, %38 : vector<128x8xf32>
    %40 = vector.shape_cast %39 : vector<128x8xf32> to vector<2x8x8x8xf32>
    %cst_50 = arith.constant 0.000000e+00 : f32
    %41 = vector.broadcast %cst_50 : f32 to vector<2x8x8x72xf32>
    %c0_51 = arith.constant 0 : index
    %c0_52 = arith.constant 0 : index
    %c0_53 = arith.constant 0 : index
    %c0_54 = arith.constant 0 : index
    %42 = vector.load %arg12[%c0_51, %c0_52, %c0_53, %c0_54] : memref<2x8x8x72xf32, #tpu.memory_space<vmem>>, vector<2x8x8x72xf32>
    tpu.vector_store %arg12[%c0_51, %c0_52, %c0_53, %c0_54], %41 {strides = array<i32>} : memref<2x8x8x72xf32, #tpu.memory_space<vmem>>, vector<2x8x8x72xf32>,
    %43 = vector.extract_strided_slice %40 {offsets = [0, 0, 0, 0], sizes = [2, 7, 7, 8], strides = [1, 1, 1, 1]} : vector<2x8x8x8xf32> to vector<2x7x7x8xf32>
    %c0_55 = arith.constant 0 : index
    %c1_56 = arith.constant 1 : index
    %c1_57 = arith.constant 1 : index
    %c0_58 = arith.constant 0 : index
    %44 = vector.load %arg12[%c0_55, %c1_56, %c1_57, %c0_58] : memref<2x8x8x72xf32, #tpu.memory_space<vmem>>, vector<2x7x7x8xf32>
    tpu.vector_store %arg12[%c0_55, %c1_56, %c1_57, %c0_58], %43 {strides = array<i32>} : memref<2x8x8x72xf32, #tpu.memory_space<vmem>>, vector<2x7x7x8xf32>,
    %45 = vector.extract_strided_slice %40 {offsets = [0, 0, 0, 0], sizes = [2, 7, 8, 8], strides = [1, 1, 1, 1]} : vector<2x8x8x8xf32> to vector<2x7x8x8xf32>
    %c0_59 = arith.constant 0 : index
    %c1_60 = arith.constant 1 : index
    %c0_61 = arith.constant 0 : index
    %c8 = arith.constant 8 : index
    %46 = vector.load %arg12[%c0_59, %c1_60, %c0_61, %c8] : memref<2x8x8x72xf32, #tpu.memory_space<vmem>>, vector<2x7x8x8xf32>
    tpu.vector_store %arg12[%c0_59, %c1_60, %c0_61, %c8], %45 {strides = array<i32>} : memref<2x8x8x72xf32, #tpu.memory_space<vmem>>, vector<2x7x8x8xf32>,
    %47 = vector.extract_strided_slice %40 {offsets = [0, 0, 1, 0], sizes = [2, 7, 7, 8], strides = [1, 1, 1, 1]} : vector<2x8x8x8xf32> to vector<2x7x7x8xf32>
    %c0_62 = arith.constant 0 : index
    %c1_63 = arith.constant 1 : index
    %c0_64 = arith.constant 0 : index
    %c16 = arith.constant 16 : index
    %48 = vector.load %arg12[%c0_62, %c1_63, %c0_64, %c16] : memref<2x8x8x72xf32, #tpu.memory_space<vmem>>, vector<2x7x7x8xf32>
    tpu.vector_store %arg12[%c0_62, %c1_63, %c0_64, %c16], %47 {strides = array<i32>} : memref<2x8x8x72xf32, #tpu.memory_space<vmem>>, vector<2x7x7x8xf32>,
    %49 = vector.extract_strided_slice %40 {offsets = [0, 0, 0, 0], sizes = [2, 8, 7, 8], strides = [1, 1, 1, 1]} : vector<2x8x8x8xf32> to vector<2x8x7x8xf32>
    %c0_65 = arith.constant 0 : index
    %c0_66 = arith.constant 0 : index
    %c1_67 = arith.constant 1 : index
    %c24_68 = arith.constant 24 : index
    %50 = vector.load %arg12[%c0_65, %c0_66, %c1_67, %c24_68] : memref<2x8x8x72xf32, #tpu.memory_space<vmem>>, vector<2x8x7x8xf32>
    tpu.vector_store %arg12[%c0_65, %c0_66, %c1_67, %c24_68], %49 {strides = array<i32>} : memref<2x8x8x72xf32, #tpu.memory_space<vmem>>, vector<2x8x7x8xf32>,
    %c0_69 = arith.constant 0 : index
    %c0_70 = arith.constant 0 : index
    %c0_71 = arith.constant 0 : index
    %c32 = arith.constant 32 : index
    %51 = vector.load %arg12[%c0_69, %c0_70, %c0_71, %c32] : memref<2x8x8x72xf32, #tpu.memory_space<vmem>>, vector<2x8x8x8xf32>
    tpu.vector_store %arg12[%c0_69, %c0_70, %c0_71, %c32], %40 {strides = array<i32>} : memref<2x8x8x72xf32, #tpu.memory_space<vmem>>, vector<2x8x8x8xf32>,
    %52 = vector.extract_strided_slice %40 {offsets = [0, 0, 1, 0], sizes = [2, 8, 7, 8], strides = [1, 1, 1, 1]} : vector<2x8x8x8xf32> to vector<2x8x7x8xf32>
    %c0_72 = arith.constant 0 : index
    %c0_73 = arith.constant 0 : index
    %c0_74 = arith.constant 0 : index
    %c40 = arith.constant 40 : index
    %53 = vector.load %arg12[%c0_72, %c0_73, %c0_74, %c40] : memref<2x8x8x72xf32, #tpu.memory_space<vmem>>, vector<2x8x7x8xf32>
    tpu.vector_store %arg12[%c0_72, %c0_73, %c0_74, %c40], %52 {strides = array<i32>} : memref<2x8x8x72xf32, #tpu.memory_space<vmem>>, vector<2x8x7x8xf32>,
    %54 = vector.extract_strided_slice %40 {offsets = [0, 1, 0, 0], sizes = [2, 7, 7, 8], strides = [1, 1, 1, 1]} : vector<2x8x8x8xf32> to vector<2x7x7x8xf32>
    %c0_75 = arith.constant 0 : index
    %c0_76 = arith.constant 0 : index
    %c1_77 = arith.constant 1 : index
    %c48 = arith.constant 48 : index
    %55 = vector.load %arg12[%c0_75, %c0_76, %c1_77, %c48] : memref<2x8x8x72xf32, #tpu.memory_space<vmem>>, vector<2x7x7x8xf32>
    tpu.vector_store %arg12[%c0_75, %c0_76, %c1_77, %c48], %54 {strides = array<i32>} : memref<2x8x8x72xf32, #tpu.memory_space<vmem>>, vector<2x7x7x8xf32>,
    %56 = vector.extract_strided_slice %40 {offsets = [0, 1, 0, 0], sizes = [2, 7, 8, 8], strides = [1, 1, 1, 1]} : vector<2x8x8x8xf32> to vector<2x7x8x8xf32>
    %c0_78 = arith.constant 0 : index
    %c0_79 = arith.constant 0 : index
    %c0_80 = arith.constant 0 : index
    %c56 = arith.constant 56 : index
    %57 = vector.load %arg12[%c0_78, %c0_79, %c0_80, %c56] : memref<2x8x8x72xf32, #tpu.memory_space<vmem>>, vector<2x7x8x8xf32>
    tpu.vector_store %arg12[%c0_78, %c0_79, %c0_80, %c56], %56 {strides = array<i32>} : memref<2x8x8x72xf32, #tpu.memory_space<vmem>>, vector<2x7x8x8xf32>,
    %58 = vector.extract_strided_slice %40 {offsets = [0, 1, 1, 0], sizes = [2, 7, 7, 8], strides = [1, 1, 1, 1]} : vector<2x8x8x8xf32> to vector<2x7x7x8xf32>
    %c0_81 = arith.constant 0 : index
    %c0_82 = arith.constant 0 : index
    %c0_83 = arith.constant 0 : index
    %c64 = arith.constant 64 : index
    %59 = vector.load %arg12[%c0_81, %c0_82, %c0_83, %c64] : memref<2x8x8x72xf32, #tpu.memory_space<vmem>>, vector<2x7x7x8xf32>
    tpu.vector_store %arg12[%c0_81, %c0_82, %c0_83, %c64], %58 {strides = array<i32>} : memref<2x8x8x72xf32, #tpu.memory_space<vmem>>, vector<2x7x7x8xf32>,
    %c0_84 = arith.constant 0 : index
    %c0_85 = arith.constant 0 : index
    %c0_86 = arith.constant 0 : index
    %c0_87 = arith.constant 0 : index
    %60 = vector.load %arg12[%c0_84, %c0_85, %c0_86, %c0_87] : memref<2x8x8x72xf32, #tpu.memory_space<vmem>>, vector<2x8x8x72xf32>
    %61 = vector.shape_cast %60 : vector<2x8x8x72xf32> to vector<128x72xf32>
    %c0_88 = arith.constant 0 : index
    %c0_89 = arith.constant 0 : index
    %62 = vector.load %arg3[%c0_88, %c0_89] : memref<72x16xf32, #tpu.memory_space<vmem>>, vector<72x16xf32>
    %cst_90 = arith.constant dense<0.000000e+00> : vector<128x16xf32>
    %63 = tpu.matmul %61, %62, %cst_90 {dimension_numbers = #tpu.dot_dimension_numbers<[1], [0], [0], [1], [0, 0, 1, 1], [], []>} : vector<128x72xf32>, vector<72x16xf32>, vector<128x16xf32> -> vector<128x16xf32>
    %c0_91 = arith.constant 0 : index
    %c0_92 = arith.constant 0 : index
    %64 = vector.load %arg4[%c0_91, %c0_92] : memref<1x16xf32, #tpu.memory_space<vmem>>, vector<1x16xf32>
    %65 = vector.broadcast %64 : vector<1x16xf32> to vector<128x16xf32>
    %66 = arith.addf %63, %65 : vector<128x16xf32>
    %cst_93 = arith.constant 0.000000e+00 : f32
    %67 = vector.broadcast %cst_93 : f32 to vector<128x16xf32>
    %68 = arith.maximumf %66, %67 : vector<128x16xf32>
    %69 = vector.shape_cast %68 : vector<128x16xf32> to vector<2x4x2x8x16xf32>
    %70 = vector.extract_strided_slice %69 {offsets = [0, 0, 0, 0, 0], sizes = [2, 4, 1, 8, 16], strides = [1, 1, 1, 1, 1]} : vector<2x4x2x8x16xf32> to vector<2x4x1x8x16xf32>
    %71 = vector.shape_cast %70 : vector<2x4x1x8x16xf32> to vector<2x4x8x16xf32>
    %72 = vector.extract_strided_slice %69 {offsets = [0, 0, 1, 0, 0], sizes = [2, 4, 1, 8, 16], strides = [1, 1, 1, 1, 1]} : vector<2x4x2x8x16xf32> to vector<2x4x1x8x16xf32>
    %73 = vector.shape_cast %72 : vector<2x4x1x8x16xf32> to vector<2x4x8x16xf32>
    %74 = arith.maximumf %71, %73 : vector<2x4x8x16xf32>
    %75 = vector.shape_cast %74 : vector<2x4x8x16xf32> to vector<64x16xf32>
    %c0_94 = arith.constant 0 : index
    %c0_95 = arith.constant 0 : index
    %76 = vector.load %arg13[%c0_94, %c0_95] : memref<64x16xf32, #tpu.memory_space<vmem>>, vector<64x16xf32>
    tpu.vector_store %arg13[%c0_94, %c0_95], %75 {strides = array<i32>} : memref<64x16xf32, #tpu.memory_space<vmem>>, vector<64x16xf32>,
    %c0_96 = arith.constant 0 : index
    %c0_97 = arith.constant 0 : index
    %77 = tpu.strided_load %arg13[%c0_96, %c0_97] {strides = array<i32: 2, 1>} : memref<64x16xf32, #tpu.memory_space<vmem>>, vector<32x16xf32>
    %c1_98 = arith.constant 1 : index
    %c0_99 = arith.constant 0 : index
    %78 = tpu.strided_load %arg13[%c1_98, %c0_99] {strides = array<i32: 2, 1>} : memref<64x16xf32, #tpu.memory_space<vmem>>, vector<32x16xf32>
    %79 = arith.maximumf %77, %78 : vector<32x16xf32>
    %80 = vector.shape_cast %79 : vector<32x16xf32> to vector<2x16x16xf32>
    %81 = vector.extract_strided_slice %80 {offsets = [0, 0, 0], sizes = [2, 1, 16], strides = [1, 1, 1]} : vector<2x16x16xf32> to vector<2x1x16xf32>
    %82 = vector.shape_cast %81 : vector<2x1x16xf32> to vector<2x16xf32>
    %83 = vector.extract_strided_slice %80 {offsets = [0, 1, 0], sizes = [2, 1, 16], strides = [1, 1, 1]} : vector<2x16x16xf32> to vector<2x1x16xf32>
    %84 = vector.shape_cast %83 : vector<2x1x16xf32> to vector<2x16xf32>
    %85 = arith.addf %82, %84 : vector<2x16xf32>
    %86 = vector.extract_strided_slice %80 {offsets = [0, 4, 0], sizes = [2, 1, 16], strides = [1, 1, 1]} : vector<2x16x16xf32> to vector<2x1x16xf32>
    %87 = vector.shape_cast %86 : vector<2x1x16xf32> to vector<2x16xf32>
    %88 = arith.addf %85, %87 : vector<2x16xf32>
    %89 = vector.extract_strided_slice %80 {offsets = [0, 5, 0], sizes = [2, 1, 16], strides = [1, 1, 1]} : vector<2x16x16xf32> to vector<2x1x16xf32>
    %90 = vector.shape_cast %89 : vector<2x1x16xf32> to vector<2x16xf32>
    %91 = arith.addf %88, %90 : vector<2x16xf32>
    %cst_100 = arith.constant 2.500000e-01 : f32
    %92 = vector.broadcast %cst_100 : f32 to vector<2x16xf32>
    %93 = arith.mulf %91, %92 : vector<2x16xf32>
    %c0_101 = arith.constant 0 : index
    %c0_102 = arith.constant 0 : index
    %94 = vector.load %arg14[%c0_101, %c0_102] : memref<2x64xf32, #tpu.memory_space<vmem>>, vector<2x16xf32>
    tpu.vector_store %arg14[%c0_101, %c0_102], %93 {strides = array<i32>} : memref<2x64xf32, #tpu.memory_space<vmem>>, vector<2x16xf32>,
    %95 = vector.extract_strided_slice %80 {offsets = [0, 2, 0], sizes = [2, 1, 16], strides = [1, 1, 1]} : vector<2x16x16xf32> to vector<2x1x16xf32>
    %96 = vector.shape_cast %95 : vector<2x1x16xf32> to vector<2x16xf32>
    %97 = vector.extract_strided_slice %80 {offsets = [0, 3, 0], sizes = [2, 1, 16], strides = [1, 1, 1]} : vector<2x16x16xf32> to vector<2x1x16xf32>
    %98 = vector.shape_cast %97 : vector<2x1x16xf32> to vector<2x16xf32>
    %99 = arith.addf %96, %98 : vector<2x16xf32>
    %100 = vector.extract_strided_slice %80 {offsets = [0, 6, 0], sizes = [2, 1, 16], strides = [1, 1, 1]} : vector<2x16x16xf32> to vector<2x1x16xf32>
    %101 = vector.shape_cast %100 : vector<2x1x16xf32> to vector<2x16xf32>
    %102 = arith.addf %99, %101 : vector<2x16xf32>
    %103 = vector.extract_strided_slice %80 {offsets = [0, 7, 0], sizes = [2, 1, 16], strides = [1, 1, 1]} : vector<2x16x16xf32> to vector<2x1x16xf32>
    %104 = vector.shape_cast %103 : vector<2x1x16xf32> to vector<2x16xf32>
    %105 = arith.addf %102, %104 : vector<2x16xf32>
    %cst_103 = arith.constant 2.500000e-01 : f32
    %106 = vector.broadcast %cst_103 : f32 to vector<2x16xf32>
    %107 = arith.mulf %105, %106 : vector<2x16xf32>
    %c0_104 = arith.constant 0 : index
    %c16_105 = arith.constant 16 : index
    %108 = vector.load %arg14[%c0_104, %c16_105] : memref<2x64xf32, #tpu.memory_space<vmem>>, vector<2x16xf32>
    tpu.vector_store %arg14[%c0_104, %c16_105], %107 {strides = array<i32>} : memref<2x64xf32, #tpu.memory_space<vmem>>, vector<2x16xf32>,
    %109 = vector.extract_strided_slice %80 {offsets = [0, 8, 0], sizes = [2, 1, 16], strides = [1, 1, 1]} : vector<2x16x16xf32> to vector<2x1x16xf32>
    %110 = vector.shape_cast %109 : vector<2x1x16xf32> to vector<2x16xf32>
    %111 = vector.extract_strided_slice %80 {offsets = [0, 9, 0], sizes = [2, 1, 16], strides = [1, 1, 1]} : vector<2x16x16xf32> to vector<2x1x16xf32>
    %112 = vector.shape_cast %111 : vector<2x1x16xf32> to vector<2x16xf32>
    %113 = arith.addf %110, %112 : vector<2x16xf32>
    %114 = vector.extract_strided_slice %80 {offsets = [0, 12, 0], sizes = [2, 1, 16], strides = [1, 1, 1]} : vector<2x16x16xf32> to vector<2x1x16xf32>
    %115 = vector.shape_cast %114 : vector<2x1x16xf32> to vector<2x16xf32>
    %116 = arith.addf %113, %115 : vector<2x16xf32>
    %117 = vector.extract_strided_slice %80 {offsets = [0, 13, 0], sizes = [2, 1, 16], strides = [1, 1, 1]} : vector<2x16x16xf32> to vector<2x1x16xf32>
    %118 = vector.shape_cast %117 : vector<2x1x16xf32> to vector<2x16xf32>
    %119 = arith.addf %116, %118 : vector<2x16xf32>
    %cst_106 = arith.constant 2.500000e-01 : f32
    %120 = vector.broadcast %cst_106 : f32 to vector<2x16xf32>
    %121 = arith.mulf %119, %120 : vector<2x16xf32>
    %c0_107 = arith.constant 0 : index
    %c32_108 = arith.constant 32 : index
    %122 = vector.load %arg14[%c0_107, %c32_108] : memref<2x64xf32, #tpu.memory_space<vmem>>, vector<2x16xf32>
    tpu.vector_store %arg14[%c0_107, %c32_108], %121 {strides = array<i32>} : memref<2x64xf32, #tpu.memory_space<vmem>>, vector<2x16xf32>,
    %123 = vector.extract_strided_slice %80 {offsets = [0, 10, 0], sizes = [2, 1, 16], strides = [1, 1, 1]} : vector<2x16x16xf32> to vector<2x1x16xf32>
    %124 = vector.shape_cast %123 : vector<2x1x16xf32> to vector<2x16xf32>
    %125 = vector.extract_strided_slice %80 {offsets = [0, 11, 0], sizes = [2, 1, 16], strides = [1, 1, 1]} : vector<2x16x16xf32> to vector<2x1x16xf32>
    %126 = vector.shape_cast %125 : vector<2x1x16xf32> to vector<2x16xf32>
    %127 = arith.addf %124, %126 : vector<2x16xf32>
    %128 = vector.extract_strided_slice %80 {offsets = [0, 14, 0], sizes = [2, 1, 16], strides = [1, 1, 1]} : vector<2x16x16xf32> to vector<2x1x16xf32>
    %129 = vector.shape_cast %128 : vector<2x1x16xf32> to vector<2x16xf32>
    %130 = arith.addf %127, %129 : vector<2x16xf32>
    %131 = vector.extract_strided_slice %80 {offsets = [0, 15, 0], sizes = [2, 1, 16], strides = [1, 1, 1]} : vector<2x16x16xf32> to vector<2x1x16xf32>
    %132 = vector.shape_cast %131 : vector<2x1x16xf32> to vector<2x16xf32>
    %133 = arith.addf %130, %132 : vector<2x16xf32>
    %cst_109 = arith.constant 2.500000e-01 : f32
    %134 = vector.broadcast %cst_109 : f32 to vector<2x16xf32>
    %135 = arith.mulf %133, %134 : vector<2x16xf32>
    %c0_110 = arith.constant 0 : index
    %c48_111 = arith.constant 48 : index
    %136 = vector.load %arg14[%c0_110, %c48_111] : memref<2x64xf32, #tpu.memory_space<vmem>>, vector<2x16xf32>
    tpu.vector_store %arg14[%c0_110, %c48_111], %135 {strides = array<i32>} : memref<2x64xf32, #tpu.memory_space<vmem>>, vector<2x16xf32>,
    %c0_112 = arith.constant 0 : index
    %c0_113 = arith.constant 0 : index
    %137 = vector.load %arg14[%c0_112, %c0_113] : memref<2x64xf32, #tpu.memory_space<vmem>>, vector<2x64xf32>
    %c0_114 = arith.constant 0 : index
    %c0_115 = arith.constant 0 : index
    %138 = vector.load %arg5[%c0_114, %c0_115] : memref<64x32xf32, #tpu.memory_space<vmem>>, vector<64x32xf32>
    %cst_116 = arith.constant dense<0.000000e+00> : vector<2x32xf32>
    %139 = tpu.matmul %137, %138, %cst_116 {dimension_numbers = #tpu.dot_dimension_numbers<[1], [0], [0], [1], [0, 0, 1, 1], [], []>} : vector<2x64xf32>, vector<64x32xf32>, vector<2x32xf32> -> vector<2x32xf32>
    %c0_117 = arith.constant 0 : index
    %c0_118 = arith.constant 0 : index
    %140 = vector.load %arg6[%c0_117, %c0_118] : memref<1x32xf32, #tpu.memory_space<vmem>>, vector<1x32xf32>
    %141 = vector.broadcast %140 : vector<1x32xf32> to vector<2x32xf32>
    %142 = arith.addf %139, %141 : vector<2x32xf32>
    %cst_119 = arith.constant 0.000000e+00 : f32
    %143 = vector.broadcast %cst_119 : f32 to vector<2x32xf32>
    %144 = arith.maximumf %142, %143 : vector<2x32xf32>
    %c0_120 = arith.constant 0 : index
    %c0_121 = arith.constant 0 : index
    %145 = vector.load %arg7[%c0_120, %c0_121] : memref<32x32xf32, #tpu.memory_space<vmem>>, vector<32x32xf32>
    %cst_122 = arith.constant dense<0.000000e+00> : vector<2x32xf32>
    %146 = tpu.matmul %144, %145, %cst_122 {dimension_numbers = #tpu.dot_dimension_numbers<[1], [0], [0], [1], [0, 0, 1, 1], [], []>} : vector<2x32xf32>, vector<32x32xf32>, vector<2x32xf32> -> vector<2x32xf32>
    %c0_123 = arith.constant 0 : index
    %c0_124 = arith.constant 0 : index
    %147 = vector.load %arg8[%c0_123, %c0_124] : memref<1x32xf32, #tpu.memory_space<vmem>>, vector<1x32xf32>
    %148 = vector.broadcast %147 : vector<1x32xf32> to vector<2x32xf32>
    %149 = arith.addf %146, %148 : vector<2x32xf32>
    %c0_125 = arith.constant 0 : index
    %c0_126 = arith.constant 0 : index
    %150 = vector.load %arg9[%c0_125, %c0_126] : memref<2x32xf32, #tpu.memory_space<vmem>>, vector<2x32xf32>
    tpu.vector_store %arg9[%c0_125, %c0_126], %149 {strides = array<i32>} : memref<2x32xf32, #tpu.memory_space<vmem>>, vector<2x32xf32>,
    return
  }
}

</mosaic_0001>

<llo_original>
// kernel: feature_extractor.1
$region0: #{feature_extractor.1}
  #allocation0 [shape = 'u32[]', space=smem, size = 0x4, offset = 0x4, fixed_abs, tag = 'smem constant byte address 0x4 - core index']
  #allocation1 [shape = 'u32[144,128]{1,0:T(1,128)}', space=vmem, size = 0x12000, scoped, tag = 'internal scratch']
  #allocation2 [shape = 'f32[2,16,16,27]{3,2,1,0:T(8,128)}', space=vmem, size = 0x40000, scoped, tag = 'scratch operand']
  #allocation3 [shape = 'f32[256,8]{1,0:T(8,128)}', space=vmem, size = 0x20000, scoped, tag = 'scratch operand']
  #allocation4 [shape = 'f32[2,8,8,72]{3,2,1,0:T(8,128)}', space=vmem, size = 0x10000, scoped, tag = 'scratch operand']
  #allocation5 [shape = 'f32[64,16]{1,0:T(8,128)}', space=vmem, size = 0x8000, scoped, tag = 'scratch operand']
  #allocation6 [shape = 'f32[2,64]{1,0:T(2,128)}', space=vmem, size = 0x400, scoped, tag = 'scratch operand']
  %s0 = inlined_call_operand.vmem [shape: f32[2,16,16,3], index: 0, kind: input, shape index: {}]
  %s1 = inlined_call_operand.vmem [shape: f32[27,8], index: 1, kind: input, shape index: {}]
  %s2 = inlined_call_operand.vmem [shape: f32[1,8], index: 2, kind: input, shape index: {}]
  %s3 = inlined_call_operand.vmem [shape: f32[72,16], index: 3, kind: input, shape index: {}]
  %s4 = inlined_call_operand.vmem [shape: f32[1,16], index: 4, kind: input, shape index: {}]
  %s5 = inlined_call_operand.vmem [shape: f32[64,32], index: 5, kind: input, shape index: {}]
  %s6 = inlined_call_operand.vmem [shape: f32[1,32], index: 6, kind: input, shape index: {}]
  %s7 = inlined_call_operand.vmem [shape: f32[32,32], index: 7, kind: input, shape index: {}]
  %s8 = inlined_call_operand.vmem [shape: f32[1,32], index: 8, kind: input, shape index: {}]
  %s9 = inlined_call_operand.hbm [shape: f32[2,32], index: 9, kind: output, shape index: {}]
  %s10 = sld [smem:[#allocation0]]
  $region46: #{feature_extractor.1} parent=0
    _
  %s12 = ssub.s32 1, %s10
  %s13 = scalar_select 0, %s12, %s10
  $region1: #{feature_extractor.1} parent=0
    #allocation7 [shape = 'u8[1024]{0}', space=vmem, size = 0x400, scoped, tag = 'output window, operand 0, single buffered']
    #allocation8 [shape = 's32[1]{0}', space=sflag, size = 0x4, scoped, tag = 'scoped memory for feature_extractor.1']
    %14 = vsyncpa [#allocation8], 0
    // Predicated region
    $region2: #{feature_extractor.1} parent=1 // pred_check
      _
    $region3: #{feature_extractor.1} parent=1 // pred_check_branch
      %16 = sbr.rel (0) target = $region5
    $region4: #{feature_extractor.1} parent=1 // pred_region
      _
    $region5: #{feature_extractor.1} parent=1 // pred_fallthru
      _
    // Predicated region
    $region6: #{feature_extractor.1} parent=1 // pred_check
      _
    $region7: #{feature_extractor.1} parent=1 // pred_check_branch
      %18 = sbr.rel (0) target = $region9
    $region8: #{feature_extractor.1} parent=1 // pred_region
      _
    $region9: #{feature_extractor.1} parent=1 // pred_fallthru
      _
    // Predicated region
    $region10: #{feature_extractor.1} parent=1 // pred_check
      _
    $region11: #{feature_extractor.1} parent=1 // pred_check_branch
      %20 = sbr.rel (0) target = $region13
    $region12: #{feature_extractor.1} parent=1 // pred_region
      _
    $region13: #{feature_extractor.1} parent=1 // pred_fallthru
      _
    // Predicated region
    $region14: #{feature_extractor.1} parent=1 // pred_check
      _
    $region15: #{feature_extractor.1} parent=1 // pred_check_branch
      %22 = sbr.rel (0) target = $region17
    $region16: #{feature_extractor.1} parent=1 // pred_region
      _
    $region17: #{feature_extractor.1} parent=1 // pred_fallthru
      _
    // Predicated region
    $region18: #{feature_extractor.1} parent=1 // pred_check
      _
    $region19: #{feature_extractor.1} parent=1 // pred_check_branch
      %24 = sbr.rel (0) target = $region21
    $region20: #{feature_extractor.1} parent=1 // pred_region
      _
    $region21: #{feature_extractor.1} parent=1 // pred_fallthru
      _
    // Predicated region
    $region22: #{feature_extractor.1} parent=1 // pred_check
      _
    $region23: #{feature_extractor.1} parent=1 // pred_check_branch
      %26 = sbr.rel (0) target = $region25
    $region24: #{feature_extractor.1} parent=1 // pred_region
      _
    $region25: #{feature_extractor.1} parent=1 // pred_fallthru
      _
    // Predicated region
    $region26: #{feature_extractor.1} parent=1 // pred_check
      _
    $region27: #{feature_extractor.1} parent=1 // pred_check_branch
      %28 = sbr.rel (0) target = $region29
    $region28: #{feature_extractor.1} parent=1 // pred_region
      _
    $region29: #{feature_extractor.1} parent=1 // pred_fallthru
      _
    // Predicated region
    $region30: #{feature_extractor.1} parent=1 // pred_check
      _
    $region31: #{feature_extractor.1} parent=1 // pred_check_branch
      %30 = sbr.rel (0) target = $region33
    $region32: #{feature_extractor.1} parent=1 // pred_region
      _
    $region33: #{feature_extractor.1} parent=1 // pred_fallthru
      _
    // Predicated region
    $region34: #{feature_extractor.1} parent=1 // pred_check
      _
    $region35: #{feature_extractor.1} parent=1 // pred_check_branch
      %32 = sbr.rel (0) target = $region37
    $region36: #{feature_extractor.1} parent=1 // pred_region
      _
    $region37: #{feature_extractor.1} parent=1 // pred_fallthru
      _
    %v33 = vld [vmem:[%s0] sm:$0xff]
    %v34 = vld [vmem:[%s0 + $0x8] sm:$0xff]
    %v35 = vld [vmem:[%s0 + $0x10] sm:$0xff]
    %v36 = vld [vmem:[%s0 + $0x18] sm:$0xff]
    %v37 = vld [vmem:[%s0 + $0x20] sm:$0xff]
    %v38 = vld [vmem:[%s0 + $0x28] sm:$0xff]
    %v39 = vld [vmem:[%s0 + $0x30] sm:$0xff]
    %v40 = vld [vmem:[%s0 + $0x38] sm:$0xff]
    %v41 = vld [vmem:[%s0 + $0x40] sm:$0xff]
    %v42 = vld [vmem:[%s0 + $0x48] sm:$0xff]
    %v43 = vld [vmem:[%s0 + $0x50] sm:$0xff]
    %v44 = vld [vmem:[%s0 + $0x58] sm:$0xff]
    %v45 = vld [vmem:[%s0 + $0x60] sm:$0xff]
    %v46 = vld [vmem:[%s0 + $0x68] sm:$0xff]
    %v47 = vld [vmem:[%s0 + $0x70] sm:$0xff]
    %v48 = vld [vmem:[%s0 + $0x78] sm:$0xff]
    %v49 = vld [vmem:[%s0 + $0x80] sm:$0xff]
    %v50 = vld [vmem:[%s0 + $0x88] sm:$0xff]
    %v51 = vld [vmem:[%s0 + $0x90] sm:$0xff]
    %v52 = vld [vmem:[%s0 + $0x98] sm:$0xff]
    %v53 = vld [vmem:[%s0 + $0xa0] sm:$0xff]
    %v54 = vld [vmem:[%s0 + $0xa8] sm:$0xff]
    %v55 = vld [vmem:[%s0 + $0xb0] sm:$0xff]
    %v56 = vld [vmem:[%s0 + $0xb8] sm:$0xff]
    %v57 = vld [vmem:[%s0 + $0xc0] sm:$0xff]
    %v58 = vld [vmem:[%s0 + $0xc8] sm:$0xff]
    %v59 = vld [vmem:[%s0 + $0xd0] sm:$0xff]
    %v60 = vld [vmem:[%s0 + $0xd8] sm:$0xff]
    %v61 = vld [vmem:[%s0 + $0xe0] sm:$0xff]
    %v62 = vld [vmem:[%s0 + $0xe8] sm:$0xff]
    %v63 = vld [vmem:[%s0 + $0xf0] sm:$0xff]
    %v64 = vld [vmem:[%s0 + $0xf8] sm:$0xff]
    %v65 = vld [vmem:[%s0 + $0x100] sm:$0xff]
    %v66 = vld [vmem:[%s0 + $0x108] sm:$0xff]
    %v67 = vld [vmem:[%s0 + $0x110] sm:$0xff]
    %v68 = vld [vmem:[%s0 + $0x118] sm:$0xff]
    %v69 = vld [vmem:[%s0 + $0x120] sm:$0xff]
    %v70 = vld [vmem:[%s0 + $0x128] sm:$0xff]
    %v71 = vld [vmem:[%s0 + $0x130] sm:$0xff]
    %v72 = vld [vmem:[%s0 + $0x138] sm:$0xff]
    %v73 = vld [vmem:[%s0 + $0x140] sm:$0xff]
    %v74 = vld [vmem:[%s0 + $0x148] sm:$0xff]
    %v75 = vld [vmem:[%s0 + $0x150] sm:$0xff]
    %v76 = vld [vmem:[%s0 + $0x158] sm:$0xff]
    %v77 = vld [vmem:[%s0 + $0x160] sm:$0xff]
    %v78 = vld [vmem:[%s0 + $0x168] sm:$0xff]
    %v79 = vld [vmem:[%s0 + $0x170] sm:$0xff]
    %v80 = vld [vmem:[%s0 + $0x178] sm:$0xff]
    %v81 = vld [vmem:[%s0 + $0x180] sm:$0xff]
    %v82 = vld [vmem:[%s0 + $0x188] sm:$0xff]
    %v83 = vld [vmem:[%s0 + $0x190] sm:$0xff]
    %v84 = vld [vmem:[%s0 + $0x198] sm:$0xff]
    %v85 = vld [vmem:[%s0 + $0x1a0] sm:$0xff]
    %v86 = vld [vmem:[%s0 + $0x1a8] sm:$0xff]
    %v87 = vld [vmem:[%s0 + $0x1b0] sm:$0xff]
    %v88 = vld [vmem:[%s0 + $0x1b8] sm:$0xff]
    %v89 = vld [vmem:[%s0 + $0x1c0] sm:$0xff]
    %v90 = vld [vmem:[%s0 + $0x1c8] sm:$0xff]
    %v91 = vld [vmem:[%s0 + $0x1d0] sm:$0xff]
    %v92 = vld [vmem:[%s0 + $0x1d8] sm:$0xff]
    %v93 = vld [vmem:[%s0 + $0x1e0] sm:$0xff]
    %v94 = vld [vmem:[%s0 + $0x1e8] sm:$0xff]
    %v95 = vld [vmem:[%s0 + $0x1f0] sm:$0xff]
    %v96 = vld [vmem:[%s0 + $0x1f8] sm:$0xff]
    %vm97 = vcmask 220160
    %98 = vst.msk [vmem:[#allocation2] sm:$0xff] %vm97, 0.0
    %99 = vst.msk [vmem:[#allocation2 + $0x8] sm:$0xff] %vm97, 0.0
    %100 = vst.msk [vmem:[#allocation2 + $0x10] sm:$0xff] %vm97, 0.0
    %101 = vst.msk [vmem:[#allocation2 + $0x18] sm:$0xff] %vm97, 0.0
    %102 = vst.msk [vmem:[#allocation2 + $0x20] sm:$0xff] %vm97, 0.0
    %103 = vst.msk [vmem:[#allocation2 + $0x28] sm:$0xff] %vm97, 0.0
    %104 = vst.msk [vmem:[#allocation2 + $0x30] sm:$0xff] %vm97, 0.0
    %105 = vst.msk [vmem:[#allocation2 + $0x38] sm:$0xff] %vm97, 0.0
    %106 = vst.msk [vmem:[#allocation2 + $0x40] sm:$0xff] %vm97, 0.0
    %107 = vst.msk [vmem:[#allocation2 + $0x48] sm:$0xff] %vm97, 0.0
    %108 = vst.msk [vmem:[#allocation2 + $0x50] sm:$0xff] %vm97, 0.0
    %109 = vst.msk [vmem:[#allocation2 + $0x58] sm:$0xff] %vm97, 0.0
    %110 = vst.msk [vmem:[#allocation2 + $0x60] sm:$0xff] %vm97, 0.0
    %111 = vst.msk [vmem:[#allocation2 + $0x68] sm:$0xff] %vm97, 0.0
    %112 = vst.msk [vmem:[#allocation2 + $0x70] sm:$0xff] %vm97, 0.0
    %113 = vst.msk [vmem:[#allocation2 + $0x78] sm:$0xff] %vm97, 0.0
    %114 = vst.msk [vmem:[#allocation2 + $0x80] sm:$0xff] %vm97, 0.0
    %115 = vst.msk [vmem:[#allocation2 + $0x88] sm:$0xff] %vm97, 0.0
    %116 = vst.msk [vmem:[#allocation2 + $0x90] sm:$0xff] %vm97, 0.0
    %117 = vst.msk [vmem:[#allocation2 + $0x98] sm:$0xff] %vm97, 0.0
    %118 = vst.msk [vmem:[#allocation2 + $0xa0] sm:$0xff] %vm97, 0.0
    %119 = vst.msk [vmem:[#allocation2 + $0xa8] sm:$0xff] %vm97, 0.0
    %120 = vst.msk [vmem:[#allocation2 + $0xb0] sm:$0xff] %vm97, 0.0
    %121 = vst.msk [vmem:[#allocation2 + $0xb8] sm:$0xff] %vm97, 0.0
    %122 = vst.msk [vmem:[#allocation2 + $0xc0] sm:$0xff] %vm97, 0.0
    %123 = vst.msk [vmem:[#allocation2 + $0xc8] sm:$0xff] %vm97, 0.0
    %124 = vst.msk [vmem:[#allocation2 + $0xd0] sm:$0xff] %vm97, 0.0
    %125 = vst.msk [vmem:[#allocation2 + $0xd8] sm:$0xff] %vm97, 0.0
    %126 = vst.msk [vmem:[#allocation2 + $0xe0] sm:$0xff] %vm97, 0.0
    %127 = vst.msk [vmem:[#allocation2 + $0xe8] sm:$0xff] %vm97, 0.0
    %128 = vst.msk [vmem:[#allocation2 + $0xf0] sm:$0xff] %vm97, 0.0
    %129 = vst.msk [vmem:[#allocation2 + $0xf8] sm:$0xff] %vm97, 0.0
    %130 = vst.msk [vmem:[#allocation2 + $0x100] sm:$0xff] %vm97, 0.0
    %131 = vst.msk [vmem:[#allocation2 + $0x108] sm:$0xff] %vm97, 0.0
    %132 = vst.msk [vmem:[#allocation2 + $0x110] sm:$0xff] %vm97, 0.0
    %133 = vst.msk [vmem:[#allocation2 + $0x118] sm:$0xff] %vm97, 0.0
    %134 = vst.msk [vmem:[#allocation2 + $0x120] sm:$0xff] %vm97, 0.0
    %135 = vst.msk [vmem:[#allocation2 + $0x128] sm:$0xff] %vm97, 0.0
    %136 = vst.msk [vmem:[#allocation2 + $0x130] sm:$0xff] %vm97, 0.0
    %137 = vst.msk [vmem:[#allocation2 + $0x138] sm:$0xff] %vm97, 0.0
    %138 = vst.msk [vmem:[#allocation2 + $0x140] sm:$0xff] %vm97, 0.0
    %139 = vst.msk [vmem:[#allocation2 + $0x148] sm:$0xff] %vm97, 0.0
    %140 = vst.msk [vmem:[#allocation2 + $0x150] sm:$0xff] %vm97, 0.0
    %141 = vst.msk [vmem:[#allocation2 + $0x158] sm:$0xff] %vm97, 0.0
    %142 = vst.msk [vmem:[#allocation2 + $0x160] sm:$0xff] %vm97, 0.0
    %143 = vst.msk [vmem:[#allocation2 + $0x168] sm:$0xff] %vm97, 0.0
    %144 = vst.msk [vmem:[#allocation2 + $0x170] sm:$0xff] %vm97, 0.0
    %145 = vst.msk [vmem:[#allocation2 + $0x178] sm:$0xff] %vm97, 0.0
    %146 = vst.msk [vmem:[#allocation2 + $0x180] sm:$0xff] %vm97, 0.0
    %147 = vst.msk [vmem:[#allocation2 + $0x188] sm:$0xff] %vm97, 0.0
    %148 = vst.msk [vmem:[#allocation2 + $0x190] sm:$0xff] %vm97, 0.0
    %149 = vst.msk [vmem:[#allocation2 + $0x198] sm:$0xff] %vm97, 0.0
    %150 = vst.msk [vmem:[#allocation2 + $0x1a0] sm:$0xff] %vm97, 0.0
    %151 = vst.msk [vmem:[#allocation2 + $0x1a8] sm:$0xff] %vm97, 0.0
    %152 = vst.msk [vmem:[#allocation2 + $0x1b0] sm:$0xff] %vm97, 0.0
    %153 = vst.msk [vmem:[#allocation2 + $0x1b8] sm:$0xff] %vm97, 0.0
    %154 = vst.msk [vmem:[#allocation2 + $0x1c0] sm:$0xff] %vm97, 0.0
    %155 = vst.msk [vmem:[#allocation2 + $0x1c8] sm:$0xff] %vm97, 0.0
    %156 = vst.msk [vmem:[#allocation2 + $0x1d0] sm:$0xff] %vm97, 0.0
    %157 = vst.msk [vmem:[#allocation2 + $0x1d8] sm:$0xff] %vm97, 0.0
    %158 = vst.msk [vmem:[#allocation2 + $0x1e0] sm:$0xff] %vm97, 0.0
    %159 = vst.msk [vmem:[#allocation2 + $0x1e8] sm:$0xff] %vm97, 0.0
    %160 = vst.msk [vmem:[#allocation2 + $0x1f0] sm:$0xff] %vm97, 0.0
    %161 = vst.msk [vmem:[#allocation2 + $0x1f8] sm:$0xff] %vm97, 0.0
    %s162 = scalar_lea.vmem [#allocation2], 16
    %vm163 = vcmask 23552
    %164 = vst.msk [vmem:[%s162 + $0x1] sm:$0xff] %vm163, %v33
    %vm165 = vcmask 22528
    %166 = vst.msk [vmem:[%s162 + $0x9] sm:$0x7f] %vm165, %v34
    %167 = vst.msk [vmem:[%s162 + $0x11] sm:$0xff] %vm163, %v35
    %168 = vst.msk [vmem:[%s162 + $0x19] sm:$0x7f] %vm165, %v36
    %169 = vst.msk [vmem:[%s162 + $0x21] sm:$0xff] %vm163, %v37
    %170 = vst.msk [vmem:[%s162 + $0x29] sm:$0x7f] %vm165, %v38
    %171 = vst.msk [vmem:[%s162 + $0x31] sm:$0xff] %vm163, %v39
    %172 = vst.msk [vmem:[%s162 + $0x39] sm:$0x7f] %vm165, %v40
    %173 = vst.msk [vmem:[%s162 + $0x41] sm:$0xff] %vm163, %v41
    %174 = vst.msk [vmem:[%s162 + $0x49] sm:$0x7f] %vm165, %v42
    %175 = vst.msk [vmem:[%s162 + $0x51] sm:$0xff] %vm163, %v43
    %176 = vst.msk [vmem:[%s162 + $0x59] sm:$0x7f] %vm165, %v44
    %177 = vst.msk [vmem:[%s162 + $0x61] sm:$0xff] %vm163, %v45
    %178 = vst.msk [vmem:[%s162 + $0x69] sm:$0x7f] %vm165, %v46
    %179 = vst.msk [vmem:[%s162 + $0x71] sm:$0xff] %vm163, %v47
    %180 = vst.msk [vmem:[%s162 + $0x79] sm:$0x7f] %vm165, %v48
    %181 = vst.msk [vmem:[%s162 + $0x81] sm:$0xff] %vm163, %v49
    %182 = vst.msk [vmem:[%s162 + $0x89] sm:$0x7f] %vm165, %v50
    %183 = vst.msk [vmem:[%s162 + $0x91] sm:$0xff] %vm163, %v51
    %184 = vst.msk [vmem:[%s162 + $0x99] sm:$0x7f] %vm165, %v52
    %185 = vst.msk [vmem:[%s162 + $0xa1] sm:$0xff] %vm163, %v53
    %186 = vst.msk [vmem:[%s162 + $0xa9] sm:$0x7f] %vm165, %v54
    %187 = vst.msk [vmem:[%s162 + $0xb1] sm:$0xff] %vm163, %v55
    %188 = vst.msk [vmem:[%s162 + $0xb9] sm:$0x7f] %vm165, %v56
    %189 = vst.msk [vmem:[%s162 + $0xc1] sm:$0xff] %vm163, %v57
    %190 = vst.msk [vmem:[%s162 + $0xc9] sm:$0x7f] %vm165, %v58
    %191 = vst.msk [vmem:[%s162 + $0xd1] sm:$0xff] %vm163, %v59
    %192 = vst.msk [vmem:[%s162 + $0xd9] sm:$0x7f] %vm165, %v60
    %193 = vst.msk [vmem:[%s162 + $0xe1] sm:$0xff] %vm163, %v61
    %194 = vst.msk [vmem:[%s162 + $0xe9] sm:$0x7f] %vm165, %v62
    %195 = vst.msk [vmem:[%s162 + $0x101] sm:$0xff] %vm163, %v65
    %196 = vst.msk [vmem:[%s162 + $0x109] sm:$0x7f] %vm165, %v66
    %197 = vst.msk [vmem:[%s162 + $0x111] sm:$0xff] %vm163, %v67
    %198 = vst.msk [vmem:[%s162 + $0x119] sm:$0x7f] %vm165, %v68
    %199 = vst.msk [vmem:[%s162 + $0x121] sm:$0xff] %vm163, %v69
    %200 = vst.msk [vmem:[%s162 + $0x129] sm:$0x7f] %vm165, %v70
    %201 = vst.msk [vmem:[%s162 + $0x131] sm:$0xff] %vm163, %v71
    %202 = vst.msk [vmem:[%s162 + $0x139] sm:$0x7f] %vm165, %v72
    %203 = vst.msk [vmem:[%s162 + $0x141] sm:$0xff] %vm163, %v73
    %204 = vst.msk [vmem:[%s162 + $0x149] sm:$0x7f] %vm165, %v74
    %205 = vst.msk [vmem:[%s162 + $0x151] sm:$0xff] %vm163, %v75
    %206 = vst.msk [vmem:[%s162 + $0x159] sm:$0x7f] %vm165, %v76
    %207 = vst.msk [vmem:[%s162 + $0x161] sm:$0xff] %vm163, %v77
    %208 = vst.msk [vmem:[%s162 + $0x169] sm:$0x7f] %vm165, %v78
    %209 = vst.msk [vmem:[%s162 + $0x171] sm:$0xff] %vm163, %v79
    %210 = vst.msk [vmem:[%s162 + $0x179] sm:$0x7f] %vm165, %v80
    %211 = vst.msk [vmem:[%s162 + $0x181] sm:$0xff] %vm163, %v81
    %212 = vst.msk [vmem:[%s162 + $0x189] sm:$0x7f] %vm165, %v82
    %213 = vst.msk [vmem:[%s162 + $0x191] sm:$0xff] %vm163, %v83
    %214 = vst.msk [vmem:[%s162 + $0x199] sm:$0x7f] %vm165, %v84
    %215 = vst.msk [vmem:[%s162 + $0x1a1] sm:$0xff] %vm163, %v85
    %216 = vst.msk [vmem:[%s162 + $0x1a9] sm:$0x7f] %vm165, %v86
    %217 = vst.msk [vmem:[%s162 + $0x1b1] sm:$0xff] %vm163, %v87
    %218 = vst.msk [vmem:[%s162 + $0x1b9] sm:$0x7f] %vm165, %v88
    %219 = vst.msk [vmem:[%s162 + $0x1c1] sm:$0xff] %vm163, %v89
    %220 = vst.msk [vmem:[%s162 + $0x1c9] sm:$0x7f] %vm165, %v90
    %221 = vst.msk [vmem:[%s162 + $0x1d1] sm:$0xff] %vm163, %v91
    %222 = vst.msk [vmem:[%s162 + $0x1d9] sm:$0x7f] %vm165, %v92
    %223 = vst.msk [vmem:[%s162 + $0x1e1] sm:$0xff] %vm163, %v93
    %224 = vst.msk [vmem:[%s162 + $0x1e9] sm:$0x7f] %vm165, %v94
    %285 = vrot.lane.b32.xlu0 %v33, 3
    %v286 = vpop.permute.xlu0 %285
    %287 = vrot.lane.b32.xlu0 %v34, 3
    %v288 = vpop.permute.xlu0 %287
    %289 = vrot.lane.b32.xlu0 %v35, 3
    %v290 = vpop.permute.xlu0 %289
    %291 = vrot.lane.b32.xlu0 %v36, 3
    %v292 = vpop.permute.xlu0 %291
    %293 = vrot.lane.b32.xlu0 %v37, 3
    %v294 = vpop.permute.xlu0 %293
    %295 = vrot.lane.b32.xlu0 %v38, 3
    %v296 = vpop.permute.xlu0 %295
    %297 = vrot.lane.b32.xlu0 %v39, 3
    %v298 = vpop.permute.xlu0 %297
    %299 = vrot.lane.b32.xlu0 %v40, 3
    %v300 = vpop.permute.xlu0 %299
    %301 = vrot.lane.b32.xlu0 %v41, 3
    %v302 = vpop.permute.xlu0 %301
    %303 = vrot.lane.b32.xlu0 %v42, 3
    %v304 = vpop.permute.xlu0 %303
    %305 = vrot.lane.b32.xlu0 %v43, 3
    %v306 = vpop.permute.xlu0 %305
    %307 = vrot.lane.b32.xlu0 %v44, 3
    %v308 = vpop.permute.xlu0 %307
    %309 = vrot.lane.b32.xlu0 %v45, 3
    %v310 = vpop.permute.xlu0 %309
    %311 = vrot.lane.b32.xlu0 %v46, 3
    %v312 = vpop.permute.xlu0 %311
    %313 = vrot.lane.b32.xlu0 %v47, 3
    %v314 = vpop.permute.xlu0 %313
    %315 = vrot.lane.b32.xlu0 %v48, 3
    %v316 = vpop.permute.xlu0 %315
    %317 = vrot.lane.b32.xlu0 %v49, 3
    %v318 = vpop.permute.xlu0 %317
    %319 = vrot.lane.b32.xlu0 %v50, 3
    %v320 = vpop.permute.xlu0 %319
    %321 = vrot.lane.b32.xlu0 %v51, 3
    %v322 = vpop.permute.xlu0 %321
    %323 = vrot.lane.b32.xlu0 %v52, 3
    %v324 = vpop.permute.xlu0 %323
    %325 = vrot.lane.b32.xlu0 %v53, 3
    %v326 = vpop.permute.xlu0 %325
    %327 = vrot.lane.b32.xlu0 %v54, 3
    %v328 = vpop.permute.xlu0 %327
    %329 = vrot.lane.b32.xlu0 %v55, 3
    %v330 = vpop.permute.xlu0 %329
    %331 = vrot.lane.b32.xlu0 %v56, 3
    %v332 = vpop.permute.xlu0 %331
    %333 = vrot.lane.b32.xlu0 %v57, 3
    %v334 = vpop.permute.xlu0 %333
    %335 = vrot.lane.b32.xlu0 %v58, 3
    %v336 = vpop.permute.xlu0 %335
    %337 = vrot.lane.b32.xlu0 %v59, 3
    %v338 = vpop.permute.xlu0 %337
    %339 = vrot.lane.b32.xlu0 %v60, 3
    %v340 = vpop.permute.xlu0 %339
    %341 = vrot.lane.b32.xlu0 %v61, 3
    %v342 = vpop.permute.xlu0 %341
    %343 = vrot.lane.b32.xlu0 %v62, 3
    %v344 = vpop.permute.xlu0 %343
    %345 = vrot.lane.b32.xlu0 %v65, 3
    %v346 = vpop.permute.xlu0 %345
    %347 = vrot.lane.b32.xlu0 %v66, 3
    %v348 = vpop.permute.xlu0 %347
    %349 = vrot.lane.b32.xlu0 %v67, 3
    %v350 = vpop.permute.xlu0 %349
    %351 = vrot.lane.b32.xlu0 %v68, 3
    %v352 = vpop.permute.xlu0 %351
    %353 = vrot.lane.b32.xlu0 %v69, 3
    %v354 = vpop.permute.xlu0 %353
    %355 = vrot.lane.b32.xlu0 %v70, 3
    %v356 = vpop.permute.xlu0 %355
    %357 = vrot.lane.b32.xlu0 %v71, 3
    %v358 = vpop.permute.xlu0 %357
    %359 = vrot.lane.b32.xlu0 %v72, 3
    %v360 = vpop.permute.xlu0 %359
    %361 = vrot.lane.b32.xlu0 %v73, 3
    %v362 = vpop.permute.xlu0 %361
    %363 = vrot.lane.b32.xlu0 %v74, 3
    %v364 = vpop.permute.xlu0 %363
    %365 = vrot.lane.b32.xlu0 %v75, 3
    %v366 = vpop.permute.xlu0 %365
    %367 = vrot.lane.b32.xlu0 %v76, 3
    %v368 = vpop.permute.xlu0 %367
    %369 = vrot.lane.b32.xlu0 %v77, 3
    %v370 = vpop.permute.xlu0 %369
    %371 = vrot.lane.b32.xlu0 %v78, 3
    %v372 = vpop.permute.xlu0 %371
    %373 = vrot.lane.b32.xlu0 %v79, 3
    %v374 = vpop.permute.xlu0 %373
    %375 = vrot.lane.b32.xlu0 %v80, 3
    %v376 = vpop.permute.xlu0 %375
    %377 = vrot.lane.b32.xlu0 %v81, 3
    %v378 = vpop.permute.xlu0 %377
    %379 = vrot.lane.b32.xlu0 %v82, 3
    %v380 = vpop.permute.xlu0 %379
    %381 = vrot.lane.b32.xlu0 %v83, 3
    %v382 = vpop.permute.xlu0 %381
    %383 = vrot.lane.b32.xlu0 %v84, 3
    %v384 = vpop.permute.xlu0 %383
    %385 = vrot.lane.b32.xlu0 %v85, 3
    %v386 = vpop.permute.xlu0 %385
    %387 = vrot.lane.b32.xlu0 %v86, 3
    %v388 = vpop.permute.xlu0 %387
    %389 = vrot.lane.b32.xlu0 %v87, 3
    %v390 = vpop.permute.xlu0 %389
    %391 = vrot.lane.b32.xlu0 %v88, 3
    %v392 = vpop.permute.xlu0 %391
    %393 = vrot.lane.b32.xlu0 %v89, 3
    %v394 = vpop.permute.xlu0 %393
    %395 = vrot.lane.b32.xlu0 %v90, 3
    %v396 = vpop.permute.xlu0 %395
    %397 = vrot.lane.b32.xlu0 %v91, 3
    %v398 = vpop.permute.xlu0 %397
    %399 = vrot.lane.b32.xlu0 %v92, 3
    %v400 = vpop.permute.xlu0 %399
    %401 = vrot.lane.b32.xlu0 %v93, 3
    %v402 = vpop.permute.xlu0 %401
    %403 = vrot.lane.b32.xlu0 %v94, 3
    %v404 = vpop.permute.xlu0 %403
    %vm465 = vcmask 48152
    %466 = vst.msk [vmem:[%s162] sm:$0xff] %vm465, %v286
    %467 = vst.msk [vmem:[%s162 + $0x8] sm:$0xff] %vm465, %v288
    %468 = vst.msk [vmem:[%s162 + $0x10] sm:$0xff] %vm465, %v290
    %469 = vst.msk [vmem:[%s162 + $0x18] sm:$0xff] %vm465, %v292
    %470 = vst.msk [vmem:[%s162 + $0x20] sm:$0xff] %vm465, %v294
    %471 = vst.msk [vmem:[%s162 + $0x28] sm:$0xff] %vm465, %v296
    %472 = vst.msk [vmem:[%s162 + $0x30] sm:$0xff] %vm465, %v298
    %473 = vst.msk [vmem:[%s162 + $0x38] sm:$0xff] %vm465, %v300
    %474 = vst.msk [vmem:[%s162 + $0x40] sm:$0xff] %vm465, %v302
    %475 = vst.msk [vmem:[%s162 + $0x48] sm:$0xff] %vm465, %v304
    %476 = vst.msk [vmem:[%s162 + $0x50] sm:$0xff] %vm465, %v306
    %477 = vst.msk [vmem:[%s162 + $0x58] sm:$0xff] %vm465, %v308
    %478 = vst.msk [vmem:[%s162 + $0x60] sm:$0xff] %vm465, %v310
    %479 = vst.msk [vmem:[%s162 + $0x68] sm:$0xff] %vm465, %v312
    %480 = vst.msk [vmem:[%s162 + $0x70] sm:$0xff] %vm465, %v314
    %481 = vst.msk [vmem:[%s162 + $0x78] sm:$0xff] %vm465, %v316
    %482 = vst.msk [vmem:[%s162 + $0x80] sm:$0xff] %vm465, %v318
    %483 = vst.msk [vmem:[%s162 + $0x88] sm:$0xff] %vm465, %v320
    %484 = vst.msk [vmem:[%s162 + $0x90] sm:$0xff] %vm465, %v322
    %485 = vst.msk [vmem:[%s162 + $0x98] sm:$0xff] %vm465, %v324
    %486 = vst.msk [vmem:[%s162 + $0xa0] sm:$0xff] %vm465, %v326
    %487 = vst.msk [vmem:[%s162 + $0xa8] sm:$0xff] %vm465, %v328
    %488 = vst.msk [vmem:[%s162 + $0xb0] sm:$0xff] %vm465, %v330
    %489 = vst.msk [vmem:[%s162 + $0xb8] sm:$0xff] %vm465, %v332
    %490 = vst.msk [vmem:[%s162 + $0xc0] sm:$0xff] %vm465, %v334
    %491 = vst.msk [vmem:[%s162 + $0xc8] sm:$0xff] %vm465, %v336
    %492 = vst.msk [vmem:[%s162 + $0xd0] sm:$0xff] %vm465, %v338
    %493 = vst.msk [vmem:[%s162 + $0xd8] sm:$0xff] %vm465, %v340
    %494 = vst.msk [vmem:[%s162 + $0xe0] sm:$0xff] %vm465, %v342
    %495 = vst.msk [vmem:[%s162 + $0xe8] sm:$0xff] %vm465, %v344
    %496 = vst.msk [vmem:[%s162 + $0x100] sm:$0xff] %vm465, %v346
    %497 = vst.msk [vmem:[%s162 + $0x108] sm:$0xff] %vm465, %v348
    %498 = vst.msk [vmem:[%s162 + $0x110] sm:$0xff] %vm465, %v350
    %499 = vst.msk [vmem:[%s162 + $0x118] sm:$0xff] %vm465, %v352
    %500 = vst.msk [vmem:[%s162 + $0x120] sm:$0xff] %vm465, %v354
    %501 = vst.msk [vmem:[%s162 + $0x128] sm:$0xff] %vm465, %v356
    %502 = vst.msk [vmem:[%s162 + $0x130] sm:$0xff] %vm465, %v358
    %503 = vst.msk [vmem:[%s162 + $0x138] sm:$0xff] %vm465, %v360
    %504 = vst.msk [vmem:[%s162 + $0x140] sm:$0xff] %vm465, %v362
    %505 = vst.msk [vmem:[%s162 + $0x148] sm:$0xff] %vm465, %v364
    %506 = vst.msk [vmem:[%s162 + $0x150] sm:$0xff] %vm465, %v366
    %507 = vst.msk [vmem:[%s162 + $0x158] sm:$0xff] %vm465, %v368
    %508 = vst.msk [vmem:[%s162 + $0x160] sm:$0xff] %vm465, %v370
    %509 = vst.msk [vmem:[%s162 + $0x168] sm:$0xff] %vm465, %v372
    %510 = vst.msk [vmem:[%s162 + $0x170] sm:$0xff] %vm465, %v374
    %511 = vst.msk [vmem:[%s162 + $0x178] sm:$0xff] %vm465, %v376
    %512 = vst.msk [vmem:[%s162 + $0x180] sm:$0xff] %vm465, %v378
    %513 = vst.msk [vmem:[%s162 + $0x188] sm:$0xff] %vm465, %v380
    %514 = vst.msk [vmem:[%s162 + $0x190] sm:$0xff] %vm465, %v382
    %515 = vst.msk [vmem:[%s162 + $0x198] sm:$0xff] %vm465, %v384
    %516 = vst.msk [vmem:[%s162 + $0x1a0] sm:$0xff] %vm465, %v386
    %517 = vst.msk [vmem:[%s162 + $0x1a8] sm:$0xff] %vm465, %v388
    %518 = vst.msk [vmem:[%s162 + $0x1b0] sm:$0xff] %vm465, %v390
    %519 = vst.msk [vmem:[%s162 + $0x1b8] sm:$0xff] %vm465, %v392
    %520 = vst.msk [vmem:[%s162 + $0x1c0] sm:$0xff] %vm465, %v394
    %521 = vst.msk [vmem:[%s162 + $0x1c8] sm:$0xff] %vm465, %v396
    %522 = vst.msk [vmem:[%s162 + $0x1d0] sm:$0xff] %vm465, %v398
    %523 = vst.msk [vmem:[%s162 + $0x1d8] sm:$0xff] %vm465, %v400
    %524 = vst.msk [vmem:[%s162 + $0x1e0] sm:$0xff] %vm465, %v402
    %525 = vst.msk [vmem:[%s162 + $0x1e8] sm:$0xff] %vm465, %v404
    %526 = vrot.lane.b32.xlu0 %v33, 6
    %v527 = vpop.permute.xlu0 %526
    %528 = vrot.lane.b32.xlu0 %v34, 6
    %v529 = vpop.permute.xlu0 %528
    %530 = vrot.lane.b32.xlu0 %v35, 6
    %v531 = vpop.permute.xlu0 %530
    %532 = vrot.lane.b32.xlu0 %v36, 6
    %v533 = vpop.permute.xlu0 %532
    %534 = vrot.lane.b32.xlu0 %v37, 6
    %v535 = vpop.permute.xlu0 %534
    %536 = vrot.lane.b32.xlu0 %v38, 6
    %v537 = vpop.permute.xlu0 %536
    %538 = vrot.lane.b32.xlu0 %v39, 6
    %v539 = vpop.permute.xlu0 %538
    %540 = vrot.lane.b32.xlu0 %v40, 6
    %v541 = vpop.permute.xlu0 %540
    %542 = vrot.lane.b32.xlu0 %v41, 6
    %v543 = vpop.permute.xlu0 %542
    %544 = vrot.lane.b32.xlu0 %v42, 6
    %v545 = vpop.permute.xlu0 %544
    %546 = vrot.lane.b32.xlu0 %v43, 6
    %v547 = vpop.permute.xlu0 %546
    %548 = vrot.lane.b32.xlu0 %v44, 6
    %v549 = vpop.permute.xlu0 %548
    %550 = vrot.lane.b32.xlu0 %v45, 6
    %v551 = vpop.permute.xlu0 %550
    %552 = vrot.lane.b32.xlu0 %v46, 6
    %v553 = vpop.permute.xlu0 %552
    %554 = vrot.lane.b32.xlu0 %v47, 6
    %v555 = vpop.permute.xlu0 %554
    %556 = vrot.lane.b32.xlu0 %v48, 6
    %v557 = vpop.permute.xlu0 %556
    %558 = vrot.lane.b32.xlu0 %v49, 6
    %v559 = vpop.permute.xlu0 %558
    %560 = vrot.lane.b32.xlu0 %v50, 6
    %v561 = vpop.permute.xlu0 %560
    %562 = vrot.lane.b32.xlu0 %v51, 6
    %v563 = vpop.permute.xlu0 %562
    %564 = vrot.lane.b32.xlu0 %v52, 6
    %v565 = vpop.permute.xlu0 %564
    %566 = vrot.lane.b32.xlu0 %v53, 6
    %v567 = vpop.permute.xlu0 %566
    %568 = vrot.lane.b32.xlu0 %v54, 6
    %v569 = vpop.permute.xlu0 %568
    %570 = vrot.lane.b32.xlu0 %v55, 6
    %v571 = vpop.permute.xlu0 %570
    %572 = vrot.lane.b32.xlu0 %v56, 6
    %v573 = vpop.permute.xlu0 %572
    %574 = vrot.lane.b32.xlu0 %v57, 6
    %v575 = vpop.permute.xlu0 %574
    %576 = vrot.lane.b32.xlu0 %v58, 6
    %v577 = vpop.permute.xlu0 %576
    %578 = vrot.lane.b32.xlu0 %v59, 6
    %v579 = vpop.permute.xlu0 %578
    %580 = vrot.lane.b32.xlu0 %v60, 6
    %v581 = vpop.permute.xlu0 %580
    %582 = vrot.lane.b32.xlu0 %v61, 6
    %v583 = vpop.permute.xlu0 %582
    %584 = vrot.lane.b32.xlu0 %v62, 6
    %v585 = vpop.permute.xlu0 %584
    %586 = vrot.lane.b32.xlu0 %v65, 6
    %v587 = vpop.permute.xlu0 %586
    %588 = vrot.lane.b32.xlu0 %v66, 6
    %v589 = vpop.permute.xlu0 %588
    %590 = vrot.lane.b32.xlu0 %v67, 6
    %v591 = vpop.permute.xlu0 %590
    %592 = vrot.lane.b32.xlu0 %v68, 6
    %v593 = vpop.permute.xlu0 %592
    %594 = vrot.lane.b32.xlu0 %v69, 6
    %v595 = vpop.permute.xlu0 %594
    %596 = vrot.lane.b32.xlu0 %v70, 6
    %v597 = vpop.permute.xlu0 %596
    %598 = vrot.lane.b32.xlu0 %v71, 6
    %v599 = vpop.permute.xlu0 %598
    %600 = vrot.lane.b32.xlu0 %v72, 6
    %v601 = vpop.permute.xlu0 %600
    %602 = vrot.lane.b32.xlu0 %v73, 6
    %v603 = vpop.permute.xlu0 %602
    %604 = vrot.lane.b32.xlu0 %v74, 6
    %v605 = vpop.permute.xlu0 %604
    %606 = vrot.lane.b32.xlu0 %v75, 6
    %v607 = vpop.permute.xlu0 %606
    %608 = vrot.lane.b32.xlu0 %v76, 6
    %v609 = vpop.permute.xlu0 %608
    %610 = vrot.lane.b32.xlu0 %v77, 6
    %v611 = vpop.permute.xlu0 %610
    %612 = vrot.lane.b32.xlu0 %v78, 6
    %v613 = vpop.permute.xlu0 %612
    %614 = vrot.lane.b32.xlu0 %v79, 6
    %v615 = vpop.permute.xlu0 %614
    %616 = vrot.lane.b32.xlu0 %v80, 6
    %v617 = vpop.permute.xlu0 %616
    %618 = vrot.lane.b32.xlu0 %v81, 6
    %v619 = vpop.permute.xlu0 %618
    %620 = vrot.lane.b32.xlu0 %v82, 6
    %v621 = vpop.permute.xlu0 %620
    %622 = vrot.lane.b32.xlu0 %v83, 6
    %v623 = vpop.permute.xlu0 %622
    %624 = vrot.lane.b32.xlu0 %v84, 6
    %v625 = vpop.permute.xlu0 %624
    %626 = vrot.lane.b32.xlu0 %v85, 6
    %v627 = vpop.permute.xlu0 %626
    %628 = vrot.lane.b32.xlu0 %v86, 6
    %v629 = vpop.permute.xlu0 %628
    %630 = vrot.lane.b32.xlu0 %v87, 6
    %v631 = vpop.permute.xlu0 %630
    %632 = vrot.lane.b32.xlu0 %v88, 6
    %v633 = vpop.permute.xlu0 %632
    %634 = vrot.lane.b32.xlu0 %v89, 6
    %v635 = vpop.permute.xlu0 %634
    %636 = vrot.lane.b32.xlu0 %v90, 6
    %v637 = vpop.permute.xlu0 %636
    %638 = vrot.lane.b32.xlu0 %v91, 6
    %v639 = vpop.permute.xlu0 %638
    %640 = vrot.lane.b32.xlu0 %v92, 6
    %v641 = vpop.permute.xlu0 %640
    %642 = vrot.lane.b32.xlu0 %v93, 6
    %v643 = vpop.permute.xlu0 %642
    %644 = vrot.lane.b32.xlu0 %v94, 6
    %v645 = vpop.permute.xlu0 %644
    %vm706 = vcmask 72753
    %707 = vst.msk [vmem:[%s162 - $0x1] sm:$0xfe] %vm706, %v527
    %vm708 = vcmask 72752
    %709 = vst.msk [vmem:[%s162 + $0x7] sm:$0xff] %vm708, %v529
    %710 = vst.msk [vmem:[%s162 + $0xf] sm:$0xfe] %vm706, %v531
    %711 = vst.msk [vmem:[%s162 + $0x17] sm:$0xff] %vm708, %v533
    %712 = vst.msk [vmem:[%s162 + $0x1f] sm:$0xfe] %vm706, %v535
    %713 = vst.msk [vmem:[%s162 + $0x27] sm:$0xff] %vm708, %v537
    %714 = vst.msk [vmem:[%s162 + $0x2f] sm:$0xfe] %vm706, %v539
    %715 = vst.msk [vmem:[%s162 + $0x37] sm:$0xff] %vm708, %v541
    %716 = vst.msk [vmem:[%s162 + $0x3f] sm:$0xfe] %vm706, %v543
    %717 = vst.msk [vmem:[%s162 + $0x47] sm:$0xff] %vm708, %v545
    %718 = vst.msk [vmem:[%s162 + $0x4f] sm:$0xfe] %vm706, %v547
    %719 = vst.msk [vmem:[%s162 + $0x57] sm:$0xff] %vm708, %v549
    %720 = vst.msk [vmem:[%s162 + $0x5f] sm:$0xfe] %vm706, %v551
    %721 = vst.msk [vmem:[%s162 + $0x67] sm:$0xff] %vm708, %v553
    %722 = vst.msk [vmem:[%s162 + $0x6f] sm:$0xfe] %vm706, %v555
    %723 = vst.msk [vmem:[%s162 + $0x77] sm:$0xff] %vm708, %v557
    %724 = vst.msk [vmem:[%s162 + $0x7f] sm:$0xfe] %vm706, %v559
    %725 = vst.msk [vmem:[%s162 + $0x87] sm:$0xff] %vm708, %v561
    %726 = vst.msk [vmem:[%s162 + $0x8f] sm:$0xfe] %vm706, %v563
    %727 = vst.msk [vmem:[%s162 + $0x97] sm:$0xff] %vm708, %v565
    %728 = vst.msk [vmem:[%s162 + $0x9f] sm:$0xfe] %vm706, %v567
    %729 = vst.msk [vmem:[%s162 + $0xa7] sm:$0xff] %vm708, %v569
    %730 = vst.msk [vmem:[%s162 + $0xaf] sm:$0xfe] %vm706, %v571
    %731 = vst.msk [vmem:[%s162 + $0xb7] sm:$0xff] %vm708, %v573
    %732 = vst.msk [vmem:[%s162 + $0xbf] sm:$0xfe] %vm706, %v575
    %733 = vst.msk [vmem:[%s162 + $0xc7] sm:$0xff] %vm708, %v577
    %734 = vst.msk [vmem:[%s162 + $0xcf] sm:$0xfe] %vm706, %v579
    %735 = vst.msk [vmem:[%s162 + $0xd7] sm:$0xff] %vm708, %v581
    %736 = vst.msk [vmem:[%s162 + $0xdf] sm:$0xfe] %vm706, %v583
    %737 = vst.msk [vmem:[%s162 + $0xe7] sm:$0xff] %vm708, %v585
    %738 = vst.msk [vmem:[%s162 + $0xff] sm:$0xfe] %vm706, %v587
    %739 = vst.msk [vmem:[%s162 + $0x107] sm:$0xff] %vm708, %v589
    %740 = vst.msk [vmem:[%s162 + $0x10f] sm:$0xfe] %vm706, %v591
    %741 = vst.msk [vmem:[%s162 + $0x117] sm:$0xff] %vm708, %v593
    %742 = vst.msk [vmem:[%s162 + $0x11f] sm:$0xfe] %vm706, %v595
    %743 = vst.msk [vmem:[%s162 + $0x127] sm:$0xff] %vm708, %v597
    %744 = vst.msk [vmem:[%s162 + $0x12f] sm:$0xfe] %vm706, %v599
    %745 = vst.msk [vmem:[%s162 + $0x137] sm:$0xff] %vm708, %v601
    %746 = vst.msk [vmem:[%s162 + $0x13f] sm:$0xfe] %vm706, %v603
    %747 = vst.msk [vmem:[%s162 + $0x147] sm:$0xff] %vm708, %v605
    %748 = vst.msk [vmem:[%s162 + $0x14f] sm:$0xfe] %vm706, %v607
    %749 = vst.msk [vmem:[%s162 + $0x157] sm:$0xff] %vm708, %v609
    %750 = vst.msk [vmem:[%s162 + $0x15f] sm:$0xfe] %vm706, %v611
    %751 = vst.msk [vmem:[%s162 + $0x167] sm:$0xff] %vm708, %v613
    %752 = vst.msk [vmem:[%s162 + $0x16f] sm:$0xfe] %vm706, %v615
    %753 = vst.msk [vmem:[%s162 + $0x177] sm:$0xff] %vm708, %v617
    %754 = vst.msk [vmem:[%s162 + $0x17f] sm:$0xfe] %vm706, %v619
    %755 = vst.msk [vmem:[%s162 + $0x187] sm:$0xff] %vm708, %v621
    %756 = vst.msk [vmem:[%s162 + $0x18f] sm:$0xfe] %vm706, %v623
    %757 = vst.msk [vmem:[%s162 + $0x197] sm:$0xff] %vm708, %v625
    %758 = vst.msk [vmem:[%s162 + $0x19f] sm:$0xfe] %vm706, %v627
    %759 = vst.msk [vmem:[%s162 + $0x1a7] sm:$0xff] %vm708, %v629
    %760 = vst.msk [vmem:[%s162 + $0x1af] sm:$0xfe] %vm706, %v631
    %761 = vst.msk [vmem:[%s162 + $0x1b7] sm:$0xff] %vm708, %v633
    %762 = vst.msk [vmem:[%s162 + $0x1bf] sm:$0xfe] %vm706, %v635
    %763 = vst.msk [vmem:[%s162 + $0x1c7] sm:$0xff] %vm708, %v637
    %764 = vst.msk [vmem:[%s162 + $0x1cf] sm:$0xfe] %vm706, %v639
    %765 = vst.msk [vmem:[%s162 + $0x1d7] sm:$0xff] %vm708, %v641
    %766 = vst.msk [vmem:[%s162 + $0x1df] sm:$0xfe] %vm706, %v643
    %767 = vst.msk [vmem:[%s162 + $0x1e7] sm:$0xff] %vm708, %v645
    %772 = vrot.lane.b32.xlu0 %v33, 9
    %v773 = vpop.permute.xlu0 %772
    %774 = vrot.lane.b32.xlu0 %v34, 9
    %v775 = vpop.permute.xlu0 %774
    %776 = vrot.lane.b32.xlu0 %v35, 9
    %v777 = vpop.permute.xlu0 %776
    %778 = vrot.lane.b32.xlu0 %v36, 9
    %v779 = vpop.permute.xlu0 %778
    %780 = vrot.lane.b32.xlu0 %v37, 9
    %v781 = vpop.permute.xlu0 %780
    %782 = vrot.lane.b32.xlu0 %v38, 9
    %v783 = vpop.permute.xlu0 %782
    %784 = vrot.lane.b32.xlu0 %v39, 9
    %v785 = vpop.permute.xlu0 %784
    %786 = vrot.lane.b32.xlu0 %v40, 9
    %v787 = vpop.permute.xlu0 %786
    %788 = vrot.lane.b32.xlu0 %v41, 9
    %v789 = vpop.permute.xlu0 %788
    %790 = vrot.lane.b32.xlu0 %v42, 9
    %v791 = vpop.permute.xlu0 %790
    %792 = vrot.lane.b32.xlu0 %v43, 9
    %v793 = vpop.permute.xlu0 %792
    %794 = vrot.lane.b32.xlu0 %v44, 9
    %v795 = vpop.permute.xlu0 %794
    %796 = vrot.lane.b32.xlu0 %v45, 9
    %v797 = vpop.permute.xlu0 %796
    %798 = vrot.lane.b32.xlu0 %v46, 9
    %v799 = vpop.permute.xlu0 %798
    %800 = vrot.lane.b32.xlu0 %v47, 9
    %v801 = vpop.permute.xlu0 %800
    %802 = vrot.lane.b32.xlu0 %v48, 9
    %v803 = vpop.permute.xlu0 %802
    %804 = vrot.lane.b32.xlu0 %v49, 9
    %v805 = vpop.permute.xlu0 %804
    %806 = vrot.lane.b32.xlu0 %v50, 9
    %v807 = vpop.permute.xlu0 %806
    %808 = vrot.lane.b32.xlu0 %v51, 9
    %v809 = vpop.permute.xlu0 %808
    %810 = vrot.lane.b32.xlu0 %v52, 9
    %v811 = vpop.permute.xlu0 %810
    %812 = vrot.lane.b32.xlu0 %v53, 9
    %v813 = vpop.permute.xlu0 %812
    %814 = vrot.lane.b32.xlu0 %v54, 9
    %v815 = vpop.permute.xlu0 %814
    %816 = vrot.lane.b32.xlu0 %v55, 9
    %v817 = vpop.permute.xlu0 %816
    %818 = vrot.lane.b32.xlu0 %v56, 9
    %v819 = vpop.permute.xlu0 %818
    %820 = vrot.lane.b32.xlu0 %v57, 9
    %v821 = vpop.permute.xlu0 %820
    %822 = vrot.lane.b32.xlu0 %v58, 9
    %v823 = vpop.permute.xlu0 %822
    %824 = vrot.lane.b32.xlu0 %v59, 9
    %v825 = vpop.permute.xlu0 %824
    %826 = vrot.lane.b32.xlu0 %v60, 9
    %v827 = vpop.permute.xlu0 %826
    %828 = vrot.lane.b32.xlu0 %v61, 9
    %v829 = vpop.permute.xlu0 %828
    %830 = vrot.lane.b32.xlu0 %v62, 9
    %v831 = vpop.permute.xlu0 %830
    %832 = vrot.lane.b32.xlu0 %v63, 9
    %v833 = vpop.permute.xlu0 %832
    %834 = vrot.lane.b32.xlu0 %v64, 9
    %v835 = vpop.permute.xlu0 %834
    %836 = vrot.lane.b32.xlu0 %v65, 9
    %v837 = vpop.permute.xlu0 %836
    %838 = vrot.lane.b32.xlu0 %v66, 9
    %v839 = vpop.permute.xlu0 %838
    %840 = vrot.lane.b32.xlu0 %v67, 9
    %v841 = vpop.permute.xlu0 %840
    %842 = vrot.lane.b32.xlu0 %v68, 9
    %v843 = vpop.permute.xlu0 %842
    %844 = vrot.lane.b32.xlu0 %v69, 9
    %v845 = vpop.permute.xlu0 %844
    %846 = vrot.lane.b32.xlu0 %v70, 9
    %v847 = vpop.permute.xlu0 %846
    %848 = vrot.lane.b32.xlu0 %v71, 9
    %v849 = vpop.permute.xlu0 %848
    %850 = vrot.lane.b32.xlu0 %v72, 9
    %v851 = vpop.permute.xlu0 %850
    %852 = vrot.lane.b32.xlu0 %v73, 9
    %v853 = vpop.permute.xlu0 %852
    %854 = vrot.lane.b32.xlu0 %v74, 9
    %v855 = vpop.permute.xlu0 %854
    %856 = vrot.lane.b32.xlu0 %v75, 9
    %v857 = vpop.permute.xlu0 %856
    %858 = vrot.lane.b32.xlu0 %v76, 9
    %v859 = vpop.permute.xlu0 %858
    %860 = vrot.lane.b32.xlu0 %v77, 9
    %v861 = vpop.permute.xlu0 %860
    %862 = vrot.lane.b32.xlu0 %v78, 9
    %v863 = vpop.permute.xlu0 %862
    %864 = vrot.lane.b32.xlu0 %v79, 9
    %v865 = vpop.permute.xlu0 %864
    %866 = vrot.lane.b32.xlu0 %v80, 9
    %v867 = vpop.permute.xlu0 %866
    %868 = vrot.lane.b32.xlu0 %v81, 9
    %v869 = vpop.permute.xlu0 %868
    %870 = vrot.lane.b32.xlu0 %v82, 9
    %v871 = vpop.permute.xlu0 %870
    %872 = vrot.lane.b32.xlu0 %v83, 9
    %v873 = vpop.permute.xlu0 %872
    %874 = vrot.lane.b32.xlu0 %v84, 9
    %v875 = vpop.permute.xlu0 %874
    %876 = vrot.lane.b32.xlu0 %v85, 9
    %v877 = vpop.permute.xlu0 %876
    %878 = vrot.lane.b32.xlu0 %v86, 9
    %v879 = vpop.permute.xlu0 %878
    %880 = vrot.lane.b32.xlu0 %v87, 9
    %v881 = vpop.permute.xlu0 %880
    %882 = vrot.lane.b32.xlu0 %v88, 9
    %v883 = vpop.permute.xlu0 %882
    %884 = vrot.lane.b32.xlu0 %v89, 9
    %v885 = vpop.permute.xlu0 %884
    %886 = vrot.lane.b32.xlu0 %v90, 9
    %v887 = vpop.permute.xlu0 %886
    %888 = vrot.lane.b32.xlu0 %v91, 9
    %v889 = vpop.permute.xlu0 %888
    %890 = vrot.lane.b32.xlu0 %v92, 9
    %v891 = vpop.permute.xlu0 %890
    %892 = vrot.lane.b32.xlu0 %v93, 9
    %v893 = vpop.permute.xlu0 %892
    %894 = vrot.lane.b32.xlu0 %v94, 9
    %v895 = vpop.permute.xlu0 %894
    %896 = vrot.lane.b32.xlu0 %v95, 9
    %v897 = vpop.permute.xlu0 %896
    %898 = vrot.lane.b32.xlu0 %v96, 9
    %v899 = vpop.permute.xlu0 %898
    %vm964 = vcmask 97352
    %965 = vst.msk [vmem:[#allocation2 + $0x1] sm:$0xff] %vm964, %v773
    %vm966 = vcmask 96328
    %967 = vst.msk [vmem:[#allocation2 + $0x9] sm:$0x7f] %vm966, %v775
    %968 = vst.msk [vmem:[#allocation2 + $0x11] sm:$0xff] %vm964, %v777
    %969 = vst.msk [vmem:[#allocation2 + $0x19] sm:$0x7f] %vm966, %v779
    %970 = vst.msk [vmem:[#allocation2 + $0x21] sm:$0xff] %vm964, %v781
    %971 = vst.msk [vmem:[#allocation2 + $0x29] sm:$0x7f] %vm966, %v783
    %972 = vst.msk [vmem:[#allocation2 + $0x31] sm:$0xff] %vm964, %v785
    %973 = vst.msk [vmem:[#allocation2 + $0x39] sm:$0x7f] %vm966, %v787
    %974 = vst.msk [vmem:[#allocation2 + $0x41] sm:$0xff] %vm964, %v789
    %975 = vst.msk [vmem:[#allocation2 + $0x49] sm:$0x7f] %vm966, %v791
    %976 = vst.msk [vmem:[#allocation2 + $0x51] sm:$0xff] %vm964, %v793
    %977 = vst.msk [vmem:[#allocation2 + $0x59] sm:$0x7f] %vm966, %v795
    %978 = vst.msk [vmem:[#allocation2 + $0x61] sm:$0xff] %vm964, %v797
    %979 = vst.msk [vmem:[#allocation2 + $0x69] sm:$0x7f] %vm966, %v799
    %980 = vst.msk [vmem:[#allocation2 + $0x71] sm:$0xff] %vm964, %v801
    %981 = vst.msk [vmem:[#allocation2 + $0x79] sm:$0x7f] %vm966, %v803
    %982 = vst.msk [vmem:[#allocation2 + $0x81] sm:$0xff] %vm964, %v805
    %983 = vst.msk [vmem:[#allocation2 + $0x89] sm:$0x7f] %vm966, %v807
    %984 = vst.msk [vmem:[#allocation2 + $0x91] sm:$0xff] %vm964, %v809
    %985 = vst.msk [vmem:[#allocation2 + $0x99] sm:$0x7f] %vm966, %v811
    %986 = vst.msk [vmem:[#allocation2 + $0xa1] sm:$0xff] %vm964, %v813
    %987 = vst.msk [vmem:[#allocation2 + $0xa9] sm:$0x7f] %vm966, %v815
    %988 = vst.msk [vmem:[#allocation2 + $0xb1] sm:$0xff] %vm964, %v817
    %989 = vst.msk [vmem:[#allocation2 + $0xb9] sm:$0x7f] %vm966, %v819
    %990 = vst.msk [vmem:[#allocation2 + $0xc1] sm:$0xff] %vm964, %v821
    %991 = vst.msk [vmem:[#allocation2 + $0xc9] sm:$0x7f] %vm966, %v823
    %992 = vst.msk [vmem:[#allocation2 + $0xd1] sm:$0xff] %vm964, %v825
    %993 = vst.msk [vmem:[#allocation2 + $0xd9] sm:$0x7f] %vm966, %v827
    %994 = vst.msk [vmem:[#allocation2 + $0xe1] sm:$0xff] %vm964, %v829
    %995 = vst.msk [vmem:[#allocation2 + $0xe9] sm:$0x7f] %vm966, %v831
    %996 = vst.msk [vmem:[#allocation2 + $0xf1] sm:$0xff] %vm964, %v833
    %997 = vst.msk [vmem:[#allocation2 + $0xf9] sm:$0x7f] %vm966, %v835
    %998 = vst.msk [vmem:[#allocation2 + $0x101] sm:$0xff] %vm964, %v837
    %999 = vst.msk [vmem:[#allocation2 + $0x109] sm:$0x7f] %vm966, %v839
    %1000 = vst.msk [vmem:[#allocation2 + $0x111] sm:$0xff] %vm964, %v841
    %1001 = vst.msk [vmem:[#allocation2 + $0x119] sm:$0x7f] %vm966, %v843
    %1002 = vst.msk [vmem:[#allocation2 + $0x121] sm:$0xff] %vm964, %v845
    %1003 = vst.msk [vmem:[#allocation2 + $0x129] sm:$0x7f] %vm966, %v847
    %1004 = vst.msk [vmem:[#allocation2 + $0x131] sm:$0xff] %vm964, %v849
    %1005 = vst.msk [vmem:[#allocation2 + $0x139] sm:$0x7f] %vm966, %v851
    %1006 = vst.msk [vmem:[#allocation2 + $0x141] sm:$0xff] %vm964, %v853
    %1007 = vst.msk [vmem:[#allocation2 + $0x149] sm:$0x7f] %vm966, %v855
    %1008 = vst.msk [vmem:[#allocation2 + $0x151] sm:$0xff] %vm964, %v857
    %1009 = vst.msk [vmem:[#allocation2 + $0x159] sm:$0x7f] %vm966, %v859
    %1010 = vst.msk [vmem:[#allocation2 + $0x161] sm:$0xff] %vm964, %v861
    %1011 = vst.msk [vmem:[#allocation2 + $0x169] sm:$0x7f] %vm966, %v863
    %1012 = vst.msk [vmem:[#allocation2 + $0x171] sm:$0xff] %vm964, %v865
    %1013 = vst.msk [vmem:[#allocation2 + $0x179] sm:$0x7f] %vm966, %v867
    %1014 = vst.msk [vmem:[#allocation2 + $0x181] sm:$0xff] %vm964, %v869
    %1015 = vst.msk [vmem:[#allocation2 + $0x189] sm:$0x7f] %vm966, %v871
    %1016 = vst.msk [vmem:[#allocation2 + $0x191] sm:$0xff] %vm964, %v873
    %1017 = vst.msk [vmem:[#allocation2 + $0x199] sm:$0x7f] %vm966, %v875
    %1018 = vst.msk [vmem:[#allocation2 + $0x1a1] sm:$0xff] %vm964, %v877
    %1019 = vst.msk [vmem:[#allocation2 + $0x1a9] sm:$0x7f] %vm966, %v879
    %1020 = vst.msk [vmem:[#allocation2 + $0x1b1] sm:$0xff] %vm964, %v881
    %1021 = vst.msk [vmem:[#allocation2 + $0x1b9] sm:$0x7f] %vm966, %v883
    %1022 = vst.msk [vmem:[#allocation2 + $0x1c1] sm:$0xff] %vm964, %v885
    %1023 = vst.msk [vmem:[#allocation2 + $0x1c9] sm:$0x7f] %vm966, %v887
    %1024 = vst.msk [vmem:[#allocation2 + $0x1d1] sm:$0xff] %vm964, %v889
    %1025 = vst.msk [vmem:[#allocation2 + $0x1d9] sm:$0x7f] %vm966, %v891
    %1026 = vst.msk [vmem:[#allocation2 + $0x1e1] sm:$0xff] %vm964, %v893
    %1027 = vst.msk [vmem:[#allocation2 + $0x1e9] sm:$0x7f] %vm966, %v895
    %1028 = vst.msk [vmem:[#allocation2 + $0x1f1] sm:$0xff] %vm964, %v897
    %1029 = vst.msk [vmem:[#allocation2 + $0x1f9] sm:$0x7f] %vm966, %v899
    %1030 = vrot.lane.b32.xlu0 %v33, 12
    %v1031 = vpop.permute.xlu0 %1030
    %1032 = vrot.lane.b32.xlu0 %v34, 12
    %v1033 = vpop.permute.xlu0 %1032
    %1034 = vrot.lane.b32.xlu0 %v35, 12
    %v1035 = vpop.permute.xlu0 %1034
    %1036 = vrot.lane.b32.xlu0 %v36, 12
    %v1037 = vpop.permute.xlu0 %1036
    %1038 = vrot.lane.b32.xlu0 %v37, 12
    %v1039 = vpop.permute.xlu0 %1038
    %1040 = vrot.lane.b32.xlu0 %v38, 12
    %v1041 = vpop.permute.xlu0 %1040
    %1042 = vrot.lane.b32.xlu0 %v39, 12
    %v1043 = vpop.permute.xlu0 %1042
    %1044 = vrot.lane.b32.xlu0 %v40, 12
    %v1045 = vpop.permute.xlu0 %1044
    %1046 = vrot.lane.b32.xlu0 %v41, 12
    %v1047 = vpop.permute.xlu0 %1046
    %1048 = vrot.lane.b32.xlu0 %v42, 12
    %v1049 = vpop.permute.xlu0 %1048
    %1050 = vrot.lane.b32.xlu0 %v43, 12
    %v1051 = vpop.permute.xlu0 %1050
    %1052 = vrot.lane.b32.xlu0 %v44, 12
    %v1053 = vpop.permute.xlu0 %1052
    %1054 = vrot.lane.b32.xlu0 %v45, 12
    %v1055 = vpop.permute.xlu0 %1054
    %1056 = vrot.lane.b32.xlu0 %v46, 12
    %v1057 = vpop.permute.xlu0 %1056
    %1058 = vrot.lane.b32.xlu0 %v47, 12
    %v1059 = vpop.permute.xlu0 %1058
    %1060 = vrot.lane.b32.xlu0 %v48, 12
    %v1061 = vpop.permute.xlu0 %1060
    %1062 = vrot.lane.b32.xlu0 %v49, 12
    %v1063 = vpop.permute.xlu0 %1062
    %1064 = vrot.lane.b32.xlu0 %v50, 12
    %v1065 = vpop.permute.xlu0 %1064
    %1066 = vrot.lane.b32.xlu0 %v51, 12
    %v1067 = vpop.permute.xlu0 %1066
    %1068 = vrot.lane.b32.xlu0 %v52, 12
    %v1069 = vpop.permute.xlu0 %1068
    %1070 = vrot.lane.b32.xlu0 %v53, 12
    %v1071 = vpop.permute.xlu0 %1070
    %1072 = vrot.lane.b32.xlu0 %v54, 12
    %v1073 = vpop.permute.xlu0 %1072
    %1074 = vrot.lane.b32.xlu0 %v55, 12
    %v1075 = vpop.permute.xlu0 %1074
    %1076 = vrot.lane.b32.xlu0 %v56, 12
    %v1077 = vpop.permute.xlu0 %1076
    %1078 = vrot.lane.b32.xlu0 %v57, 12
    %v1079 = vpop.permute.xlu0 %1078
    %1080 = vrot.lane.b32.xlu0 %v58, 12
    %v1081 = vpop.permute.xlu0 %1080
    %1082 = vrot.lane.b32.xlu0 %v59, 12
    %v1083 = vpop.permute.xlu0 %1082
    %1084 = vrot.lane.b32.xlu0 %v60, 12
    %v1085 = vpop.permute.xlu0 %1084
    %1086 = vrot.lane.b32.xlu0 %v61, 12
    %v1087 = vpop.permute.xlu0 %1086
    %1088 = vrot.lane.b32.xlu0 %v62, 12
    %v1089 = vpop.permute.xlu0 %1088
    %1090 = vrot.lane.b32.xlu0 %v63, 12
    %v1091 = vpop.permute.xlu0 %1090
    %1092 = vrot.lane.b32.xlu0 %v64, 12
    %v1093 = vpop.permute.xlu0 %1092
    %1094 = vrot.lane.b32.xlu0 %v65, 12
    %v1095 = vpop.permute.xlu0 %1094
    %1096 = vrot.lane.b32.xlu0 %v66, 12
    %v1097 = vpop.permute.xlu0 %1096
    %1098 = vrot.lane.b32.xlu0 %v67, 12
    %v1099 = vpop.permute.xlu0 %1098
    %1100 = vrot.lane.b32.xlu0 %v68, 12
    %v1101 = vpop.permute.xlu0 %1100
    %1102 = vrot.lane.b32.xlu0 %v69, 12
    %v1103 = vpop.permute.xlu0 %1102
    %1104 = vrot.lane.b32.xlu0 %v70, 12
    %v1105 = vpop.permute.xlu0 %1104
    %1106 = vrot.lane.b32.xlu0 %v71, 12
    %v1107 = vpop.permute.xlu0 %1106
    %1108 = vrot.lane.b32.xlu0 %v72, 12
    %v1109 = vpop.permute.xlu0 %1108
    %1110 = vrot.lane.b32.xlu0 %v73, 12
    %v1111 = vpop.permute.xlu0 %1110
    %1112 = vrot.lane.b32.xlu0 %v74, 12
    %v1113 = vpop.permute.xlu0 %1112
    %1114 = vrot.lane.b32.xlu0 %v75, 12
    %v1115 = vpop.permute.xlu0 %1114
    %1116 = vrot.lane.b32.xlu0 %v76, 12
    %v1117 = vpop.permute.xlu0 %1116
    %1118 = vrot.lane.b32.xlu0 %v77, 12
    %v1119 = vpop.permute.xlu0 %1118
    %1120 = vrot.lane.b32.xlu0 %v78, 12
    %v1121 = vpop.permute.xlu0 %1120
    %1122 = vrot.lane.b32.xlu0 %v79, 12
    %v1123 = vpop.permute.xlu0 %1122
    %1124 = vrot.lane.b32.xlu0 %v80, 12
    %v1125 = vpop.permute.xlu0 %1124
    %1126 = vrot.lane.b32.xlu0 %v81, 12
    %v1127 = vpop.permute.xlu0 %1126
    %1128 = vrot.lane.b32.xlu0 %v82, 12
    %v1129 = vpop.permute.xlu0 %1128
    %1130 = vrot.lane.b32.xlu0 %v83, 12
    %v1131 = vpop.permute.xlu0 %1130
    %1132 = vrot.lane.b32.xlu0 %v84, 12
    %v1133 = vpop.permute.xlu0 %1132
    %1134 = vrot.lane.b32.xlu0 %v85, 12
    %v1135 = vpop.permute.xlu0 %1134
    %1136 = vrot.lane.b32.xlu0 %v86, 12
    %v1137 = vpop.permute.xlu0 %1136
    %1138 = vrot.lane.b32.xlu0 %v87, 12
    %v1139 = vpop.permute.xlu0 %1138
    %1140 = vrot.lane.b32.xlu0 %v88, 12
    %v1141 = vpop.permute.xlu0 %1140
    %1142 = vrot.lane.b32.xlu0 %v89, 12
    %v1143 = vpop.permute.xlu0 %1142
    %1144 = vrot.lane.b32.xlu0 %v90, 12
    %v1145 = vpop.permute.xlu0 %1144
    %1146 = vrot.lane.b32.xlu0 %v91, 12
    %v1147 = vpop.permute.xlu0 %1146
    %1148 = vrot.lane.b32.xlu0 %v92, 12
    %v1149 = vpop.permute.xlu0 %1148
    %1150 = vrot.lane.b32.xlu0 %v93, 12
    %v1151 = vpop.permute.xlu0 %1150
    %1152 = vrot.lane.b32.xlu0 %v94, 12
    %v1153 = vpop.permute.xlu0 %1152
    %1154 = vrot.lane.b32.xlu0 %v95, 12
    %v1155 = vpop.permute.xlu0 %1154
    %1156 = vrot.lane.b32.xlu0 %v96, 12
    %v1157 = vpop.permute.xlu0 %1156
    %vm1222 = vcmask 121952
    %1223 = vst.msk [vmem:[#allocation2] sm:$0xff] %vm1222, %v1031
    %1224 = vst.msk [vmem:[#allocation2 + $0x8] sm:$0xff] %vm1222, %v1033
    %1225 = vst.msk [vmem:[#allocation2 + $0x10] sm:$0xff] %vm1222, %v1035
    %1226 = vst.msk [vmem:[#allocation2 + $0x18] sm:$0xff] %vm1222, %v1037
    %1227 = vst.msk [vmem:[#allocation2 + $0x20] sm:$0xff] %vm1222, %v1039
    %1228 = vst.msk [vmem:[#allocation2 + $0x28] sm:$0xff] %vm1222, %v1041
    %1229 = vst.msk [vmem:[#allocation2 + $0x30] sm:$0xff] %vm1222, %v1043
    %1230 = vst.msk [vmem:[#allocation2 + $0x38] sm:$0xff] %vm1222, %v1045
    %1231 = vst.msk [vmem:[#allocation2 + $0x40] sm:$0xff] %vm1222, %v1047
    %1232 = vst.msk [vmem:[#allocation2 + $0x48] sm:$0xff] %vm1222, %v1049
    %1233 = vst.msk [vmem:[#allocation2 + $0x50] sm:$0xff] %vm1222, %v1051
    %1234 = vst.msk [vmem:[#allocation2 + $0x58] sm:$0xff] %vm1222, %v1053
    %1235 = vst.msk [vmem:[#allocation2 + $0x60] sm:$0xff] %vm1222, %v1055
    %1236 = vst.msk [vmem:[#allocation2 + $0x68] sm:$0xff] %vm1222, %v1057
    %1237 = vst.msk [vmem:[#allocation2 + $0x70] sm:$0xff] %vm1222, %v1059
    %1238 = vst.msk [vmem:[#allocation2 + $0x78] sm:$0xff] %vm1222, %v1061
    %1239 = vst.msk [vmem:[#allocation2 + $0x80] sm:$0xff] %vm1222, %v1063
    %1240 = vst.msk [vmem:[#allocation2 + $0x88] sm:$0xff] %vm1222, %v1065
    %1241 = vst.msk [vmem:[#allocation2 + $0x90] sm:$0xff] %vm1222, %v1067
    %1242 = vst.msk [vmem:[#allocation2 + $0x98] sm:$0xff] %vm1222, %v1069
    %1243 = vst.msk [vmem:[#allocation2 + $0xa0] sm:$0xff] %vm1222, %v1071
    %1244 = vst.msk [vmem:[#allocation2 + $0xa8] sm:$0xff] %vm1222, %v1073
    %1245 = vst.msk [vmem:[#allocation2 + $0xb0] sm:$0xff] %vm1222, %v1075
    %1246 = vst.msk [vmem:[#allocation2 + $0xb8] sm:$0xff] %vm1222, %v1077
    %1247 = vst.msk [vmem:[#allocation2 + $0xc0] sm:$0xff] %vm1222, %v1079
    %1248 = vst.msk [vmem:[#allocation2 + $0xc8] sm:$0xff] %vm1222, %v1081
    %1249 = vst.msk [vmem:[#allocation2 + $0xd0] sm:$0xff] %vm1222, %v1083
    %1250 = vst.msk [vmem:[#allocation2 + $0xd8] sm:$0xff] %vm1222, %v1085
    %1251 = vst.msk [vmem:[#allocation2 + $0xe0] sm:$0xff] %vm1222, %v1087
    %1252 = vst.msk [vmem:[#allocation2 + $0xe8] sm:$0xff] %vm1222, %v1089
    %1253 = vst.msk [vmem:[#allocation2 + $0xf0] sm:$0xff] %vm1222, %v1091
    %1254 = vst.msk [vmem:[#allocation2 + $0xf8] sm:$0xff] %vm1222, %v1093
    %1255 = vst.msk [vmem:[#allocation2 + $0x100] sm:$0xff] %vm1222, %v1095
    %1256 = vst.msk [vmem:[#allocation2 + $0x108] sm:$0xff] %vm1222, %v1097
    %1257 = vst.msk [vmem:[#allocation2 + $0x110] sm:$0xff] %vm1222, %v1099
    %1258 = vst.msk [vmem:[#allocation2 + $0x118] sm:$0xff] %vm1222, %v1101
    %1259 = vst.msk [vmem:[#allocation2 + $0x120] sm:$0xff] %vm1222, %v1103
    %1260 = vst.msk [vmem:[#allocation2 + $0x128] sm:$0xff] %vm1222, %v1105
    %1261 = vst.msk [vmem:[#allocation2 + $0x130] sm:$0xff] %vm1222, %v1107
    %1262 = vst.msk [vmem:[#allocation2 + $0x138] sm:$0xff] %vm1222, %v1109
    %1263 = vst.msk [vmem:[#allocation2 + $0x140] sm:$0xff] %vm1222, %v1111
    %1264 = vst.msk [vmem:[#allocation2 + $0x148] sm:$0xff] %vm1222, %v1113
    %1265 = vst.msk [vmem:[#allocation2 + $0x150] sm:$0xff] %vm1222, %v1115
    %1266 = vst.msk [vmem:[#allocation2 + $0x158] sm:$0xff] %vm1222, %v1117
    %1267 = vst.msk [vmem:[#allocation2 + $0x160] sm:$0xff] %vm1222, %v1119
    %1268 = vst.msk [vmem:[#allocation2 + $0x168] sm:$0xff] %vm1222, %v1121
    %1269 = vst.msk [vmem:[#allocation2 + $0x170] sm:$0xff] %vm1222, %v1123
    %1270 = vst.msk [vmem:[#allocation2 + $0x178] sm:$0xff] %vm1222, %v1125
    %1271 = vst.msk [vmem:[#allocation2 + $0x180] sm:$0xff] %vm1222, %v1127
    %1272 = vst.msk [vmem:[#allocation2 + $0x188] sm:$0xff] %vm1222, %v1129
    %1273 = vst.msk [vmem:[#allocation2 + $0x190] sm:$0xff] %vm1222, %v1131
    %1274 = vst.msk [vmem:[#allocation2 + $0x198] sm:$0xff] %vm1222, %v1133
    %1275 = vst.msk [vmem:[#allocation2 + $0x1a0] sm:$0xff] %vm1222, %v1135
    %1276 = vst.msk [vmem:[#allocation2 + $0x1a8] sm:$0xff] %vm1222, %v1137
    %1277 = vst.msk [vmem:[#allocation2 + $0x1b0] sm:$0xff] %vm1222, %v1139
    %1278 = vst.msk [vmem:[#allocation2 + $0x1b8] sm:$0xff] %vm1222, %v1141
    %1279 = vst.msk [vmem:[#allocation2 + $0x1c0] sm:$0xff] %vm1222, %v1143
    %1280 = vst.msk [vmem:[#allocation2 + $0x1c8] sm:$0xff] %vm1222, %v1145
    %1281 = vst.msk [vmem:[#allocation2 + $0x1d0] sm:$0xff] %vm1222, %v1147
    %1282 = vst.msk [vmem:[#allocation2 + $0x1d8] sm:$0xff] %vm1222, %v1149
    %1283 = vst.msk [vmem:[#allocation2 + $0x1e0] sm:$0xff] %vm1222, %v1151
    %1284 = vst.msk [vmem:[#allocation2 + $0x1e8] sm:$0xff] %vm1222, %v1153
    %1285 = vst.msk [vmem:[#allocation2 + $0x1f0] sm:$0xff] %vm1222, %v1155
    %1286 = vst.msk [vmem:[#allocation2 + $0x1f8] sm:$0xff] %vm1222, %v1157
    %1287 = vrot.lane.b32.xlu0 %v33, 15
    %v1288 = vpop.permute.xlu0 %1287
    %1289 = vrot.lane.b32.xlu0 %v34, 15
    %v1290 = vpop.permute.xlu0 %1289
    %1291 = vrot.lane.b32.xlu0 %v35, 15
    %v1292 = vpop.permute.xlu0 %1291
    %1293 = vrot.lane.b32.xlu0 %v36, 15
    %v1294 = vpop.permute.xlu0 %1293
    %1295 = vrot.lane.b32.xlu0 %v37, 15
    %v1296 = vpop.permute.xlu0 %1295
    %1297 = vrot.lane.b32.xlu0 %v38, 15
    %v1298 = vpop.permute.xlu0 %1297
    %1299 = vrot.lane.b32.xlu0 %v39, 15
    %v1300 = vpop.permute.xlu0 %1299
    %1301 = vrot.lane.b32.xlu0 %v40, 15
    %v1302 = vpop.permute.xlu0 %1301
    %1303 = vrot.lane.b32.xlu0 %v41, 15
    %v1304 = vpop.permute.xlu0 %1303
    %1305 = vrot.lane.b32.xlu0 %v42, 15
    %v1306 = vpop.permute.xlu0 %1305
    %1307 = vrot.lane.b32.xlu0 %v43, 15
    %v1308 = vpop.permute.xlu0 %1307
    %1309 = vrot.lane.b32.xlu0 %v44, 15
    %v1310 = vpop.permute.xlu0 %1309
    %1311 = vrot.lane.b32.xlu0 %v45, 15
    %v1312 = vpop.permute.xlu0 %1311
    %1313 = vrot.lane.b32.xlu0 %v46, 15
    %v1314 = vpop.permute.xlu0 %1313
    %1315 = vrot.lane.b32.xlu0 %v47, 15
    %v1316 = vpop.permute.xlu0 %1315
    %1317 = vrot.lane.b32.xlu0 %v48, 15
    %v1318 = vpop.permute.xlu0 %1317
    %1319 = vrot.lane.b32.xlu0 %v49, 15
    %v1320 = vpop.permute.xlu0 %1319
    %1321 = vrot.lane.b32.xlu0 %v50, 15
    %v1322 = vpop.permute.xlu0 %1321
    %1323 = vrot.lane.b32.xlu0 %v51, 15
    %v1324 = vpop.permute.xlu0 %1323
    %1325 = vrot.lane.b32.xlu0 %v52, 15
    %v1326 = vpop.permute.xlu0 %1325
    %1327 = vrot.lane.b32.xlu0 %v53, 15
    %v1328 = vpop.permute.xlu0 %1327
    %1329 = vrot.lane.b32.xlu0 %v54, 15
    %v1330 = vpop.permute.xlu0 %1329
    %1331 = vrot.lane.b32.xlu0 %v55, 15
    %v1332 = vpop.permute.xlu0 %1331
    %1333 = vrot.lane.b32.xlu0 %v56, 15
    %v1334 = vpop.permute.xlu0 %1333
    %1335 = vrot.lane.b32.xlu0 %v57, 15
    %v1336 = vpop.permute.xlu0 %1335
    %1337 = vrot.lane.b32.xlu0 %v58, 15
    %v1338 = vpop.permute.xlu0 %1337
    %1339 = vrot.lane.b32.xlu0 %v59, 15
    %v1340 = vpop.permute.xlu0 %1339
    %1341 = vrot.lane.b32.xlu0 %v60, 15
    %v1342 = vpop.permute.xlu0 %1341
    %1343 = vrot.lane.b32.xlu0 %v61, 15
    %v1344 = vpop.permute.xlu0 %1343
    %1345 = vrot.lane.b32.xlu0 %v62, 15
    %v1346 = vpop.permute.xlu0 %1345
    %1347 = vrot.lane.b32.xlu0 %v63, 15
    %v1348 = vpop.permute.xlu0 %1347
    %1349 = vrot.lane.b32.xlu0 %v64, 15
    %v1350 = vpop.permute.xlu0 %1349
    %1351 = vrot.lane.b32.xlu0 %v65, 15
    %v1352 = vpop.permute.xlu0 %1351
    %1353 = vrot.lane.b32.xlu0 %v66, 15
    %v1354 = vpop.permute.xlu0 %1353
    %1355 = vrot.lane.b32.xlu0 %v67, 15
    %v1356 = vpop.permute.xlu0 %1355
    %1357 = vrot.lane.b32.xlu0 %v68, 15
    %v1358 = vpop.permute.xlu0 %1357
    %1359 = vrot.lane.b32.xlu0 %v69, 15
    %v1360 = vpop.permute.xlu0 %1359
    %1361 = vrot.lane.b32.xlu0 %v70, 15
    %v1362 = vpop.permute.xlu0 %1361
    %1363 = vrot.lane.b32.xlu0 %v71, 15
    %v1364 = vpop.permute.xlu0 %1363
    %1365 = vrot.lane.b32.xlu0 %v72, 15
    %v1366 = vpop.permute.xlu0 %1365
    %1367 = vrot.lane.b32.xlu0 %v73, 15
    %v1368 = vpop.permute.xlu0 %1367
    %1369 = vrot.lane.b32.xlu0 %v74, 15
    %v1370 = vpop.permute.xlu0 %1369
    %1371 = vrot.lane.b32.xlu0 %v75, 15
    %v1372 = vpop.permute.xlu0 %1371
    %1373 = vrot.lane.b32.xlu0 %v76, 15
    %v1374 = vpop.permute.xlu0 %1373
    %1375 = vrot.lane.b32.xlu0 %v77, 15
    %v1376 = vpop.permute.xlu0 %1375
    %1377 = vrot.lane.b32.xlu0 %v78, 15
    %v1378 = vpop.permute.xlu0 %1377
    %1379 = vrot.lane.b32.xlu0 %v79, 15
    %v1380 = vpop.permute.xlu0 %1379
    %1381 = vrot.lane.b32.xlu0 %v80, 15
    %v1382 = vpop.permute.xlu0 %1381
    %1383 = vrot.lane.b32.xlu0 %v81, 15
    %v1384 = vpop.permute.xlu0 %1383
    %1385 = vrot.lane.b32.xlu0 %v82, 15
    %v1386 = vpop.permute.xlu0 %1385
    %1387 = vrot.lane.b32.xlu0 %v83, 15
    %v1388 = vpop.permute.xlu0 %1387
    %1389 = vrot.lane.b32.xlu0 %v84, 15
    %v1390 = vpop.permute.xlu0 %1389
    %1391 = vrot.lane.b32.xlu0 %v85, 15
    %v1392 = vpop.permute.xlu0 %1391
    %1393 = vrot.lane.b32.xlu0 %v86, 15
    %v1394 = vpop.permute.xlu0 %1393
    %1395 = vrot.lane.b32.xlu0 %v87, 15
    %v1396 = vpop.permute.xlu0 %1395
    %1397 = vrot.lane.b32.xlu0 %v88, 15
    %v1398 = vpop.permute.xlu0 %1397
    %1399 = vrot.lane.b32.xlu0 %v89, 15
    %v1400 = vpop.permute.xlu0 %1399
    %1401 = vrot.lane.b32.xlu0 %v90, 15
    %v1402 = vpop.permute.xlu0 %1401
    %1403 = vrot.lane.b32.xlu0 %v91, 15
    %v1404 = vpop.permute.xlu0 %1403
    %1405 = vrot.lane.b32.xlu0 %v92, 15
    %v1406 = vpop.permute.xlu0 %1405
    %1407 = vrot.lane.b32.xlu0 %v93, 15
    %v1408 = vpop.permute.xlu0 %1407
    %1409 = vrot.lane.b32.xlu0 %v94, 15
    %v1410 = vpop.permute.xlu0 %1409
    %1411 = vrot.lane.b32.xlu0 %v95, 15
    %v1412 = vpop.permute.xlu0 %1411
    %1413 = vrot.lane.b32.xlu0 %v96, 15
    %v1414 = vpop.permute.xlu0 %1413
    %vm1479 = vcmask 146553
    %1480 = vst.msk [vmem:[#allocation2 - $0x1] sm:$0xfe] %vm1479, %v1288
    %vm1481 = vcmask 146552
    %1482 = vst.msk [vmem:[#allocation2 + $0x7] sm:$0xff] %vm1481, %v1290
    %1483 = vst.msk [vmem:[#allocation2 + $0xf] sm:$0xfe] %vm1479, %v1292
    %1484 = vst.msk [vmem:[#allocation2 + $0x17] sm:$0xff] %vm1481, %v1294
    %1485 = vst.msk [vmem:[#allocation2 + $0x1f] sm:$0xfe] %vm1479, %v1296
    %1486 = vst.msk [vmem:[#allocation2 + $0x27] sm:$0xff] %vm1481, %v1298
    %1487 = vst.msk [vmem:[#allocation2 + $0x2f] sm:$0xfe] %vm1479, %v1300
    %1488 = vst.msk [vmem:[#allocation2 + $0x37] sm:$0xff] %vm1481, %v1302
    %1489 = vst.msk [vmem:[#allocation2 + $0x3f] sm:$0xfe] %vm1479, %v1304
    %1490 = vst.msk [vmem:[#allocation2 + $0x47] sm:$0xff] %vm1481, %v1306
    %1491 = vst.msk [vmem:[#allocation2 + $0x4f] sm:$0xfe] %vm1479, %v1308
    %1492 = vst.msk [vmem:[#allocation2 + $0x57] sm:$0xff] %vm1481, %v1310
    %1493 = vst.msk [vmem:[#allocation2 + $0x5f] sm:$0xfe] %vm1479, %v1312
    %1494 = vst.msk [vmem:[#allocation2 + $0x67] sm:$0xff] %vm1481, %v1314
    %1495 = vst.msk [vmem:[#allocation2 + $0x6f] sm:$0xfe] %vm1479, %v1316
    %1496 = vst.msk [vmem:[#allocation2 + $0x77] sm:$0xff] %vm1481, %v1318
    %1497 = vst.msk [vmem:[#allocation2 + $0x7f] sm:$0xfe] %vm1479, %v1320
    %1498 = vst.msk [vmem:[#allocation2 + $0x87] sm:$0xff] %vm1481, %v1322
    %1499 = vst.msk [vmem:[#allocation2 + $0x8f] sm:$0xfe] %vm1479, %v1324
    %1500 = vst.msk [vmem:[#allocation2 + $0x97] sm:$0xff] %vm1481, %v1326
    %1501 = vst.msk [vmem:[#allocation2 + $0x9f] sm:$0xfe] %vm1479, %v1328
    %1502 = vst.msk [vmem:[#allocation2 + $0xa7] sm:$0xff] %vm1481, %v1330
    %1503 = vst.msk [vmem:[#allocation2 + $0xaf] sm:$0xfe] %vm1479, %v1332
    %1504 = vst.msk [vmem:[#allocation2 + $0xb7] sm:$0xff] %vm1481, %v1334
    %1505 = vst.msk [vmem:[#allocation2 + $0xbf] sm:$0xfe] %vm1479, %v1336
    %1506 = vst.msk [vmem:[#allocation2 + $0xc7] sm:$0xff] %vm1481, %v1338
    %1507 = vst.msk [vmem:[#allocation2 + $0xcf] sm:$0xfe] %vm1479, %v1340
    %1508 = vst.msk [vmem:[#allocation2 + $0xd7] sm:$0xff] %vm1481, %v1342
    %1509 = vst.msk [vmem:[#allocation2 + $0xdf] sm:$0xfe] %vm1479, %v1344
    %1510 = vst.msk [vmem:[#allocation2 + $0xe7] sm:$0xff] %vm1481, %v1346
    %1511 = vst.msk [vmem:[#allocation2 + $0xef] sm:$0xfe] %vm1479, %v1348
    %1512 = vst.msk [vmem:[#allocation2 + $0xf7] sm:$0xff] %vm1481, %v1350
    %1513 = vst.msk [vmem:[#allocation2 + $0xff] sm:$0xfe] %vm1479, %v1352
    %1514 = vst.msk [vmem:[#allocation2 + $0x107] sm:$0xff] %vm1481, %v1354
    %1515 = vst.msk [vmem:[#allocation2 + $0x10f] sm:$0xfe] %vm1479, %v1356
    %1516 = vst.msk [vmem:[#allocation2 + $0x117] sm:$0xff] %vm1481, %v1358
    %1517 = vst.msk [vmem:[#allocation2 + $0x11f] sm:$0xfe] %vm1479, %v1360
    %1518 = vst.msk [vmem:[#allocation2 + $0x127] sm:$0xff] %vm1481, %v1362
    %1519 = vst.msk [vmem:[#allocation2 + $0x12f] sm:$0xfe] %vm1479, %v1364
    %1520 = vst.msk [vmem:[#allocation2 + $0x137] sm:$0xff] %vm1481, %v1366
    %1521 = vst.msk [vmem:[#allocation2 + $0x13f] sm:$0xfe] %vm1479, %v1368
    %1522 = vst.msk [vmem:[#allocation2 + $0x147] sm:$0xff] %vm1481, %v1370
    %1523 = vst.msk [vmem:[#allocation2 + $0x14f] sm:$0xfe] %vm1479, %v1372
    %1524 = vst.msk [vmem:[#allocation2 + $0x157] sm:$0xff] %vm1481, %v1374
    %1525 = vst.msk [vmem:[#allocation2 + $0x15f] sm:$0xfe] %vm1479, %v1376
    %1526 = vst.msk [vmem:[#allocation2 + $0x167] sm:$0xff] %vm1481, %v1378
    %1527 = vst.msk [vmem:[#allocation2 + $0x16f] sm:$0xfe] %vm1479, %v1380
    %1528 = vst.msk [vmem:[#allocation2 + $0x177] sm:$0xff] %vm1481, %v1382
    %1529 = vst.msk [vmem:[#allocation2 + $0x17f] sm:$0xfe] %vm1479, %v1384
    %1530 = vst.msk [vmem:[#allocation2 + $0x187] sm:$0xff] %vm1481, %v1386
    %1531 = vst.msk [vmem:[#allocation2 + $0x18f] sm:$0xfe] %vm1479, %v1388
    %1532 = vst.msk [vmem:[#allocation2 + $0x197] sm:$0xff] %vm1481, %v1390
    %1533 = vst.msk [vmem:[#allocation2 + $0x19f] sm:$0xfe] %vm1479, %v1392
    %1534 = vst.msk [vmem:[#allocation2 + $0x1a7] sm:$0xff] %vm1481, %v1394
    %1535 = vst.msk [vmem:[#allocation2 + $0x1af] sm:$0xfe] %vm1479, %v1396
    %1536 = vst.msk [vmem:[#allocation2 + $0x1b7] sm:$0xff] %vm1481, %v1398
    %1537 = vst.msk [vmem:[#allocation2 + $0x1bf] sm:$0xfe] %vm1479, %v1400
    %1538 = vst.msk [vmem:[#allocation2 + $0x1c7] sm:$0xff] %vm1481, %v1402
    %1539 = vst.msk [vmem:[#allocation2 + $0x1cf] sm:$0xfe] %vm1479, %v1404
    %1540 = vst.msk [vmem:[#allocation2 + $0x1d7] sm:$0xff] %vm1481, %v1406
    %1541 = vst.msk [vmem:[#allocation2 + $0x1df] sm:$0xfe] %vm1479, %v1408
    %1542 = vst.msk [vmem:[#allocation2 + $0x1e7] sm:$0xff] %vm1481, %v1410
    %1543 = vst.msk [vmem:[#allocation2 + $0x1ef] sm:$0xfe] %vm1479, %v1412
    %1544 = vst.msk [vmem:[#allocation2 + $0x1f7] sm:$0xff] %vm1481, %v1414
    %1545 = vrot.lane.b32.xlu0 %v35, 18
    %v1546 = vpop.permute.xlu0 %1545
    %1547 = vrot.lane.b32.xlu0 %v36, 18
    %v1548 = vpop.permute.xlu0 %1547
    %1549 = vrot.lane.b32.xlu0 %v37, 18
    %v1550 = vpop.permute.xlu0 %1549
    %1551 = vrot.lane.b32.xlu0 %v38, 18
    %v1552 = vpop.permute.xlu0 %1551
    %1553 = vrot.lane.b32.xlu0 %v39, 18
    %v1554 = vpop.permute.xlu0 %1553
    %1555 = vrot.lane.b32.xlu0 %v40, 18
    %v1556 = vpop.permute.xlu0 %1555
    %1557 = vrot.lane.b32.xlu0 %v41, 18
    %v1558 = vpop.permute.xlu0 %1557
    %1559 = vrot.lane.b32.xlu0 %v42, 18
    %v1560 = vpop.permute.xlu0 %1559
    %1561 = vrot.lane.b32.xlu0 %v43, 18
    %v1562 = vpop.permute.xlu0 %1561
    %1563 = vrot.lane.b32.xlu0 %v44, 18
    %v1564 = vpop.permute.xlu0 %1563
    %1565 = vrot.lane.b32.xlu0 %v45, 18
    %v1566 = vpop.permute.xlu0 %1565
    %1567 = vrot.lane.b32.xlu0 %v46, 18
    %v1568 = vpop.permute.xlu0 %1567
    %1569 = vrot.lane.b32.xlu0 %v47, 18
    %v1570 = vpop.permute.xlu0 %1569
    %1571 = vrot.lane.b32.xlu0 %v48, 18
    %v1572 = vpop.permute.xlu0 %1571
    %1573 = vrot.lane.b32.xlu0 %v49, 18
    %v1574 = vpop.permute.xlu0 %1573
    %1575 = vrot.lane.b32.xlu0 %v50, 18
    %v1576 = vpop.permute.xlu0 %1575
    %1577 = vrot.lane.b32.xlu0 %v51, 18
    %v1578 = vpop.permute.xlu0 %1577
    %1579 = vrot.lane.b32.xlu0 %v52, 18
    %v1580 = vpop.permute.xlu0 %1579
    %1581 = vrot.lane.b32.xlu0 %v53, 18
    %v1582 = vpop.permute.xlu0 %1581
    %1583 = vrot.lane.b32.xlu0 %v54, 18
    %v1584 = vpop.permute.xlu0 %1583
    %1585 = vrot.lane.b32.xlu0 %v55, 18
    %v1586 = vpop.permute.xlu0 %1585
    %1587 = vrot.lane.b32.xlu0 %v56, 18
    %v1588 = vpop.permute.xlu0 %1587
    %1589 = vrot.lane.b32.xlu0 %v57, 18
    %v1590 = vpop.permute.xlu0 %1589
    %1591 = vrot.lane.b32.xlu0 %v58, 18
    %v1592 = vpop.permute.xlu0 %1591
    %1593 = vrot.lane.b32.xlu0 %v59, 18
    %v1594 = vpop.permute.xlu0 %1593
    %1595 = vrot.lane.b32.xlu0 %v60, 18
    %v1596 = vpop.permute.xlu0 %1595
    %1597 = vrot.lane.b32.xlu0 %v61, 18
    %v1598 = vpop.permute.xlu0 %1597
    %1599 = vrot.lane.b32.xlu0 %v62, 18
    %v1600 = vpop.permute.xlu0 %1599
    %1601 = vrot.lane.b32.xlu0 %v63, 18
    %v1602 = vpop.permute.xlu0 %1601
    %1603 = vrot.lane.b32.xlu0 %v64, 18
    %v1604 = vpop.permute.xlu0 %1603
    %1605 = vrot.lane.b32.xlu0 %v67, 18
    %v1606 = vpop.permute.xlu0 %1605
    %1607 = vrot.lane.b32.xlu0 %v68, 18
    %v1608 = vpop.permute.xlu0 %1607
    %1609 = vrot.lane.b32.xlu0 %v69, 18
    %v1610 = vpop.permute.xlu0 %1609
    %1611 = vrot.lane.b32.xlu0 %v70, 18
    %v1612 = vpop.permute.xlu0 %1611
    %1613 = vrot.lane.b32.xlu0 %v71, 18
    %v1614 = vpop.permute.xlu0 %1613
    %1615 = vrot.lane.b32.xlu0 %v72, 18
    %v1616 = vpop.permute.xlu0 %1615
    %1617 = vrot.lane.b32.xlu0 %v73, 18
    %v1618 = vpop.permute.xlu0 %1617
    %1619 = vrot.lane.b32.xlu0 %v74, 18
    %v1620 = vpop.permute.xlu0 %1619
    %1621 = vrot.lane.b32.xlu0 %v75, 18
    %v1622 = vpop.permute.xlu0 %1621
    %1623 = vrot.lane.b32.xlu0 %v76, 18
    %v1624 = vpop.permute.xlu0 %1623
    %1625 = vrot.lane.b32.xlu0 %v77, 18
    %v1626 = vpop.permute.xlu0 %1625
    %1627 = vrot.lane.b32.xlu0 %v78, 18
    %v1628 = vpop.permute.xlu0 %1627
    %1629 = vrot.lane.b32.xlu0 %v79, 18
    %v1630 = vpop.permute.xlu0 %1629
    %1631 = vrot.lane.b32.xlu0 %v80, 18
    %v1632 = vpop.permute.xlu0 %1631
    %1633 = vrot.lane.b32.xlu0 %v81, 18
    %v1634 = vpop.permute.xlu0 %1633
    %1635 = vrot.lane.b32.xlu0 %v82, 18
    %v1636 = vpop.permute.xlu0 %1635
    %1637 = vrot.lane.b32.xlu0 %v83, 18
    %v1638 = vpop.permute.xlu0 %1637
    %1639 = vrot.lane.b32.xlu0 %v84, 18
    %v1640 = vpop.permute.xlu0 %1639
    %1641 = vrot.lane.b32.xlu0 %v85, 18
    %v1642 = vpop.permute.xlu0 %1641
    %1643 = vrot.lane.b32.xlu0 %v86, 18
    %v1644 = vpop.permute.xlu0 %1643
    %1645 = vrot.lane.b32.xlu0 %v87, 18
    %v1646 = vpop.permute.xlu0 %1645
    %1647 = vrot.lane.b32.xlu0 %v88, 18
    %v1648 = vpop.permute.xlu0 %1647
    %1649 = vrot.lane.b32.xlu0 %v89, 18
    %v1650 = vpop.permute.xlu0 %1649
    %1651 = vrot.lane.b32.xlu0 %v90, 18
    %v1652 = vpop.permute.xlu0 %1651
    %1653 = vrot.lane.b32.xlu0 %v91, 18
    %v1654 = vpop.permute.xlu0 %1653
    %1655 = vrot.lane.b32.xlu0 %v92, 18
    %v1656 = vpop.permute.xlu0 %1655
    %1657 = vrot.lane.b32.xlu0 %v93, 18
    %v1658 = vpop.permute.xlu0 %1657
    %1659 = vrot.lane.b32.xlu0 %v94, 18
    %v1660 = vpop.permute.xlu0 %1659
    %1661 = vrot.lane.b32.xlu0 %v95, 18
    %v1662 = vpop.permute.xlu0 %1661
    %1663 = vrot.lane.b32.xlu0 %v96, 18
    %v1664 = vpop.permute.xlu0 %1663
    %vm1725 = vcmask 171152
    %1726 = vst.msk [vmem:[#allocation2 + $0x1] sm:$0xff] %vm1725, %v1546
    %vm1727 = vcmask 170128
    %1728 = vst.msk [vmem:[#allocation2 + $0x9] sm:$0x7f] %vm1727, %v1548
    %1729 = vst.msk [vmem:[#allocation2 + $0x11] sm:$0xff] %vm1725, %v1550
    %1730 = vst.msk [vmem:[#allocation2 + $0x19] sm:$0x7f] %vm1727, %v1552
    %1731 = vst.msk [vmem:[#allocation2 + $0x21] sm:$0xff] %vm1725, %v1554
    %1732 = vst.msk [vmem:[#allocation2 + $0x29] sm:$0x7f] %vm1727, %v1556
    %1733 = vst.msk [vmem:[#allocation2 + $0x31] sm:$0xff] %vm1725, %v1558
    %1734 = vst.msk [vmem:[#allocation2 + $0x39] sm:$0x7f] %vm1727, %v1560
    %1735 = vst.msk [vmem:[#allocation2 + $0x41] sm:$0xff] %vm1725, %v1562
    %1736 = vst.msk [vmem:[#allocation2 + $0x49] sm:$0x7f] %vm1727, %v1564
    %1737 = vst.msk [vmem:[#allocation2 + $0x51] sm:$0xff] %vm1725, %v1566
    %1738 = vst.msk [vmem:[#allocation2 + $0x59] sm:$0x7f] %vm1727, %v1568
    %1739 = vst.msk [vmem:[#allocation2 + $0x61] sm:$0xff] %vm1725, %v1570
    %1740 = vst.msk [vmem:[#allocation2 + $0x69] sm:$0x7f] %vm1727, %v1572
    %1741 = vst.msk [vmem:[#allocation2 + $0x71] sm:$0xff] %vm1725, %v1574
    %1742 = vst.msk [vmem:[#allocation2 + $0x79] sm:$0x7f] %vm1727, %v1576
    %1743 = vst.msk [vmem:[#allocation2 + $0x81] sm:$0xff] %vm1725, %v1578
    %1744 = vst.msk [vmem:[#allocation2 + $0x89] sm:$0x7f] %vm1727, %v1580
    %1745 = vst.msk [vmem:[#allocation2 + $0x91] sm:$0xff] %vm1725, %v1582
    %1746 = vst.msk [vmem:[#allocation2 + $0x99] sm:$0x7f] %vm1727, %v1584
    %1747 = vst.msk [vmem:[#allocation2 + $0xa1] sm:$0xff] %vm1725, %v1586
    %1748 = vst.msk [vmem:[#allocation2 + $0xa9] sm:$0x7f] %vm1727, %v1588
    %1749 = vst.msk [vmem:[#allocation2 + $0xb1] sm:$0xff] %vm1725, %v1590
    %1750 = vst.msk [vmem:[#allocation2 + $0xb9] sm:$0x7f] %vm1727, %v1592
    %1751 = vst.msk [vmem:[#allocation2 + $0xc1] sm:$0xff] %vm1725, %v1594
    %1752 = vst.msk [vmem:[#allocation2 + $0xc9] sm:$0x7f] %vm1727, %v1596
    %1753 = vst.msk [vmem:[#allocation2 + $0xd1] sm:$0xff] %vm1725, %v1598
    %1754 = vst.msk [vmem:[#allocation2 + $0xd9] sm:$0x7f] %vm1727, %v1600
    %1755 = vst.msk [vmem:[#allocation2 + $0xe1] sm:$0xff] %vm1725, %v1602
    %1756 = vst.msk [vmem:[#allocation2 + $0xe9] sm:$0x7f] %vm1727, %v1604
    %1757 = vst.msk [vmem:[#allocation2 + $0x101] sm:$0xff] %vm1725, %v1606
    %1758 = vst.msk [vmem:[#allocation2 + $0x109] sm:$0x7f] %vm1727, %v1608
    %1759 = vst.msk [vmem:[#allocation2 + $0x111] sm:$0xff] %vm1725, %v1610
    %1760 = vst.msk [vmem:[#allocation2 + $0x119] sm:$0x7f] %vm1727, %v1612
    %1761 = vst.msk [vmem:[#allocation2 + $0x121] sm:$0xff] %vm1725, %v1614
    %1762 = vst.msk [vmem:[#allocation2 + $0x129] sm:$0x7f] %vm1727, %v1616
    %1763 = vst.msk [vmem:[#allocation2 + $0x131] sm:$0xff] %vm1725, %v1618
    %1764 = vst.msk [vmem:[#allocation2 + $0x139] sm:$0x7f] %vm1727, %v1620
    %1765 = vst.msk [vmem:[#allocation2 + $0x141] sm:$0xff] %vm1725, %v1622
    %1766 = vst.msk [vmem:[#allocation2 + $0x149] sm:$0x7f] %vm1727, %v1624
    %1767 = vst.msk [vmem:[#allocation2 + $0x151] sm:$0xff] %vm1725, %v1626
    %1768 = vst.msk [vmem:[#allocation2 + $0x159] sm:$0x7f] %vm1727, %v1628
    %1769 = vst.msk [vmem:[#allocation2 + $0x161] sm:$0xff] %vm1725, %v1630
    %1770 = vst.msk [vmem:[#allocation2 + $0x169] sm:$0x7f] %vm1727, %v1632
    %1771 = vst.msk [vmem:[#allocation2 + $0x171] sm:$0xff] %vm1725, %v1634
    %1772 = vst.msk [vmem:[#allocation2 + $0x179] sm:$0x7f] %vm1727, %v1636
    %1773 = vst.msk [vmem:[#allocation2 + $0x181] sm:$0xff] %vm1725, %v1638
    %1774 = vst.msk [vmem:[#allocation2 + $0x189] sm:$0x7f] %vm1727, %v1640
    %1775 = vst.msk [vmem:[#allocation2 + $0x191] sm:$0xff] %vm1725, %v1642
    %1776 = vst.msk [vmem:[#allocation2 + $0x199] sm:$0x7f] %vm1727, %v1644
    %1777 = vst.msk [vmem:[#allocation2 + $0x1a1] sm:$0xff] %vm1725, %v1646
    %1778 = vst.msk [vmem:[#allocation2 + $0x1a9] sm:$0x7f] %vm1727, %v1648
    %1779 = vst.msk [vmem:[#allocation2 + $0x1b1] sm:$0xff] %vm1725, %v1650
    %1780 = vst.msk [vmem:[#allocation2 + $0x1b9] sm:$0x7f] %vm1727, %v1652
    %1781 = vst.msk [vmem:[#allocation2 + $0x1c1] sm:$0xff] %vm1725, %v1654
    %1782 = vst.msk [vmem:[#allocation2 + $0x1c9] sm:$0x7f] %vm1727, %v1656
    %1783 = vst.msk [vmem:[#allocation2 + $0x1d1] sm:$0xff] %vm1725, %v1658
    %1784 = vst.msk [vmem:[#allocation2 + $0x1d9] sm:$0x7f] %vm1727, %v1660
    %1785 = vst.msk [vmem:[#allocation2 + $0x1e1] sm:$0xff] %vm1725, %v1662
    %1786 = vst.msk [vmem:[#allocation2 + $0x1e9] sm:$0x7f] %vm1727, %v1664
    %1787 = vrot.lane.b32.xlu0 %v35, 21
    %v1788 = vpop.permute.xlu0 %1787
    %1789 = vrot.lane.b32.xlu0 %v36, 21
    %v1790 = vpop.permute.xlu0 %1789
    %1791 = vrot.lane.b32.xlu0 %v37, 21
    %v1792 = vpop.permute.xlu0 %1791
    %1793 = vrot.lane.b32.xlu0 %v38, 21
    %v1794 = vpop.permute.xlu0 %1793
    %1795 = vrot.lane.b32.xlu0 %v39, 21
    %v1796 = vpop.permute.xlu0 %1795
    %1797 = vrot.lane.b32.xlu0 %v40, 21
    %v1798 = vpop.permute.xlu0 %1797
    %1799 = vrot.lane.b32.xlu0 %v41, 21
    %v1800 = vpop.permute.xlu0 %1799
    %1801 = vrot.lane.b32.xlu0 %v42, 21
    %v1802 = vpop.permute.xlu0 %1801
    %1803 = vrot.lane.b32.xlu0 %v43, 21
    %v1804 = vpop.permute.xlu0 %1803
    %1805 = vrot.lane.b32.xlu0 %v44, 21
    %v1806 = vpop.permute.xlu0 %1805
    %1807 = vrot.lane.b32.xlu0 %v45, 21
    %v1808 = vpop.permute.xlu0 %1807
    %1809 = vrot.lane.b32.xlu0 %v46, 21
    %v1810 = vpop.permute.xlu0 %1809
    %1811 = vrot.lane.b32.xlu0 %v47, 21
    %v1812 = vpop.permute.xlu0 %1811
    %1813 = vrot.lane.b32.xlu0 %v48, 21
    %v1814 = vpop.permute.xlu0 %1813
    %1815 = vrot.lane.b32.xlu0 %v49, 21
    %v1816 = vpop.permute.xlu0 %1815
    %1817 = vrot.lane.b32.xlu0 %v50, 21
    %v1818 = vpop.permute.xlu0 %1817
    %1819 = vrot.lane.b32.xlu0 %v51, 21
    %v1820 = vpop.permute.xlu0 %1819
    %1821 = vrot.lane.b32.xlu0 %v52, 21
    %v1822 = vpop.permute.xlu0 %1821
    %1823 = vrot.lane.b32.xlu0 %v53, 21
    %v1824 = vpop.permute.xlu0 %1823
    %1825 = vrot.lane.b32.xlu0 %v54, 21
    %v1826 = vpop.permute.xlu0 %1825
    %1827 = vrot.lane.b32.xlu0 %v55, 21
    %v1828 = vpop.permute.xlu0 %1827
    %1829 = vrot.lane.b32.xlu0 %v56, 21
    %v1830 = vpop.permute.xlu0 %1829
    %1831 = vrot.lane.b32.xlu0 %v57, 21
    %v1832 = vpop.permute.xlu0 %1831
    %1833 = vrot.lane.b32.xlu0 %v58, 21
    %v1834 = vpop.permute.xlu0 %1833
    %1835 = vrot.lane.b32.xlu0 %v59, 21
    %v1836 = vpop.permute.xlu0 %1835
    %1837 = vrot.lane.b32.xlu0 %v60, 21
    %v1838 = vpop.permute.xlu0 %1837
    %1839 = vrot.lane.b32.xlu0 %v61, 21
    %v1840 = vpop.permute.xlu0 %1839
    %1841 = vrot.lane.b32.xlu0 %v62, 21
    %v1842 = vpop.permute.xlu0 %1841
    %1843 = vrot.lane.b32.xlu0 %v63, 21
    %v1844 = vpop.permute.xlu0 %1843
    %1845 = vrot.lane.b32.xlu0 %v64, 21
    %v1846 = vpop.permute.xlu0 %1845
    %1847 = vrot.lane.b32.xlu0 %v67, 21
    %v1848 = vpop.permute.xlu0 %1847
    %1849 = vrot.lane.b32.xlu0 %v68, 21
    %v1850 = vpop.permute.xlu0 %1849
    %1851 = vrot.lane.b32.xlu0 %v69, 21
    %v1852 = vpop.permute.xlu0 %1851
    %1853 = vrot.lane.b32.xlu0 %v70, 21
    %v1854 = vpop.permute.xlu0 %1853
    %1855 = vrot.lane.b32.xlu0 %v71, 21
    %v1856 = vpop.permute.xlu0 %1855
    %1857 = vrot.lane.b32.xlu0 %v72, 21
    %v1858 = vpop.permute.xlu0 %1857
    %1859 = vrot.lane.b32.xlu0 %v73, 21
    %v1860 = vpop.permute.xlu0 %1859
    %1861 = vrot.lane.b32.xlu0 %v74, 21
    %v1862 = vpop.permute.xlu0 %1861
    %1863 = vrot.lane.b32.xlu0 %v75, 21
    %v1864 = vpop.permute.xlu0 %1863
    %1865 = vrot.lane.b32.xlu0 %v76, 21
    %v1866 = vpop.permute.xlu0 %1865
    %1867 = vrot.lane.b32.xlu0 %v77, 21
    %v1868 = vpop.permute.xlu0 %1867
    %1869 = vrot.lane.b32.xlu0 %v78, 21
    %v1870 = vpop.permute.xlu0 %1869
    %1871 = vrot.lane.b32.xlu0 %v79, 21
    %v1872 = vpop.permute.xlu0 %1871
    %1873 = vrot.lane.b32.xlu0 %v80, 21
    %v1874 = vpop.permute.xlu0 %1873
    %1875 = vrot.lane.b32.xlu0 %v81, 21
    %v1876 = vpop.permute.xlu0 %1875
    %1877 = vrot.lane.b32.xlu0 %v82, 21
    %v1878 = vpop.permute.xlu0 %1877
    %1879 = vrot.lane.b32.xlu0 %v83, 21
    %v1880 = vpop.permute.xlu0 %1879
    %1881 = vrot.lane.b32.xlu0 %v84, 21
    %v1882 = vpop.permute.xlu0 %1881
    %1883 = vrot.lane.b32.xlu0 %v85, 21
    %v1884 = vpop.permute.xlu0 %1883
    %1885 = vrot.lane.b32.xlu0 %v86, 21
    %v1886 = vpop.permute.xlu0 %1885
    %1887 = vrot.lane.b32.xlu0 %v87, 21
    %v1888 = vpop.permute.xlu0 %1887
    %1889 = vrot.lane.b32.xlu0 %v88, 21
    %v1890 = vpop.permute.xlu0 %1889
    %1891 = vrot.lane.b32.xlu0 %v89, 21
    %v1892 = vpop.permute.xlu0 %1891
    %1893 = vrot.lane.b32.xlu0 %v90, 21
    %v1894 = vpop.permute.xlu0 %1893
    %1895 = vrot.lane.b32.xlu0 %v91, 21
    %v1896 = vpop.permute.xlu0 %1895
    %1897 = vrot.lane.b32.xlu0 %v92, 21
    %v1898 = vpop.permute.xlu0 %1897
    %1899 = vrot.lane.b32.xlu0 %v93, 21
    %v1900 = vpop.permute.xlu0 %1899
    %1901 = vrot.lane.b32.xlu0 %v94, 21
    %v1902 = vpop.permute.xlu0 %1901
    %1903 = vrot.lane.b32.xlu0 %v95, 21
    %v1904 = vpop.permute.xlu0 %1903
    %1905 = vrot.lane.b32.xlu0 %v96, 21
    %v1906 = vpop.permute.xlu0 %1905
    %vm1967 = vcmask 195752
    %1968 = vst.msk [vmem:[#allocation2] sm:$0xff] %vm1967, %v1788
    %1969 = vst.msk [vmem:[#allocation2 + $0x8] sm:$0xff] %vm1967, %v1790
    %1970 = vst.msk [vmem:[#allocation2 + $0x10] sm:$0xff] %vm1967, %v1792
    %1971 = vst.msk [vmem:[#allocation2 + $0x18] sm:$0xff] %vm1967, %v1794
    %1972 = vst.msk [vmem:[#allocation2 + $0x20] sm:$0xff] %vm1967, %v1796
    %1973 = vst.msk [vmem:[#allocation2 + $0x28] sm:$0xff] %vm1967, %v1798
    %1974 = vst.msk [vmem:[#allocation2 + $0x30] sm:$0xff] %vm1967, %v1800
    %1975 = vst.msk [vmem:[#allocation2 + $0x38] sm:$0xff] %vm1967, %v1802
    %1976 = vst.msk [vmem:[#allocation2 + $0x40] sm:$0xff] %vm1967, %v1804
    %1977 = vst.msk [vmem:[#allocation2 + $0x48] sm:$0xff] %vm1967, %v1806
    %1978 = vst.msk [vmem:[#allocation2 + $0x50] sm:$0xff] %vm1967, %v1808
    %1979 = vst.msk [vmem:[#allocation2 + $0x58] sm:$0xff] %vm1967, %v1810
    %1980 = vst.msk [vmem:[#allocation2 + $0x60] sm:$0xff] %vm1967, %v1812
    %1981 = vst.msk [vmem:[#allocation2 + $0x68] sm:$0xff] %vm1967, %v1814
    %1982 = vst.msk [vmem:[#allocation2 + $0x70] sm:$0xff] %vm1967, %v1816
    %1983 = vst.msk [vmem:[#allocation2 + $0x78] sm:$0xff] %vm1967, %v1818
    %1984 = vst.msk [vmem:[#allocation2 + $0x80] sm:$0xff] %vm1967, %v1820
    %1985 = vst.msk [vmem:[#allocation2 + $0x88] sm:$0xff] %vm1967, %v1822
    %1986 = vst.msk [vmem:[#allocation2 + $0x90] sm:$0xff] %vm1967, %v1824
    %1987 = vst.msk [vmem:[#allocation2 + $0x98] sm:$0xff] %vm1967, %v1826
    %1988 = vst.msk [vmem:[#allocation2 + $0xa0] sm:$0xff] %vm1967, %v1828
    %1989 = vst.msk [vmem:[#allocation2 + $0xa8] sm:$0xff] %vm1967, %v1830
    %1990 = vst.msk [vmem:[#allocation2 + $0xb0] sm:$0xff] %vm1967, %v1832
    %1991 = vst.msk [vmem:[#allocation2 + $0xb8] sm:$0xff] %vm1967, %v1834
    %1992 = vst.msk [vmem:[#allocation2 + $0xc0] sm:$0xff] %vm1967, %v1836
    %1993 = vst.msk [vmem:[#allocation2 + $0xc8] sm:$0xff] %vm1967, %v1838
    %1994 = vst.msk [vmem:[#allocation2 + $0xd0] sm:$0xff] %vm1967, %v1840
    %1995 = vst.msk [vmem:[#allocation2 + $0xd8] sm:$0xff] %vm1967, %v1842
    %1996 = vst.msk [vmem:[#allocation2 + $0xe0] sm:$0xff] %vm1967, %v1844
    %1997 = vst.msk [vmem:[#allocation2 + $0xe8] sm:$0xff] %vm1967, %v1846
    %1998 = vst.msk [vmem:[#allocation2 + $0x100] sm:$0xff] %vm1967, %v1848
    %1999 = vst.msk [vmem:[#allocation2 + $0x108] sm:$0xff] %vm1967, %v1850
    %2000 = vst.msk [vmem:[#allocation2 + $0x110] sm:$0xff] %vm1967, %v1852
    %2001 = vst.msk [vmem:[#allocation2 + $0x118] sm:$0xff] %vm1967, %v1854
    %2002 = vst.msk [vmem:[#allocation2 + $0x120] sm:$0xff] %vm1967, %v1856
    %2003 = vst.msk [vmem:[#allocation2 + $0x128] sm:$0xff] %vm1967, %v1858
    %2004 = vst.msk [vmem:[#allocation2 + $0x130] sm:$0xff] %vm1967, %v1860
    %2005 = vst.msk [vmem:[#allocation2 + $0x138] sm:$0xff] %vm1967, %v1862
    %2006 = vst.msk [vmem:[#allocation2 + $0x140] sm:$0xff] %vm1967, %v1864
    %2007 = vst.msk [vmem:[#allocation2 + $0x148] sm:$0xff] %vm1967, %v1866
    %2008 = vst.msk [vmem:[#allocation2 + $0x150] sm:$0xff] %vm1967, %v1868
    %2009 = vst.msk [vmem:[#allocation2 + $0x158] sm:$0xff] %vm1967, %v1870
    %2010 = vst.msk [vmem:[#allocation2 + $0x160] sm:$0xff] %vm1967, %v1872
    %2011 = vst.msk [vmem:[#allocation2 + $0x168] sm:$0xff] %vm1967, %v1874
    %2012 = vst.msk [vmem:[#allocation2 + $0x170] sm:$0xff] %vm1967, %v1876
    %2013 = vst.msk [vmem:[#allocation2 + $0x178] sm:$0xff] %vm1967, %v1878
    %2014 = vst.msk [vmem:[#allocation2 + $0x180] sm:$0xff] %vm1967, %v1880
    %2015 = vst.msk [vmem:[#allocation2 + $0x188] sm:$0xff] %vm1967, %v1882
    %2016 = vst.msk [vmem:[#allocation2 + $0x190] sm:$0xff] %vm1967, %v1884
    %2017 = vst.msk [vmem:[#allocation2 + $0x198] sm:$0xff] %vm1967, %v1886
    %2018 = vst.msk [vmem:[#allocation2 + $0x1a0] sm:$0xff] %vm1967, %v1888
    %2019 = vst.msk [vmem:[#allocation2 + $0x1a8] sm:$0xff] %vm1967, %v1890
    %2020 = vst.msk [vmem:[#allocation2 + $0x1b0] sm:$0xff] %vm1967, %v1892
    %2021 = vst.msk [vmem:[#allocation2 + $0x1b8] sm:$0xff] %vm1967, %v1894
    %2022 = vst.msk [vmem:[#allocation2 + $0x1c0] sm:$0xff] %vm1967, %v1896
    %2023 = vst.msk [vmem:[#allocation2 + $0x1c8] sm:$0xff] %vm1967, %v1898
    %2024 = vst.msk [vmem:[#allocation2 + $0x1d0] sm:$0xff] %vm1967, %v1900
    %2025 = vst.msk [vmem:[#allocation2 + $0x1d8] sm:$0xff] %vm1967, %v1902
    %2026 = vst.msk [vmem:[#allocation2 + $0x1e0] sm:$0xff] %vm1967, %v1904
    %2027 = vst.msk [vmem:[#allocation2 + $0x1e8] sm:$0xff] %vm1967, %v1906
    %2028 = vrot.lane.b32.xlu0 %v35, 24
    %v2029 = vpop.permute.xlu0 %2028
    %2030 = vrot.lane.b32.xlu0 %v36, 24
    %v2031 = vpop.permute.xlu0 %2030
    %2032 = vrot.lane.b32.xlu0 %v37, 24
    %v2033 = vpop.permute.xlu0 %2032
    %2034 = vrot.lane.b32.xlu0 %v38, 24
    %v2035 = vpop.permute.xlu0 %2034
    %2036 = vrot.lane.b32.xlu0 %v39, 24
    %v2037 = vpop.permute.xlu0 %2036
    %2038 = vrot.lane.b32.xlu0 %v40, 24
    %v2039 = vpop.permute.xlu0 %2038
    %2040 = vrot.lane.b32.xlu0 %v41, 24
    %v2041 = vpop.permute.xlu0 %2040
    %2042 = vrot.lane.b32.xlu0 %v42, 24
    %v2043 = vpop.permute.xlu0 %2042
    %2044 = vrot.lane.b32.xlu0 %v43, 24
    %v2045 = vpop.permute.xlu0 %2044
    %2046 = vrot.lane.b32.xlu0 %v44, 24
    %v2047 = vpop.permute.xlu0 %2046
    %2048 = vrot.lane.b32.xlu0 %v45, 24
    %v2049 = vpop.permute.xlu0 %2048
    %2050 = vrot.lane.b32.xlu0 %v46, 24
    %v2051 = vpop.permute.xlu0 %2050
    %2052 = vrot.lane.b32.xlu0 %v47, 24
    %v2053 = vpop.permute.xlu0 %2052
    %2054 = vrot.lane.b32.xlu0 %v48, 24
    %v2055 = vpop.permute.xlu0 %2054
    %2056 = vrot.lane.b32.xlu0 %v49, 24
    %v2057 = vpop.permute.xlu0 %2056
    %2058 = vrot.lane.b32.xlu0 %v50, 24
    %v2059 = vpop.permute.xlu0 %2058
    %2060 = vrot.lane.b32.xlu0 %v51, 24
    %v2061 = vpop.permute.xlu0 %2060
    %2062 = vrot.lane.b32.xlu0 %v52, 24
    %v2063 = vpop.permute.xlu0 %2062
    %2064 = vrot.lane.b32.xlu0 %v53, 24
    %v2065 = vpop.permute.xlu0 %2064
    %2066 = vrot.lane.b32.xlu0 %v54, 24
    %v2067 = vpop.permute.xlu0 %2066
    %2068 = vrot.lane.b32.xlu0 %v55, 24
    %v2069 = vpop.permute.xlu0 %2068
    %2070 = vrot.lane.b32.xlu0 %v56, 24
    %v2071 = vpop.permute.xlu0 %2070
    %2072 = vrot.lane.b32.xlu0 %v57, 24
    %v2073 = vpop.permute.xlu0 %2072
    %2074 = vrot.lane.b32.xlu0 %v58, 24
    %v2075 = vpop.permute.xlu0 %2074
    %2076 = vrot.lane.b32.xlu0 %v59, 24
    %v2077 = vpop.permute.xlu0 %2076
    %2078 = vrot.lane.b32.xlu0 %v60, 24
    %v2079 = vpop.permute.xlu0 %2078
    %2080 = vrot.lane.b32.xlu0 %v61, 24
    %v2081 = vpop.permute.xlu0 %2080
    %2082 = vrot.lane.b32.xlu0 %v62, 24
    %v2083 = vpop.permute.xlu0 %2082
    %2084 = vrot.lane.b32.xlu0 %v63, 24
    %v2085 = vpop.permute.xlu0 %2084
    %2086 = vrot.lane.b32.xlu0 %v64, 24
    %v2087 = vpop.permute.xlu0 %2086
    %2088 = vrot.lane.b32.xlu0 %v67, 24
    %v2089 = vpop.permute.xlu0 %2088
    %2090 = vrot.lane.b32.xlu0 %v68, 24
    %v2091 = vpop.permute.xlu0 %2090
    %2092 = vrot.lane.b32.xlu0 %v69, 24
    %v2093 = vpop.permute.xlu0 %2092
    %2094 = vrot.lane.b32.xlu0 %v70, 24
    %v2095 = vpop.permute.xlu0 %2094
    %2096 = vrot.lane.b32.xlu0 %v71, 24
    %v2097 = vpop.permute.xlu0 %2096
    %2098 = vrot.lane.b32.xlu0 %v72, 24
    %v2099 = vpop.permute.xlu0 %2098
    %2100 = vrot.lane.b32.xlu0 %v73, 24
    %v2101 = vpop.permute.xlu0 %2100
    %2102 = vrot.lane.b32.xlu0 %v74, 24
    %v2103 = vpop.permute.xlu0 %2102
    %2104 = vrot.lane.b32.xlu0 %v75, 24
    %v2105 = vpop.permute.xlu0 %2104
    %2106 = vrot.lane.b32.xlu0 %v76, 24
    %v2107 = vpop.permute.xlu0 %2106
    %2108 = vrot.lane.b32.xlu0 %v77, 24
    %v2109 = vpop.permute.xlu0 %2108
    %2110 = vrot.lane.b32.xlu0 %v78, 24
    %v2111 = vpop.permute.xlu0 %2110
    %2112 = vrot.lane.b32.xlu0 %v79, 24
    %v2113 = vpop.permute.xlu0 %2112
    %2114 = vrot.lane.b32.xlu0 %v80, 24
    %v2115 = vpop.permute.xlu0 %2114
    %2116 = vrot.lane.b32.xlu0 %v81, 24
    %v2117 = vpop.permute.xlu0 %2116
    %2118 = vrot.lane.b32.xlu0 %v82, 24
    %v2119 = vpop.permute.xlu0 %2118
    %2120 = vrot.lane.b32.xlu0 %v83, 24
    %v2121 = vpop.permute.xlu0 %2120
    %2122 = vrot.lane.b32.xlu0 %v84, 24
    %v2123 = vpop.permute.xlu0 %2122
    %2124 = vrot.lane.b32.xlu0 %v85, 24
    %v2125 = vpop.permute.xlu0 %2124
    %2126 = vrot.lane.b32.xlu0 %v86, 24
    %v2127 = vpop.permute.xlu0 %2126
    %2128 = vrot.lane.b32.xlu0 %v87, 24
    %v2129 = vpop.permute.xlu0 %2128
    %2130 = vrot.lane.b32.xlu0 %v88, 24
    %v2131 = vpop.permute.xlu0 %2130
    %2132 = vrot.lane.b32.xlu0 %v89, 24
    %v2133 = vpop.permute.xlu0 %2132
    %2134 = vrot.lane.b32.xlu0 %v90, 24
    %v2135 = vpop.permute.xlu0 %2134
    %2136 = vrot.lane.b32.xlu0 %v91, 24
    %v2137 = vpop.permute.xlu0 %2136
    %2138 = vrot.lane.b32.xlu0 %v92, 24
    %v2139 = vpop.permute.xlu0 %2138
    %2140 = vrot.lane.b32.xlu0 %v93, 24
    %v2141 = vpop.permute.xlu0 %2140
    %2142 = vrot.lane.b32.xlu0 %v94, 24
    %v2143 = vpop.permute.xlu0 %2142
    %2144 = vrot.lane.b32.xlu0 %v95, 24
    %v2145 = vpop.permute.xlu0 %2144
    %2146 = vrot.lane.b32.xlu0 %v96, 24
    %v2147 = vpop.permute.xlu0 %2146
    %vm2208 = vcmask 220353
    %2209 = vst.msk [vmem:[#allocation2 - $0x1] sm:$0xfe] %vm2208, %v2029
    %vm2210 = vcmask 220352
    %2211 = vst.msk [vmem:[#allocation2 + $0x7] sm:$0xff] %vm2210, %v2031
    %2212 = vst.msk [vmem:[#allocation2 + $0xf] sm:$0xfe] %vm2208, %v2033
    %2213 = vst.msk [vmem:[#allocation2 + $0x17] sm:$0xff] %vm2210, %v2035
    %2214 = vst.msk [vmem:[#allocation2 + $0x1f] sm:$0xfe] %vm2208, %v2037
    %2215 = vst.msk [vmem:[#allocation2 + $0x27] sm:$0xff] %vm2210, %v2039
    %2216 = vst.msk [vmem:[#allocation2 + $0x2f] sm:$0xfe] %vm2208, %v2041
    %2217 = vst.msk [vmem:[#allocation2 + $0x37] sm:$0xff] %vm2210, %v2043
    %2218 = vst.msk [vmem:[#allocation2 + $0x3f] sm:$0xfe] %vm2208, %v2045
    %2219 = vst.msk [vmem:[#allocation2 + $0x47] sm:$0xff] %vm2210, %v2047
    %2220 = vst.msk [vmem:[#allocation2 + $0x4f] sm:$0xfe] %vm2208, %v2049
    %2221 = vst.msk [vmem:[#allocation2 + $0x57] sm:$0xff] %vm2210, %v2051
    %2222 = vst.msk [vmem:[#allocation2 + $0x5f] sm:$0xfe] %vm2208, %v2053
    %2223 = vst.msk [vmem:[#allocation2 + $0x67] sm:$0xff] %vm2210, %v2055
    %2224 = vst.msk [vmem:[#allocation2 + $0x6f] sm:$0xfe] %vm2208, %v2057
    %2225 = vst.msk [vmem:[#allocation2 + $0x77] sm:$0xff] %vm2210, %v2059
    %2226 = vst.msk [vmem:[#allocation2 + $0x7f] sm:$0xfe] %vm2208, %v2061
    %2227 = vst.msk [vmem:[#allocation2 + $0x87] sm:$0xff] %vm2210, %v2063
    %2228 = vst.msk [vmem:[#allocation2 + $0x8f] sm:$0xfe] %vm2208, %v2065
    %2229 = vst.msk [vmem:[#allocation2 + $0x97] sm:$0xff] %vm2210, %v2067
    %2230 = vst.msk [vmem:[#allocation2 + $0x9f] sm:$0xfe] %vm2208, %v2069
    %2231 = vst.msk [vmem:[#allocation2 + $0xa7] sm:$0xff] %vm2210, %v2071
    %2232 = vst.msk [vmem:[#allocation2 + $0xaf] sm:$0xfe] %vm2208, %v2073
    %2233 = vst.msk [vmem:[#allocation2 + $0xb7] sm:$0xff] %vm2210, %v2075
    %2234 = vst.msk [vmem:[#allocation2 + $0xbf] sm:$0xfe] %vm2208, %v2077
    %2235 = vst.msk [vmem:[#allocation2 + $0xc7] sm:$0xff] %vm2210, %v2079
    %2236 = vst.msk [vmem:[#allocation2 + $0xcf] sm:$0xfe] %vm2208, %v2081
    %2237 = vst.msk [vmem:[#allocation2 + $0xd7] sm:$0xff] %vm2210, %v2083
    %2238 = vst.msk [vmem:[#allocation2 + $0xdf] sm:$0xfe] %vm2208, %v2085
    %2239 = vst.msk [vmem:[#allocation2 + $0xe7] sm:$0xff] %vm2210, %v2087
    %2240 = vst.msk [vmem:[#allocation2 + $0xff] sm:$0xfe] %vm2208, %v2089
    %2241 = vst.msk [vmem:[#allocation2 + $0x107] sm:$0xff] %vm2210, %v2091
    %2242 = vst.msk [vmem:[#allocation2 + $0x10f] sm:$0xfe] %vm2208, %v2093
    %2243 = vst.msk [vmem:[#allocation2 + $0x117] sm:$0xff] %vm2210, %v2095
    %2244 = vst.msk [vmem:[#allocation2 + $0x11f] sm:$0xfe] %vm2208, %v2097
    %2245 = vst.msk [vmem:[#allocation2 + $0x127] sm:$0xff] %vm2210, %v2099
    %2246 = vst.msk [vmem:[#allocation2 + $0x12f] sm:$0xfe] %vm2208, %v2101
    %2247 = vst.msk [vmem:[#allocation2 + $0x137] sm:$0xff] %vm2210, %v2103
    %2248 = vst.msk [vmem:[#allocation2 + $0x13f] sm:$0xfe] %vm2208, %v2105
    %2249 = vst.msk [vmem:[#allocation2 + $0x147] sm:$0xff] %vm2210, %v2107
    %2250 = vst.msk [vmem:[#allocation2 + $0x14f] sm:$0xfe] %vm2208, %v2109
    %2251 = vst.msk [vmem:[#allocation2 + $0x157] sm:$0xff] %vm2210, %v2111
    %2252 = vst.msk [vmem:[#allocation2 + $0x15f] sm:$0xfe] %vm2208, %v2113
    %2253 = vst.msk [vmem:[#allocation2 + $0x167] sm:$0xff] %vm2210, %v2115
    %2254 = vst.msk [vmem:[#allocation2 + $0x16f] sm:$0xfe] %vm2208, %v2117
    %2255 = vst.msk [vmem:[#allocation2 + $0x177] sm:$0xff] %vm2210, %v2119
    %2256 = vst.msk [vmem:[#allocation2 + $0x17f] sm:$0xfe] %vm2208, %v2121
    %2257 = vst.msk [vmem:[#allocation2 + $0x187] sm:$0xff] %vm2210, %v2123
    %2258 = vst.msk [vmem:[#allocation2 + $0x18f] sm:$0xfe] %vm2208, %v2125
    %2259 = vst.msk [vmem:[#allocation2 + $0x197] sm:$0xff] %vm2210, %v2127
    %2260 = vst.msk [vmem:[#allocation2 + $0x19f] sm:$0xfe] %vm2208, %v2129
    %2261 = vst.msk [vmem:[#allocation2 + $0x1a7] sm:$0xff] %vm2210, %v2131
    %2262 = vst.msk [vmem:[#allocation2 + $0x1af] sm:$0xfe] %vm2208, %v2133
    %2263 = vst.msk [vmem:[#allocation2 + $0x1b7] sm:$0xff] %vm2210, %v2135
    %2264 = vst.msk [vmem:[#allocation2 + $0x1bf] sm:$0xfe] %vm2208, %v2137
    %2265 = vst.msk [vmem:[#allocation2 + $0x1c7] sm:$0xff] %vm2210, %v2139
    %2266 = vst.msk [vmem:[#allocation2 + $0x1cf] sm:$0xfe] %vm2208, %v2141
    %2267 = vst.msk [vmem:[#allocation2 + $0x1d7] sm:$0xff] %vm2210, %v2143
    %2268 = vst.msk [vmem:[#allocation2 + $0x1df] sm:$0xfe] %vm2208, %v2145
    %2269 = vst.msk [vmem:[#allocation2 + $0x1e7] sm:$0xff] %vm2210, %v2147
    %v2270 = vld [vmem:[#allocation2] sm:$0xff]
    %v2271 = vld [vmem:[#allocation2 + $0x8] sm:$0xff]
    %v2272 = vld [vmem:[#allocation2 + $0x10] sm:$0xff]
    %v2273 = vld [vmem:[#allocation2 + $0x18] sm:$0xff]
    %v2274 = vld [vmem:[#allocation2 + $0x20] sm:$0xff]
    %v2275 = vld [vmem:[#allocation2 + $0x28] sm:$0xff]
    %v2276 = vld [vmem:[#allocation2 + $0x30] sm:$0xff]
    %v2277 = vld [vmem:[#allocation2 + $0x38] sm:$0xff]
    %v2278 = vld [vmem:[#allocation2 + $0x40] sm:$0xff]
    %v2279 = vld [vmem:[#allocation2 + $0x48] sm:$0xff]
    %v2280 = vld [vmem:[#allocation2 + $0x50] sm:$0xff]
    %v2281 = vld [vmem:[#allocation2 + $0x58] sm:$0xff]
    %v2282 = vld [vmem:[#allocation2 + $0x60] sm:$0xff]
    %v2283 = vld [vmem:[#allocation2 + $0x68] sm:$0xff]
    %v2284 = vld [vmem:[#allocation2 + $0x70] sm:$0xff]
    %v2285 = vld [vmem:[#allocation2 + $0x78] sm:$0xff]
    %v2286 = vld [vmem:[#allocation2 + $0x80] sm:$0xff]
    %v2287 = vld [vmem:[#allocation2 + $0x88] sm:$0xff]
    %v2288 = vld [vmem:[#allocation2 + $0x90] sm:$0xff]
    %v2289 = vld [vmem:[#allocation2 + $0x98] sm:$0xff]
    %v2290 = vld [vmem:[#allocation2 + $0xa0] sm:$0xff]
    %v2291 = vld [vmem:[#allocation2 + $0xa8] sm:$0xff]
    %v2292 = vld [vmem:[#allocation2 + $0xb0] sm:$0xff]
    %v2293 = vld [vmem:[#allocation2 + $0xb8] sm:$0xff]
    %v2294 = vld [vmem:[#allocation2 + $0xc0] sm:$0xff]
    %v2295 = vld [vmem:[#allocation2 + $0xc8] sm:$0xff]
    %v2296 = vld [vmem:[#allocation2 + $0xd0] sm:$0xff]
    %v2297 = vld [vmem:[#allocation2 + $0xd8] sm:$0xff]
    %v2298 = vld [vmem:[#allocation2 + $0xe0] sm:$0xff]
    %v2299 = vld [vmem:[#allocation2 + $0xe8] sm:$0xff]
    %v2300 = vld [vmem:[#allocation2 + $0xf0] sm:$0xff]
    %v2301 = vld [vmem:[#allocation2 + $0xf8] sm:$0xff]
    %v2302 = vld [vmem:[#allocation2 + $0x100] sm:$0xff]
    %v2303 = vld [vmem:[#allocation2 + $0x108] sm:$0xff]
    %v2304 = vld [vmem:[#allocation2 + $0x110] sm:$0xff]
    %v2305 = vld [vmem:[#allocation2 + $0x118] sm:$0xff]
    %v2306 = vld [vmem:[#allocation2 + $0x120] sm:$0xff]
    %v2307 = vld [vmem:[#allocation2 + $0x128] sm:$0xff]
    %v2308 = vld [vmem:[#allocation2 + $0x130] sm:$0xff]
    %v2309 = vld [vmem:[#allocation2 + $0x138] sm:$0xff]
    %v2310 = vld [vmem:[#allocation2 + $0x140] sm:$0xff]
    %v2311 = vld [vmem:[#allocation2 + $0x148] sm:$0xff]
    %v2312 = vld [vmem:[#allocation2 + $0x150] sm:$0xff]
    %v2313 = vld [vmem:[#allocation2 + $0x158] sm:$0xff]
    %v2314 = vld [vmem:[#allocation2 + $0x160] sm:$0xff]
    %v2315 = vld [vmem:[#allocation2 + $0x168] sm:$0xff]
    %v2316 = vld [vmem:[#allocation2 + $0x170] sm:$0xff]
    %v2317 = vld [vmem:[#allocation2 + $0x178] sm:$0xff]
    %v2318 = vld [vmem:[#allocation2 + $0x180] sm:$0xff]
    %v2319 = vld [vmem:[#allocation2 + $0x188] sm:$0xff]
    %v2320 = vld [vmem:[#allocation2 + $0x190] sm:$0xff]
    %v2321 = vld [vmem:[#allocation2 + $0x198] sm:$0xff]
    %v2322 = vld [vmem:[#allocation2 + $0x1a0] sm:$0xff]
    %v2323 = vld [vmem:[#allocation2 + $0x1a8] sm:$0xff]
    %v2324 = vld [vmem:[#allocation2 + $0x1b0] sm:$0xff]
    %v2325 = vld [vmem:[#allocation2 + $0x1b8] sm:$0xff]
    %v2326 = vld [vmem:[#allocation2 + $0x1c0] sm:$0xff]
    %v2327 = vld [vmem:[#allocation2 + $0x1c8] sm:$0xff]
    %v2328 = vld [vmem:[#allocation2 + $0x1d0] sm:$0xff]
    %v2329 = vld [vmem:[#allocation2 + $0x1d8] sm:$0xff]
    %v2330 = vld [vmem:[#allocation2 + $0x1e0] sm:$0xff]
    %v2331 = vld [vmem:[#allocation2 + $0x1e8] sm:$0xff]
    %v2332 = vld [vmem:[#allocation2 + $0x1f0] sm:$0xff]
    %v2333 = vld [vmem:[#allocation2 + $0x1f8] sm:$0xff]
    %v2334 = vld [vmem:[%s1] sm:$0xff]
    %v2335 = vld [vmem:[%s1 + $0x8] sm:$0xff]
    %v2336 = vld [vmem:[%s1 + $0x10] sm:$0xff]
    %v2337 = vld [vmem:[%s1 + $0x18] sm:$0x7]
    %v2338 = vld [vmem:[%s2] sm:$0x1]
    %v2340 = vlaneseq
    %v2341 = vshrl.u32 %v2340, 7
    %v2342 = vsub.s32 0, %v2341
    %v2343 = vrot.slane %v2338, %v2342
    %v2346 = vsel %vm97, %v2270, 0
    %v2349 = vsel %vm97, %v2271, 0
    %v2352 = vsel %vm97, %v2272, 0
    %v2355 = vsel %vm97, %v2273, 0
    %v2358 = vsel %vm97, %v2274, 0
    %v2361 = vsel %vm97, %v2275, 0
    %v2364 = vsel %vm97, %v2276, 0
    %v2367 = vsel %vm97, %v2277, 0
    %v2370 = vsel %vm97, %v2278, 0
    %v2373 = vsel %vm97, %v2279, 0
    %v2376 = vsel %vm97, %v2280, 0
    %v2379 = vsel %vm97, %v2281, 0
    %v2382 = vsel %vm97, %v2282, 0
    %v2385 = vsel %vm97, %v2283, 0
    %v2388 = vsel %vm97, %v2284, 0
    %v2391 = vsel %vm97, %v2285, 0
    %v2394 = vsel %vm97, %v2286, 0
    %v2397 = vsel %vm97, %v2287, 0
    %v2400 = vsel %vm97, %v2288, 0
    %v2403 = vsel %vm97, %v2289, 0
    %v2406 = vsel %vm97, %v2290, 0
    %v2409 = vsel %vm97, %v2291, 0
    %v2412 = vsel %vm97, %v2292, 0
    %v2415 = vsel %vm97, %v2293, 0
    %v2418 = vsel %vm97, %v2294, 0
    %v2421 = vsel %vm97, %v2295, 0
    %v2424 = vsel %vm97, %v2296, 0
    %v2427 = vsel %vm97, %v2297, 0
    %v2430 = vsel %vm97, %v2298, 0
    %v2433 = vsel %vm97, %v2299, 0
    %v2436 = vsel %vm97, %v2300, 0
    %v2439 = vsel %vm97, %v2301, 0
    %v2442 = vsel %vm97, %v2302, 0
    %v2445 = vsel %vm97, %v2303, 0
    %v2448 = vsel %vm97, %v2304, 0
    %v2451 = vsel %vm97, %v2305, 0
    %v2454 = vsel %vm97, %v2306, 0
    %v2457 = vsel %vm97, %v2307, 0
    %v2460 = vsel %vm97, %v2308, 0
    %v2463 = vsel %vm97, %v2309, 0
    %v2466 = vsel %vm97, %v2310, 0
    %v2469 = vsel %vm97, %v2311, 0
    %v2472 = vsel %vm97, %v2312, 0
    %v2475 = vsel %vm97, %v2313, 0
    %v2478 = vsel %vm97, %v2314, 0
    %v2481 = vsel %vm97, %v2315, 0
    %v2484 = vsel %vm97, %v2316, 0
    %v2487 = vsel %vm97, %v2317, 0
    %v2490 = vsel %vm97, %v2318, 0
    %v2493 = vsel %vm97, %v2319, 0
    %v2496 = vsel %vm97, %v2320, 0
    %v2499 = vsel %vm97, %v2321, 0
    %v2502 = vsel %vm97, %v2322, 0
    %v2505 = vsel %vm97, %v2323, 0
    %v2508 = vsel %vm97, %v2324, 0
    %v2511 = vsel %vm97, %v2325, 0
    %v2514 = vsel %vm97, %v2326, 0
    %v2517 = vsel %vm97, %v2327, 0
    %v2520 = vsel %vm97, %v2328, 0
    %v2523 = vsel %vm97, %v2329, 0
    %v2526 = vsel %vm97, %v2330, 0
    %v2529 = vsel %vm97, %v2331, 0
    %v2532 = vsel %vm97, %v2332, 0
    %v2535 = vsel %vm97, %v2333, 0
    %vm2537 = vcmask 1042432
    %v2539 = vsel %vm2537, %v2337, 0
    %2541 = vmatprep.subr.mxu0 0.0
    %2542 = vmatpush1.msra.mxu0 0.0
    %2543 = vmatprep.subr.mxu0 0.0
    %2544 = vmatpush1.msra.mxu0 0.0
    %2545 = vmatprep.subr.mxu0 0.0
    %2546 = vmatpush1.msra.mxu0 0.0
    %2547 = vmatprep.subr.mxu0 0.0
    %2548 = vmatpush1.msra.mxu0 0.0
    %2549 = vmatprep.subr.mxu0 0.0
    %2550 = vmatpush1.msra.mxu0 0.0
    %2551 = vmatprep.subr.mxu0 0.0
    %2552 = vmatpush1.msra.mxu0 0.0
    %2553 = vmatprep.subr.mxu0 0.0
    %2554 = vmatpush1.msra.mxu0 0.0
    %2555 = vmatprep.subr.mxu0 0.0
    %2556 = vmatpush1.msra.mxu0 0.0
    %2557 = vmatprep.subr.mxu0 0.0
    %2558 = vmatpush1.msra.mxu0 0.0
    %2559 = vmatprep.subr.mxu0 0.0
    %2560 = vmatpush1.msra.mxu0 0.0
    %2561 = vmatprep.subr.mxu0 0.0
    %2562 = vmatpush1.msra.mxu0 0.0
    %2563 = vmatprep.subr.mxu0 0.0
    %2564 = vmatpush1.msra.mxu0 0.0
    %2565 = vmatprep.subr.mxu0 0.0
    %2566 = vmatpush1.msra.mxu0 %v2539
    %2567 = vmatprep.subr.mxu0 0.0
    %2568 = vmatpush1.msra.mxu0 %v2336
    %2569 = vmatprep.subr.mxu0 0.0
    %2570 = vmatpush1.msra.mxu0 %v2335
    %2571 = vmatprep.subr.mxu0 0.0
    %2572 = vmatpush1.msra.mxu0 %v2334
    %2573 = vmatprep.subr.mxu0 0.0
    %2574 = vmatpush2.msra.mxu0 0.0
    %2575 = vmatprep.subr.mxu0 0.0
    %2576 = vmatpush2.msra.mxu0 0.0
    %2577 = vmatprep.subr.mxu0 0.0
    %2578 = vmatpush2.msra.mxu0 0.0
    %2579 = vmatprep.subr.mxu0 0.0
    %2580 = vmatpush2.msra.mxu0 0.0
    %2581 = vmatprep.subr.mxu0 0.0
    %2582 = vmatpush2.msra.mxu0 0.0
    %2583 = vmatprep.subr.mxu0 0.0
    %2584 = vmatpush2.msra.mxu0 0.0
    %2585 = vmatprep.subr.mxu0 0.0
    %2586 = vmatpush2.msra.mxu0 0.0
    %2587 = vmatprep.subr.mxu0 0.0
    %2588 = vmatpush2.msra.mxu0 0.0
    %2589 = vmatprep.subr.mxu0 0.0
    %2590 = vmatpush2.msra.mxu0 0.0
    %2591 = vmatprep.subr.mxu0 0.0
    %2592 = vmatpush2.msra.mxu0 0.0
    %2593 = vmatprep.subr.mxu0 0.0
    %2594 = vmatpush2.msra.mxu0 0.0
    %2595 = vmatprep.subr.mxu0 0.0
    %2596 = vmatpush2.msra.mxu0 0.0
    %2597 = vmatprep.subr.mxu0 0.0
    %2598 = vmatpush2.msra.mxu0 0.0
    %2599 = vmatprep.subr.mxu0 0.0
    %2600 = vmatpush2.msra.mxu0 0.0
    %2601 = vmatprep.subr.mxu0 0.0
    %2602 = vmatpush2.msra.mxu0 0.0
    %2603 = vmatprep.subr.mxu0 0.0
    %2604 = vmatpush2.msra.mxu0 0.0
    %2605 = vmatprep.mubr.f32.mxu0 0.0
    %2606 = vmatmul.mubr.f32.gmra.mxu0 %v2346
    %v2607 = vpop.f32.mrf.mxu0
    %v2608 = vadd.f32 %v2343, %v2607
    %v2609 = vpop.f32.mrf.mxu0
    %2610 = vmatprep.mubr.f32.mxu0 0.0
    %2611 = vmatmul.mubr.f32.gmra.mxu0 %v2349
    %v2612 = vpop.f32.mrf.mxu0
    %v2613 = vadd.f32 %v2343, %v2612
    %v2614 = vpop.f32.mrf.mxu0
    %2615 = vmatprep.mubr.f32.mxu0 0.0
    %2616 = vmatmul.mubr.f32.gmra.mxu0 %v2352
    %v2617 = vpop.f32.mrf.mxu0
    %v2618 = vadd.f32 %v2343, %v2617
    %v2619 = vpop.f32.mrf.mxu0
    %2620 = vmatprep.mubr.f32.mxu0 0.0
    %2621 = vmatmul.mubr.f32.gmra.mxu0 %v2355
    %v2622 = vpop.f32.mrf.mxu0
    %v2623 = vadd.f32 %v2343, %v2622
    %v2624 = vpop.f32.mrf.mxu0
    %2625 = vmatprep.mubr.f32.mxu0 0.0
    %2626 = vmatmul.mubr.f32.gmra.mxu0 %v2358
    %v2627 = vpop.f32.mrf.mxu0
    %v2628 = vadd.f32 %v2343, %v2627
    %v2629 = vpop.f32.mrf.mxu0
    %2630 = vmatprep.mubr.f32.mxu0 0.0
    %2631 = vmatmul.mubr.f32.gmra.mxu0 %v2361
    %v2632 = vpop.f32.mrf.mxu0
    %v2633 = vadd.f32 %v2343, %v2632
    %v2634 = vpop.f32.mrf.mxu0
    %2635 = vmatprep.mubr.f32.mxu0 0.0
    %2636 = vmatmul.mubr.f32.gmra.mxu0 %v2364
    %v2637 = vpop.f32.mrf.mxu0
    %v2638 = vadd.f32 %v2343, %v2637
    %v2639 = vpop.f32.mrf.mxu0
    %2640 = vmatprep.mubr.f32.mxu0 0.0
    %2641 = vmatmul.mubr.f32.gmra.mxu0 %v2367
    %v2642 = vpop.f32.mrf.mxu0
    %v2643 = vadd.f32 %v2343, %v2642
    %v2644 = vpop.f32.mrf.mxu0
    %2645 = vmatprep.mubr.f32.mxu0 0.0
    %2646 = vmatmul.mubr.f32.gmra.mxu0 %v2370
    %v2647 = vpop.f32.mrf.mxu0
    %v2648 = vadd.f32 %v2343, %v2647
    %v2649 = vpop.f32.mrf.mxu0
    %2650 = vmatprep.mubr.f32.mxu0 0.0
    %2651 = vmatmul.mubr.f32.gmra.mxu0 %v2373
    %v2652 = vpop.f32.mrf.mxu0
    %v2653 = vadd.f32 %v2343, %v2652
    %v2654 = vpop.f32.mrf.mxu0
    %2655 = vmatprep.mubr.f32.mxu0 0.0
    %2656 = vmatmul.mubr.f32.gmra.mxu0 %v2376
    %v2657 = vpop.f32.mrf.mxu0
    %v2658 = vadd.f32 %v2343, %v2657
    %v2659 = vpop.f32.mrf.mxu0
    %2660 = vmatprep.mubr.f32.mxu0 0.0
    %2661 = vmatmul.mubr.f32.gmra.mxu0 %v2379
    %v2662 = vpop.f32.mrf.mxu0
    %v2663 = vadd.f32 %v2343, %v2662
    %v2664 = vpop.f32.mrf.mxu0
    %2665 = vmatprep.mubr.f32.mxu0 0.0
    %2666 = vmatmul.mubr.f32.gmra.mxu0 %v2382
    %v2667 = vpop.f32.mrf.mxu0
    %v2668 = vadd.f32 %v2343, %v2667
    %v2669 = vpop.f32.mrf.mxu0
    %2670 = vmatprep.mubr.f32.mxu0 0.0
    %2671 = vmatmul.mubr.f32.gmra.mxu0 %v2385
    %v2672 = vpop.f32.mrf.mxu0
    %v2673 = vadd.f32 %v2343, %v2672
    %v2674 = vpop.f32.mrf.mxu0
    %2675 = vmatprep.mubr.f32.mxu0 0.0
    %2676 = vmatmul.mubr.f32.gmra.mxu0 %v2388
    %v2677 = vpop.f32.mrf.mxu0
    %v2678 = vadd.f32 %v2343, %v2677
    %v2679 = vpop.f32.mrf.mxu0
    %2680 = vmatprep.mubr.f32.mxu0 0.0
    %2681 = vmatmul.mubr.f32.gmra.mxu0 %v2391
    %v2682 = vpop.f32.mrf.mxu0
    %v2683 = vadd.f32 %v2343, %v2682
    %v2684 = vpop.f32.mrf.mxu0
    %2685 = vmatprep.mubr.f32.mxu0 0.0
    %2686 = vmatmul.mubr.f32.gmra.mxu0 %v2394
    %v2687 = vpop.f32.mrf.mxu0
    %v2688 = vadd.f32 %v2343, %v2687
    %v2689 = vpop.f32.mrf.mxu0
    %2690 = vmatprep.mubr.f32.mxu0 0.0
    %2691 = vmatmul.mubr.f32.gmra.mxu0 %v2397
    %v2692 = vpop.f32.mrf.mxu0
    %v2693 = vadd.f32 %v2343, %v2692
    %v2694 = vpop.f32.mrf.mxu0
    %2695 = vmatprep.mubr.f32.mxu0 0.0
    %2696 = vmatmul.mubr.f32.gmra.mxu0 %v2400
    %v2697 = vpop.f32.mrf.mxu0
    %v2698 = vadd.f32 %v2343, %v2697
    %v2699 = vpop.f32.mrf.mxu0
    %2700 = vmatprep.mubr.f32.mxu0 0.0
    %2701 = vmatmul.mubr.f32.gmra.mxu0 %v2403
    %v2702 = vpop.f32.mrf.mxu0
    %v2703 = vadd.f32 %v2343, %v2702
    %v2704 = vpop.f32.mrf.mxu0
    %2705 = vmatprep.mubr.f32.mxu0 0.0
    %2706 = vmatmul.mubr.f32.gmra.mxu0 %v2406
    %v2707 = vpop.f32.mrf.mxu0
    %v2708 = vadd.f32 %v2343, %v2707
    %v2709 = vpop.f32.mrf.mxu0
    %2710 = vmatprep.mubr.f32.mxu0 0.0
    %2711 = vmatmul.mubr.f32.gmra.mxu0 %v2409
    %v2712 = vpop.f32.mrf.mxu0
    %v2713 = vadd.f32 %v2343, %v2712
    %v2714 = vpop.f32.mrf.mxu0
    %2715 = vmatprep.mubr.f32.mxu0 0.0
    %2716 = vmatmul.mubr.f32.gmra.mxu0 %v2412
    %v2717 = vpop.f32.mrf.mxu0
    %v2718 = vadd.f32 %v2343, %v2717
    %v2719 = vpop.f32.mrf.mxu0
    %2720 = vmatprep.mubr.f32.mxu0 0.0
    %2721 = vmatmul.mubr.f32.gmra.mxu0 %v2415
    %v2722 = vpop.f32.mrf.mxu0
    %v2723 = vadd.f32 %v2343, %v2722
    %v2724 = vpop.f32.mrf.mxu0
    %2725 = vmatprep.mubr.f32.mxu0 0.0
    %2726 = vmatmul.mubr.f32.gmra.mxu0 %v2418
    %v2727 = vpop.f32.mrf.mxu0
    %v2728 = vadd.f32 %v2343, %v2727
    %v2729 = vpop.f32.mrf.mxu0
    %2730 = vmatprep.mubr.f32.mxu0 0.0
    %2731 = vmatmul.mubr.f32.gmra.mxu0 %v2421
    %v2732 = vpop.f32.mrf.mxu0
    %v2733 = vadd.f32 %v2343, %v2732
    %v2734 = vpop.f32.mrf.mxu0
    %2735 = vmatprep.mubr.f32.mxu0 0.0
    %2736 = vmatmul.mubr.f32.gmra.mxu0 %v2424
    %v2737 = vpop.f32.mrf.mxu0
    %v2738 = vadd.f32 %v2343, %v2737
    %v2739 = vpop.f32.mrf.mxu0
    %2740 = vmatprep.mubr.f32.mxu0 0.0
    %2741 = vmatmul.mubr.f32.gmra.mxu0 %v2427
    %v2742 = vpop.f32.mrf.mxu0
    %v2743 = vadd.f32 %v2343, %v2742
    %v2744 = vpop.f32.mrf.mxu0
    %2745 = vmatprep.mubr.f32.mxu0 0.0
    %2746 = vmatmul.mubr.f32.gmra.mxu0 %v2430
    %v2747 = vpop.f32.mrf.mxu0
    %v2748 = vadd.f32 %v2343, %v2747
    %v2749 = vpop.f32.mrf.mxu0
    %2750 = vmatprep.mubr.f32.mxu0 0.0
    %2751 = vmatmul.mubr.f32.gmra.mxu0 %v2433
    %v2752 = vpop.f32.mrf.mxu0
    %v2753 = vadd.f32 %v2343, %v2752
    %v2754 = vpop.f32.mrf.mxu0
    %2755 = vmatprep.mubr.f32.mxu0 0.0
    %2756 = vmatmul.mubr.f32.gmra.mxu0 %v2436
    %v2757 = vpop.f32.mrf.mxu0
    %v2758 = vadd.f32 %v2343, %v2757
    %v2759 = vpop.f32.mrf.mxu0
    %2760 = vmatprep.mubr.f32.mxu0 0.0
    %2761 = vmatmul.mubr.f32.gmra.mxu0 %v2439
    %v2762 = vpop.f32.mrf.mxu0
    %v2763 = vadd.f32 %v2343, %v2762
    %v2764 = vpop.f32.mrf.mxu0
    %2765 = vmatprep.mubr.f32.mxu0 0.0
    %2766 = vmatmul.mubr.f32.gmra.mxu0 %v2442
    %v2767 = vpop.f32.mrf.mxu0
    %v2768 = vadd.f32 %v2343, %v2767
    %v2769 = vpop.f32.mrf.mxu0
    %2770 = vmatprep.mubr.f32.mxu0 0.0
    %2771 = vmatmul.mubr.f32.gmra.mxu0 %v2445
    %v2772 = vpop.f32.mrf.mxu0
    %v2773 = vadd.f32 %v2343, %v2772
    %v2774 = vpop.f32.mrf.mxu0
    %2775 = vmatprep.mubr.f32.mxu0 0.0
    %2776 = vmatmul.mubr.f32.gmra.mxu0 %v2448
    %v2777 = vpop.f32.mrf.mxu0
    %v2778 = vadd.f32 %v2343, %v2777
    %v2779 = vpop.f32.mrf.mxu0
    %2780 = vmatprep.mubr.f32.mxu0 0.0
    %2781 = vmatmul.mubr.f32.gmra.mxu0 %v2451
    %v2782 = vpop.f32.mrf.mxu0
    %v2783 = vadd.f32 %v2343, %v2782
    %v2784 = vpop.f32.mrf.mxu0
    %2785 = vmatprep.mubr.f32.mxu0 0.0
    %2786 = vmatmul.mubr.f32.gmra.mxu0 %v2454
    %v2787 = vpop.f32.mrf.mxu0
    %v2788 = vadd.f32 %v2343, %v2787
    %v2789 = vpop.f32.mrf.mxu0
    %2790 = vmatprep.mubr.f32.mxu0 0.0
    %2791 = vmatmul.mubr.f32.gmra.mxu0 %v2457
    %v2792 = vpop.f32.mrf.mxu0
    %v2793 = vadd.f32 %v2343, %v2792
    %v2794 = vpop.f32.mrf.mxu0
    %2795 = vmatprep.mubr.f32.mxu0 0.0
    %2796 = vmatmul.mubr.f32.gmra.mxu0 %v2460
    %v2797 = vpop.f32.mrf.mxu0
    %v2798 = vadd.f32 %v2343, %v2797
    %v2799 = vpop.f32.mrf.mxu0
    %2800 = vmatprep.mubr.f32.mxu0 0.0
    %2801 = vmatmul.mubr.f32.gmra.mxu0 %v2463
    %v2802 = vpop.f32.mrf.mxu0
    %v2803 = vadd.f32 %v2343, %v2802
    %v2804 = vpop.f32.mrf.mxu0
    %2805 = vmatprep.mubr.f32.mxu0 0.0
    %2806 = vmatmul.mubr.f32.gmra.mxu0 %v2466
    %v2807 = vpop.f32.mrf.mxu0
    %v2808 = vadd.f32 %v2343, %v2807
    %v2809 = vpop.f32.mrf.mxu0
    %2810 = vmatprep.mubr.f32.mxu0 0.0
    %2811 = vmatmul.mubr.f32.gmra.mxu0 %v2469
    %v2812 = vpop.f32.mrf.mxu0
    %v2813 = vadd.f32 %v2343, %v2812
    %v2814 = vpop.f32.mrf.mxu0
    %2815 = vmatprep.mubr.f32.mxu0 0.0
    %2816 = vmatmul.mubr.f32.gmra.mxu0 %v2472
    %v2817 = vpop.f32.mrf.mxu0
    %v2818 = vadd.f32 %v2343, %v2817
    %v2819 = vpop.f32.mrf.mxu0
    %2820 = vmatprep.mubr.f32.mxu0 0.0
    %2821 = vmatmul.mubr.f32.gmra.mxu0 %v2475
    %v2822 = vpop.f32.mrf.mxu0
    %v2823 = vadd.f32 %v2343, %v2822
    %v2824 = vpop.f32.mrf.mxu0
    %2825 = vmatprep.mubr.f32.mxu0 0.0
    %2826 = vmatmul.mubr.f32.gmra.mxu0 %v2478
    %v2827 = vpop.f32.mrf.mxu0
    %v2828 = vadd.f32 %v2343, %v2827
    %v2829 = vpop.f32.mrf.mxu0
    %2830 = vmatprep.mubr.f32.mxu0 0.0
    %2831 = vmatmul.mubr.f32.gmra.mxu0 %v2481
    %v2832 = vpop.f32.mrf.mxu0
    %v2833 = vadd.f32 %v2343, %v2832
    %v2834 = vpop.f32.mrf.mxu0
    %2835 = vmatprep.mubr.f32.mxu0 0.0
    %2836 = vmatmul.mubr.f32.gmra.mxu0 %v2484
    %v2837 = vpop.f32.mrf.mxu0
    %v2838 = vadd.f32 %v2343, %v2837
    %v2839 = vpop.f32.mrf.mxu0
    %2840 = vmatprep.mubr.f32.mxu0 0.0
    %2841 = vmatmul.mubr.f32.gmra.mxu0 %v2487
    %v2842 = vpop.f32.mrf.mxu0
    %v2843 = vadd.f32 %v2343, %v2842
    %v2844 = vpop.f32.mrf.mxu0
    %2845 = vmatprep.mubr.f32.mxu0 0.0
    %2846 = vmatmul.mubr.f32.gmra.mxu0 %v2490
    %v2847 = vpop.f32.mrf.mxu0
    %v2848 = vadd.f32 %v2343, %v2847
    %v2849 = vpop.f32.mrf.mxu0
    %2850 = vmatprep.mubr.f32.mxu0 0.0
    %2851 = vmatmul.mubr.f32.gmra.mxu0 %v2493
    %v2852 = vpop.f32.mrf.mxu0
    %v2853 = vadd.f32 %v2343, %v2852
    %v2854 = vpop.f32.mrf.mxu0
    %2855 = vmatprep.mubr.f32.mxu0 0.0
    %2856 = vmatmul.mubr.f32.gmra.mxu0 %v2496
    %v2857 = vpop.f32.mrf.mxu0
    %v2858 = vadd.f32 %v2343, %v2857
    %v2859 = vpop.f32.mrf.mxu0
    %2860 = vmatprep.mubr.f32.mxu0 0.0
    %2861 = vmatmul.mubr.f32.gmra.mxu0 %v2499
    %v2862 = vpop.f32.mrf.mxu0
    %v2863 = vadd.f32 %v2343, %v2862
    %v2864 = vpop.f32.mrf.mxu0
    %2865 = vmatprep.mubr.f32.mxu0 0.0
    %2866 = vmatmul.mubr.f32.gmra.mxu0 %v2502
    %v2867 = vpop.f32.mrf.mxu0
    %v2868 = vadd.f32 %v2343, %v2867
    %v2869 = vpop.f32.mrf.mxu0
    %2870 = vmatprep.mubr.f32.mxu0 0.0
    %2871 = vmatmul.mubr.f32.gmra.mxu0 %v2505
    %v2872 = vpop.f32.mrf.mxu0
    %v2873 = vadd.f32 %v2343, %v2872
    %v2874 = vpop.f32.mrf.mxu0
    %2875 = vmatprep.mubr.f32.mxu0 0.0
    %2876 = vmatmul.mubr.f32.gmra.mxu0 %v2508
    %v2877 = vpop.f32.mrf.mxu0
    %v2878 = vadd.f32 %v2343, %v2877
    %v2879 = vpop.f32.mrf.mxu0
    %2880 = vmatprep.mubr.f32.mxu0 0.0
    %2881 = vmatmul.mubr.f32.gmra.mxu0 %v2511
    %v2882 = vpop.f32.mrf.mxu0
    %v2883 = vadd.f32 %v2343, %v2882
    %v2884 = vpop.f32.mrf.mxu0
    %2885 = vmatprep.mubr.f32.mxu0 0.0
    %2886 = vmatmul.mubr.f32.gmra.mxu0 %v2514
    %v2887 = vpop.f32.mrf.mxu0
    %v2888 = vadd.f32 %v2343, %v2887
    %v2889 = vpop.f32.mrf.mxu0
    %2890 = vmatprep.mubr.f32.mxu0 0.0
    %2891 = vmatmul.mubr.f32.gmra.mxu0 %v2517
    %v2892 = vpop.f32.mrf.mxu0
    %v2893 = vadd.f32 %v2343, %v2892
    %v2894 = vpop.f32.mrf.mxu0
    %2895 = vmatprep.mubr.f32.mxu0 0.0
    %2896 = vmatmul.mubr.f32.gmra.mxu0 %v2520
    %v2897 = vpop.f32.mrf.mxu0
    %v2898 = vadd.f32 %v2343, %v2897
    %v2899 = vpop.f32.mrf.mxu0
    %2900 = vmatprep.mubr.f32.mxu0 0.0
    %2901 = vmatmul.mubr.f32.gmra.mxu0 %v2523
    %v2902 = vpop.f32.mrf.mxu0
    %v2903 = vadd.f32 %v2343, %v2902
    %v2904 = vpop.f32.mrf.mxu0
    %2905 = vmatprep.mubr.f32.mxu0 0.0
    %2906 = vmatmul.mubr.f32.gmra.mxu0 %v2526
    %v2907 = vpop.f32.mrf.mxu0
    %v2908 = vadd.f32 %v2343, %v2907
    %v2909 = vpop.f32.mrf.mxu0
    %2910 = vmatprep.mubr.f32.mxu0 0.0
    %2911 = vmatmul.mubr.f32.gmra.mxu0 %v2529
    %v2912 = vpop.f32.mrf.mxu0
    %v2913 = vadd.f32 %v2343, %v2912
    %v2914 = vpop.f32.mrf.mxu0
    %2915 = vmatprep.mubr.f32.mxu0 0.0
    %2916 = vmatmul.mubr.f32.gmra.mxu0 %v2532
    %v2917 = vpop.f32.mrf.mxu0
    %v2918 = vadd.f32 %v2343, %v2917
    %v2919 = vpop.f32.mrf.mxu0
    %2920 = vmatprep.mubr.f32.mxu0 0.0
    %2921 = vmatmul.mubr.f32.gmra.mxu0 %v2535
    %v2922 = vpop.f32.mrf.mxu0
    %v2923 = vadd.f32 %v2343, %v2922
    %v2924 = vpop.f32.mrf.mxu0
    %2925 = vdwg.mxu0
    %v2926 = vmax.f32 %v2608, 0.0
    %v2927 = vmax.f32 %v2613, 0.0
    %v2928 = vmax.f32 %v2618, 0.0
    %v2929 = vmax.f32 %v2623, 0.0
    %v2930 = vmax.f32 %v2628, 0.0
    %v2931 = vmax.f32 %v2633, 0.0
    %v2932 = vmax.f32 %v2638, 0.0
    %v2933 = vmax.f32 %v2643, 0.0
    %v2934 = vmax.f32 %v2648, 0.0
    %v2935 = vmax.f32 %v2653, 0.0
    %v2936 = vmax.f32 %v2658, 0.0
    %v2937 = vmax.f32 %v2663, 0.0
    %v2938 = vmax.f32 %v2668, 0.0
    %v2939 = vmax.f32 %v2673, 0.0
    %v2940 = vmax.f32 %v2678, 0.0
    %v2941 = vmax.f32 %v2683, 0.0
    %v2942 = vmax.f32 %v2688, 0.0
    %v2943 = vmax.f32 %v2693, 0.0
    %v2944 = vmax.f32 %v2698, 0.0
    %v2945 = vmax.f32 %v2703, 0.0
    %v2946 = vmax.f32 %v2708, 0.0
    %v2947 = vmax.f32 %v2713, 0.0
    %v2948 = vmax.f32 %v2718, 0.0
    %v2949 = vmax.f32 %v2723, 0.0
    %v2950 = vmax.f32 %v2728, 0.0
    %v2951 = vmax.f32 %v2733, 0.0
    %v2952 = vmax.f32 %v2738, 0.0
    %v2953 = vmax.f32 %v2743, 0.0
    %v2954 = vmax.f32 %v2748, 0.0
    %v2955 = vmax.f32 %v2753, 0.0
    %v2956 = vmax.f32 %v2758, 0.0
    %v2957 = vmax.f32 %v2763, 0.0
    %v2958 = vmax.f32 %v2768, 0.0
    %v2959 = vmax.f32 %v2773, 0.0
    %v2960 = vmax.f32 %v2778, 0.0
    %v2961 = vmax.f32 %v2783, 0.0
    %v2962 = vmax.f32 %v2788, 0.0
    %v2963 = vmax.f32 %v2793, 0.0
    %v2964 = vmax.f32 %v2798, 0.0
    %v2965 = vmax.f32 %v2803, 0.0
    %v2966 = vmax.f32 %v2808, 0.0
    %v2967 = vmax.f32 %v2813, 0.0
    %v2968 = vmax.f32 %v2818, 0.0
    %v2969 = vmax.f32 %v2823, 0.0
    %v2970 = vmax.f32 %v2828, 0.0
    %v2971 = vmax.f32 %v2833, 0.0
    %v2972 = vmax.f32 %v2838, 0.0
    %v2973 = vmax.f32 %v2843, 0.0
    %v2974 = vmax.f32 %v2848, 0.0
    %v2975 = vmax.f32 %v2853, 0.0
    %v2976 = vmax.f32 %v2858, 0.0
    %v2977 = vmax.f32 %v2863, 0.0
    %v2978 = vmax.f32 %v2868, 0.0
    %v2979 = vmax.f32 %v2873, 0.0
    %v2980 = vmax.f32 %v2878, 0.0
    %v2981 = vmax.f32 %v2883, 0.0
    %v2982 = vmax.f32 %v2888, 0.0
    %v2983 = vmax.f32 %v2893, 0.0
    %v2984 = vmax.f32 %v2898, 0.0
    %v2985 = vmax.f32 %v2903, 0.0
    %v2986 = vmax.f32 %v2908, 0.0
    %v2987 = vmax.f32 %v2913, 0.0
    %v2988 = vmax.f32 %v2918, 0.0
    %v2989 = vmax.f32 %v2923, 0.0
    %v2990 = vmax.f32 %v2926, %v2928
    %v2991 = vmax.f32 %v2927, %v2929
    %v2992 = vmax.f32 %v2930, %v2932
    %v2993 = vmax.f32 %v2931, %v2933
    %v2994 = vmax.f32 %v2934, %v2936
    %v2995 = vmax.f32 %v2935, %v2937
    %v2996 = vmax.f32 %v2938, %v2940
    %v2997 = vmax.f32 %v2939, %v2941
    %v2998 = vmax.f32 %v2942, %v2944
    %v2999 = vmax.f32 %v2943, %v2945
    %v3000 = vmax.f32 %v2946, %v2948
    %v3001 = vmax.f32 %v2947, %v2949
    %v3002 = vmax.f32 %v2950, %v2952
    %v3003 = vmax.f32 %v2951, %v2953
    %v3004 = vmax.f32 %v2954, %v2956
    %v3005 = vmax.f32 %v2955, %v2957
    %v3006 = vmax.f32 %v2958, %v2960
    %v3007 = vmax.f32 %v2959, %v2961
    %v3008 = vmax.f32 %v2962, %v2964
    %v3009 = vmax.f32 %v2963, %v2965
    %v3010 = vmax.f32 %v2966, %v2968
    %v3011 = vmax.f32 %v2967, %v2969
    %v3012 = vmax.f32 %v2970, %v2972
    %v3013 = vmax.f32 %v2971, %v2973
    %v3014 = vmax.f32 %v2974, %v2976
    %v3015 = vmax.f32 %v2975, %v2977
    %v3016 = vmax.f32 %v2978, %v2980
    %v3017 = vmax.f32 %v2979, %v2981
    %v3018 = vmax.f32 %v2982, %v2984
    %v3019 = vmax.f32 %v2983, %v2985
    %v3020 = vmax.f32 %v2986, %v2988
    %v3021 = vmax.f32 %v2987, %v2989
    %vm3022 = vcmask 64512
    %3023 = vst.msk [vmem:[#allocation3] sm:$0xff] %vm3022, %v2990
    %3024 = vst.msk [vmem:[#allocation3 + $0x8] sm:$0xff] %vm3022, %v2991
    %3025 = vst.msk [vmem:[#allocation3 + $0x10] sm:$0xff] %vm3022, %v2992
    %3026 = vst.msk [vmem:[#allocation3 + $0x18] sm:$0xff] %vm3022, %v2993
    %3027 = vst.msk [vmem:[#allocation3 + $0x20] sm:$0xff] %vm3022, %v2994
    %3028 = vst.msk [vmem:[#allocation3 + $0x28] sm:$0xff] %vm3022, %v2995
    %3029 = vst.msk [vmem:[#allocation3 + $0x30] sm:$0xff] %vm3022, %v2996
    %3030 = vst.msk [vmem:[#allocation3 + $0x38] sm:$0xff] %vm3022, %v2997
    %3031 = vst.msk [vmem:[#allocation3 + $0x40] sm:$0xff] %vm3022, %v2998
    %3032 = vst.msk [vmem:[#allocation3 + $0x48] sm:$0xff] %vm3022, %v2999
    %3033 = vst.msk [vmem:[#allocation3 + $0x50] sm:$0xff] %vm3022, %v3000
    %3034 = vst.msk [vmem:[#allocation3 + $0x58] sm:$0xff] %vm3022, %v3001
    %3035 = vst.msk [vmem:[#allocation3 + $0x60] sm:$0xff] %vm3022, %v3002
    %3036 = vst.msk [vmem:[#allocation3 + $0x68] sm:$0xff] %vm3022, %v3003
    %3037 = vst.msk [vmem:[#allocation3 + $0x70] sm:$0xff] %vm3022, %v3004
    %3038 = vst.msk [vmem:[#allocation3 + $0x78] sm:$0xff] %vm3022, %v3005
    %3039 = vst.msk [vmem:[#allocation3 + $0x80] sm:$0xff] %vm3022, %v3006
    %3040 = vst.msk [vmem:[#allocation3 + $0x88] sm:$0xff] %vm3022, %v3007
    %3041 = vst.msk [vmem:[#allocation3 + $0x90] sm:$0xff] %vm3022, %v3008
    %3042 = vst.msk [vmem:[#allocation3 + $0x98] sm:$0xff] %vm3022, %v3009
    %3043 = vst.msk [vmem:[#allocation3 + $0xa0] sm:$0xff] %vm3022, %v3010
    %3044 = vst.msk [vmem:[#allocation3 + $0xa8] sm:$0xff] %vm3022, %v3011
    %3045 = vst.msk [vmem:[#allocation3 + $0xb0] sm:$0xff] %vm3022, %v3012
    %3046 = vst.msk [vmem:[#allocation3 + $0xb8] sm:$0xff] %vm3022, %v3013
    %3047 = vst.msk [vmem:[#allocation3 + $0xc0] sm:$0xff] %vm3022, %v3014
    %3048 = vst.msk [vmem:[#allocation3 + $0xc8] sm:$0xff] %vm3022, %v3015
    %3049 = vst.msk [vmem:[#allocation3 + $0xd0] sm:$0xff] %vm3022, %v3016
    %3050 = vst.msk [vmem:[#allocation3 + $0xd8] sm:$0xff] %vm3022, %v3017
    %3051 = vst.msk [vmem:[#allocation3 + $0xe0] sm:$0xff] %vm3022, %v3018
    %3052 = vst.msk [vmem:[#allocation3 + $0xe8] sm:$0xff] %vm3022, %v3019
    %3053 = vst.msk [vmem:[#allocation3 + $0xf0] sm:$0xff] %vm3022, %v3020
    %3054 = vst.msk [vmem:[#allocation3 + $0xf8] sm:$0xff] %vm3022, %v3021
    %v3055 = vld [vmem:[#allocation3] ss:$2 sm:$0xff]
    %s3056 = scalar_lea.vmem [#allocation3], 16
    %v3057 = vld [vmem:[%s3056] ss:$2 sm:$0xff]
    %s3058 = scalar_lea.vmem [#allocation3], 32
    %v3059 = vld [vmem:[%s3058] ss:$2 sm:$0xff]
    %s3060 = scalar_lea.vmem [#allocation3], 48
    %v3061 = vld [vmem:[%s3060] ss:$2 sm:$0xff]
    %s3062 = scalar_lea.vmem [#allocation3], 64
    %v3063 = vld [vmem:[%s3062] ss:$2 sm:$0xff]
    %s3064 = scalar_lea.vmem [#allocation3], 80
    %v3065 = vld [vmem:[%s3064] ss:$2 sm:$0xff]
    %s3066 = scalar_lea.vmem [#allocation3], 96
    %v3067 = vld [vmem:[%s3066] ss:$2 sm:$0xff]
    %s3068 = scalar_lea.vmem [#allocation3], 112
    %v3069 = vld [vmem:[%s3068] ss:$2 sm:$0xff]
    %s3070 = scalar_lea.vmem [#allocation3], 128
    %v3071 = vld [vmem:[%s3070] ss:$2 sm:$0xff]
    %s3072 = scalar_lea.vmem [#allocation3], 144
    %v3073 = vld [vmem:[%s3072] ss:$2 sm:$0xff]
    %s3074 = scalar_lea.vmem [#allocation3], 160
    %v3075 = vld [vmem:[%s3074] ss:$2 sm:$0xff]
    %s3076 = scalar_lea.vmem [#allocation3], 176
    %v3077 = vld [vmem:[%s3076] ss:$2 sm:$0xff]
    %s3078 = scalar_lea.vmem [#allocation3], 192
    %v3079 = vld [vmem:[%s3078] ss:$2 sm:$0xff]
    %s3080 = scalar_lea.vmem [#allocation3], 208
    %v3081 = vld [vmem:[%s3080] ss:$2 sm:$0xff]
    %s3082 = scalar_lea.vmem [#allocation3], 224
    %v3083 = vld [vmem:[%s3082] ss:$2 sm:$0xff]
    %s3084 = scalar_lea.vmem [#allocation3], 240
    %v3085 = vld [vmem:[%s3084] ss:$2 sm:$0xff]
    %s3086 = scalar_lea.vmem [#allocation3], 1
    %v3087 = vld [vmem:[%s3086] ss:$2 sm:$0xff]
    %s3088 = scalar_lea.vmem [#allocation3], 17
    %v3089 = vld [vmem:[%s3088] ss:$2 sm:$0xff]
    %s3090 = scalar_lea.vmem [#allocation3], 33
    %v3091 = vld [vmem:[%s3090] ss:$2 sm:$0xff]
    %s3092 = scalar_lea.vmem [#allocation3], 49
    %v3093 = vld [vmem:[%s3092] ss:$2 sm:$0xff]
    %s3094 = scalar_lea.vmem [#allocation3], 65
    %v3095 = vld [vmem:[%s3094] ss:$2 sm:$0xff]
    %s3096 = scalar_lea.vmem [#allocation3], 81
    %v3097 = vld [vmem:[%s3096] ss:$2 sm:$0xff]
    %s3098 = scalar_lea.vmem [#allocation3], 97
    %v3099 = vld [vmem:[%s3098] ss:$2 sm:$0xff]
    %s3100 = scalar_lea.vmem [#allocation3], 113
    %v3101 = vld [vmem:[%s3100] ss:$2 sm:$0xff]
    %s3102 = scalar_lea.vmem [#allocation3], 129
    %v3103 = vld [vmem:[%s3102] ss:$2 sm:$0xff]
    %s3104 = scalar_lea.vmem [#allocation3], 145
    %v3105 = vld [vmem:[%s3104] ss:$2 sm:$0xff]
    %s3106 = scalar_lea.vmem [#allocation3], 161
    %v3107 = vld [vmem:[%s3106] ss:$2 sm:$0xff]
    %s3108 = scalar_lea.vmem [#allocation3], 177
    %v3109 = vld [vmem:[%s3108] ss:$2 sm:$0xff]
    %s3110 = scalar_lea.vmem [#allocation3], 193
    %v3111 = vld [vmem:[%s3110] ss:$2 sm:$0xff]
    %s3112 = scalar_lea.vmem [#allocation3], 209
    %v3113 = vld [vmem:[%s3112] ss:$2 sm:$0xff]
    %s3114 = scalar_lea.vmem [#allocation3], 225
    %v3115 = vld [vmem:[%s3114] ss:$2 sm:$0xff]
    %s3116 = scalar_lea.vmem [#allocation3], 241
    %v3117 = vld [vmem:[%s3116] ss:$2 sm:$0xff]
    %v3118 = vmax.f32 %v3055, %v3087
    %v3119 = vmax.f32 %v3057, %v3089
    %v3120 = vmax.f32 %v3059, %v3091
    %v3121 = vmax.f32 %v3061, %v3093
    %v3122 = vmax.f32 %v3063, %v3095
    %v3123 = vmax.f32 %v3065, %v3097
    %v3124 = vmax.f32 %v3067, %v3099
    %v3125 = vmax.f32 %v3069, %v3101
    %v3126 = vmax.f32 %v3071, %v3103
    %v3127 = vmax.f32 %v3073, %v3105
    %v3128 = vmax.f32 %v3075, %v3107
    %v3129 = vmax.f32 %v3077, %v3109
    %v3130 = vmax.f32 %v3079, %v3111
    %v3131 = vmax.f32 %v3081, %v3113
    %v3132 = vmax.f32 %v3083, %v3115
    %v3133 = vmax.f32 %v3085, %v3117
    %vm3134 = vcmask 588800
    %3135 = vst.msk [vmem:[#allocation4] sm:$0xff] %vm3134, 0.0
    %3136 = vst.msk [vmem:[#allocation4 + $0x8] sm:$0xff] %vm3134, 0.0
    %3137 = vst.msk [vmem:[#allocation4 + $0x10] sm:$0xff] %vm3134, 0.0
    %3138 = vst.msk [vmem:[#allocation4 + $0x18] sm:$0xff] %vm3134, 0.0
    %3139 = vst.msk [vmem:[#allocation4 + $0x20] sm:$0xff] %vm3134, 0.0
    %3140 = vst.msk [vmem:[#allocation4 + $0x28] sm:$0xff] %vm3134, 0.0
    %3141 = vst.msk [vmem:[#allocation4 + $0x30] sm:$0xff] %vm3134, 0.0
    %3142 = vst.msk [vmem:[#allocation4 + $0x38] sm:$0xff] %vm3134, 0.0
    %3143 = vst.msk [vmem:[#allocation4 + $0x40] sm:$0xff] %vm3134, 0.0
    %3144 = vst.msk [vmem:[#allocation4 + $0x48] sm:$0xff] %vm3134, 0.0
    %3145 = vst.msk [vmem:[#allocation4 + $0x50] sm:$0xff] %vm3134, 0.0
    %3146 = vst.msk [vmem:[#allocation4 + $0x58] sm:$0xff] %vm3134, 0.0
    %3147 = vst.msk [vmem:[#allocation4 + $0x60] sm:$0xff] %vm3134, 0.0
    %3148 = vst.msk [vmem:[#allocation4 + $0x68] sm:$0xff] %vm3134, 0.0
    %3149 = vst.msk [vmem:[#allocation4 + $0x70] sm:$0xff] %vm3134, 0.0
    %3150 = vst.msk [vmem:[#allocation4 + $0x78] sm:$0xff] %vm3134, 0.0
    %s3151 = scalar_lea.vmem [#allocation4], 8
    %vm3152 = vcmask 63488
    %3153 = vst.msk [vmem:[%s3151 + $0x1] sm:$0x7f] %vm3152, %v3118
    %3154 = vst.msk [vmem:[%s3151 + $0x9] sm:$0x7f] %vm3152, %v3119
    %3155 = vst.msk [vmem:[%s3151 + $0x11] sm:$0x7f] %vm3152, %v3120
    %3156 = vst.msk [vmem:[%s3151 + $0x19] sm:$0x7f] %vm3152, %v3121
    %3157 = vst.msk [vmem:[%s3151 + $0x21] sm:$0x7f] %vm3152, %v3122
    %3158 = vst.msk [vmem:[%s3151 + $0x29] sm:$0x7f] %vm3152, %v3123
    %3159 = vst.msk [vmem:[%s3151 + $0x31] sm:$0x7f] %vm3152, %v3124
    %3160 = vst.msk [vmem:[%s3151 + $0x41] sm:$0x7f] %vm3152, %v3126
    %3161 = vst.msk [vmem:[%s3151 + $0x49] sm:$0x7f] %vm3152, %v3127
    %3162 = vst.msk [vmem:[%s3151 + $0x51] sm:$0x7f] %vm3152, %v3128
    %3163 = vst.msk [vmem:[%s3151 + $0x59] sm:$0x7f] %vm3152, %v3129
    %3164 = vst.msk [vmem:[%s3151 + $0x61] sm:$0x7f] %vm3152, %v3130
    %3165 = vst.msk [vmem:[%s3151 + $0x69] sm:$0x7f] %vm3152, %v3131
    %3166 = vst.msk [vmem:[%s3151 + $0x71] sm:$0x7f] %vm3152, %v3132
    %3181 = vrot.lane.b32.xlu0 %v3118, 8
    %v3182 = vpop.permute.xlu0 %3181
    %3183 = vrot.lane.b32.xlu0 %v3119, 8
    %v3184 = vpop.permute.xlu0 %3183
    %3185 = vrot.lane.b32.xlu0 %v3120, 8
    %v3186 = vpop.permute.xlu0 %3185
    %3187 = vrot.lane.b32.xlu0 %v3121, 8
    %v3188 = vpop.permute.xlu0 %3187
    %3189 = vrot.lane.b32.xlu0 %v3122, 8
    %v3190 = vpop.permute.xlu0 %3189
    %3191 = vrot.lane.b32.xlu0 %v3123, 8
    %v3192 = vpop.permute.xlu0 %3191
    %3193 = vrot.lane.b32.xlu0 %v3124, 8
    %v3194 = vpop.permute.xlu0 %3193
    %3195 = vrot.lane.b32.xlu0 %v3126, 8
    %v3196 = vpop.permute.xlu0 %3195
    %3197 = vrot.lane.b32.xlu0 %v3127, 8
    %v3198 = vpop.permute.xlu0 %3197
    %3199 = vrot.lane.b32.xlu0 %v3128, 8
    %v3200 = vpop.permute.xlu0 %3199
    %3201 = vrot.lane.b32.xlu0 %v3129, 8
    %v3202 = vpop.permute.xlu0 %3201
    %3203 = vrot.lane.b32.xlu0 %v3130, 8
    %v3204 = vpop.permute.xlu0 %3203
    %3205 = vrot.lane.b32.xlu0 %v3131, 8
    %v3206 = vpop.permute.xlu0 %3205
    %3207 = vrot.lane.b32.xlu0 %v3132, 8
    %v3208 = vpop.permute.xlu0 %3207
    %vm3223 = vcmask 130112
    %3224 = vst.msk [vmem:[%s3151] sm:$0xff] %vm3223, %v3182
    %3225 = vst.msk [vmem:[%s3151 + $0x8] sm:$0xff] %vm3223, %v3184
    %3226 = vst.msk [vmem:[%s3151 + $0x10] sm:$0xff] %vm3223, %v3186
    %3227 = vst.msk [vmem:[%s3151 + $0x18] sm:$0xff] %vm3223, %v3188
    %3228 = vst.msk [vmem:[%s3151 + $0x20] sm:$0xff] %vm3223, %v3190
    %3229 = vst.msk [vmem:[%s3151 + $0x28] sm:$0xff] %vm3223, %v3192
    %3230 = vst.msk [vmem:[%s3151 + $0x30] sm:$0xff] %vm3223, %v3194
    %3231 = vst.msk [vmem:[%s3151 + $0x40] sm:$0xff] %vm3223, %v3196
    %3232 = vst.msk [vmem:[%s3151 + $0x48] sm:$0xff] %vm3223, %v3198
    %3233 = vst.msk [vmem:[%s3151 + $0x50] sm:$0xff] %vm3223, %v3200
    %3234 = vst.msk [vmem:[%s3151 + $0x58] sm:$0xff] %vm3223, %v3202
    %3235 = vst.msk [vmem:[%s3151 + $0x60] sm:$0xff] %vm3223, %v3204
    %3236 = vst.msk [vmem:[%s3151 + $0x68] sm:$0xff] %vm3223, %v3206
    %3237 = vst.msk [vmem:[%s3151 + $0x70] sm:$0xff] %vm3223, %v3208
    %3238 = vrot.lane.b32.xlu0 %v3118, 16
    %v3239 = vpop.permute.xlu0 %3238
    %3240 = vrot.lane.b32.xlu0 %v3119, 16
    %v3241 = vpop.permute.xlu0 %3240
    %3242 = vrot.lane.b32.xlu0 %v3120, 16
    %v3243 = vpop.permute.xlu0 %3242
    %3244 = vrot.lane.b32.xlu0 %v3121, 16
    %v3245 = vpop.permute.xlu0 %3244
    %3246 = vrot.lane.b32.xlu0 %v3122, 16
    %v3247 = vpop.permute.xlu0 %3246
    %3248 = vrot.lane.b32.xlu0 %v3123, 16
    %v3249 = vpop.permute.xlu0 %3248
    %3250 = vrot.lane.b32.xlu0 %v3124, 16
    %v3251 = vpop.permute.xlu0 %3250
    %3252 = vrot.lane.b32.xlu0 %v3126, 16
    %v3253 = vpop.permute.xlu0 %3252
    %3254 = vrot.lane.b32.xlu0 %v3127, 16
    %v3255 = vpop.permute.xlu0 %3254
    %3256 = vrot.lane.b32.xlu0 %v3128, 16
    %v3257 = vpop.permute.xlu0 %3256
    %3258 = vrot.lane.b32.xlu0 %v3129, 16
    %v3259 = vpop.permute.xlu0 %3258
    %3260 = vrot.lane.b32.xlu0 %v3130, 16
    %v3261 = vpop.permute.xlu0 %3260
    %3262 = vrot.lane.b32.xlu0 %v3131, 16
    %v3263 = vpop.permute.xlu0 %3262
    %3264 = vrot.lane.b32.xlu0 %v3132, 16
    %v3265 = vpop.permute.xlu0 %3264
    %vm3280 = vcmask 195713
    %3281 = vst.msk [vmem:[%s3151 - $0x1] sm:$0xfe] %vm3280, %v3239
    %3282 = vst.msk [vmem:[%s3151 + $0x7] sm:$0xfe] %vm3280, %v3241
    %3283 = vst.msk [vmem:[%s3151 + $0xf] sm:$0xfe] %vm3280, %v3243
    %3284 = vst.msk [vmem:[%s3151 + $0x17] sm:$0xfe] %vm3280, %v3245
    %3285 = vst.msk [vmem:[%s3151 + $0x1f] sm:$0xfe] %vm3280, %v3247
    %3286 = vst.msk [vmem:[%s3151 + $0x27] sm:$0xfe] %vm3280, %v3249
    %3287 = vst.msk [vmem:[%s3151 + $0x2f] sm:$0xfe] %vm3280, %v3251
    %3288 = vst.msk [vmem:[%s3151 + $0x3f] sm:$0xfe] %vm3280, %v3253
    %3289 = vst.msk [vmem:[%s3151 + $0x47] sm:$0xfe] %vm3280, %v3255
    %3290 = vst.msk [vmem:[%s3151 + $0x4f] sm:$0xfe] %vm3280, %v3257
    %3291 = vst.msk [vmem:[%s3151 + $0x57] sm:$0xfe] %vm3280, %v3259
    %3292 = vst.msk [vmem:[%s3151 + $0x5f] sm:$0xfe] %vm3280, %v3261
    %3293 = vst.msk [vmem:[%s3151 + $0x67] sm:$0xfe] %vm3280, %v3263
    %3294 = vst.msk [vmem:[%s3151 + $0x6f] sm:$0xfe] %vm3280, %v3265
    %3297 = vrot.lane.b32.xlu0 %v3118, 24
    %v3298 = vpop.permute.xlu0 %3297
    %3299 = vrot.lane.b32.xlu0 %v3119, 24
    %v3300 = vpop.permute.xlu0 %3299
    %3301 = vrot.lane.b32.xlu0 %v3120, 24
    %v3302 = vpop.permute.xlu0 %3301
    %3303 = vrot.lane.b32.xlu0 %v3121, 24
    %v3304 = vpop.permute.xlu0 %3303
    %3305 = vrot.lane.b32.xlu0 %v3122, 24
    %v3306 = vpop.permute.xlu0 %3305
    %3307 = vrot.lane.b32.xlu0 %v3123, 24
    %v3308 = vpop.permute.xlu0 %3307
    %3309 = vrot.lane.b32.xlu0 %v3124, 24
    %v3310 = vpop.permute.xlu0 %3309
    %3311 = vrot.lane.b32.xlu0 %v3125, 24
    %v3312 = vpop.permute.xlu0 %3311
    %3313 = vrot.lane.b32.xlu0 %v3126, 24
    %v3314 = vpop.permute.xlu0 %3313
    %3315 = vrot.lane.b32.xlu0 %v3127, 24
    %v3316 = vpop.permute.xlu0 %3315
    %3317 = vrot.lane.b32.xlu0 %v3128, 24
    %v3318 = vpop.permute.xlu0 %3317
    %3319 = vrot.lane.b32.xlu0 %v3129, 24
    %v3320 = vpop.permute.xlu0 %3319
    %3321 = vrot.lane.b32.xlu0 %v3130, 24
    %v3322 = vpop.permute.xlu0 %3321
    %3323 = vrot.lane.b32.xlu0 %v3131, 24
    %v3324 = vpop.permute.xlu0 %3323
    %3325 = vrot.lane.b32.xlu0 %v3132, 24
    %v3326 = vpop.permute.xlu0 %3325
    %3327 = vrot.lane.b32.xlu0 %v3133, 24
    %v3328 = vpop.permute.xlu0 %3327
    %vm3345 = vcmask 260288
    %3346 = vst.msk [vmem:[#allocation4 + $0x1] sm:$0x7f] %vm3345, %v3298
    %3347 = vst.msk [vmem:[#allocation4 + $0x9] sm:$0x7f] %vm3345, %v3300
    %3348 = vst.msk [vmem:[#allocation4 + $0x11] sm:$0x7f] %vm3345, %v3302
    %3349 = vst.msk [vmem:[#allocation4 + $0x19] sm:$0x7f] %vm3345, %v3304
    %3350 = vst.msk [vmem:[#allocation4 + $0x21] sm:$0x7f] %vm3345, %v3306
    %3351 = vst.msk [vmem:[#allocation4 + $0x29] sm:$0x7f] %vm3345, %v3308
    %3352 = vst.msk [vmem:[#allocation4 + $0x31] sm:$0x7f] %vm3345, %v3310
    %3353 = vst.msk [vmem:[#allocation4 + $0x39] sm:$0x7f] %vm3345, %v3312
    %3354 = vst.msk [vmem:[#allocation4 + $0x41] sm:$0x7f] %vm3345, %v3314
    %3355 = vst.msk [vmem:[#allocation4 + $0x49] sm:$0x7f] %vm3345, %v3316
    %3356 = vst.msk [vmem:[#allocation4 + $0x51] sm:$0x7f] %vm3345, %v3318
    %3357 = vst.msk [vmem:[#allocation4 + $0x59] sm:$0x7f] %vm3345, %v3320
    %3358 = vst.msk [vmem:[#allocation4 + $0x61] sm:$0x7f] %vm3345, %v3322
    %3359 = vst.msk [vmem:[#allocation4 + $0x69] sm:$0x7f] %vm3345, %v3324
    %3360 = vst.msk [vmem:[#allocation4 + $0x71] sm:$0x7f] %vm3345, %v3326
    %3361 = vst.msk [vmem:[#allocation4 + $0x79] sm:$0x7f] %vm3345, %v3328
    %3362 = vrot.lane.b32.xlu0 %v3118, 32
    %v3363 = vpop.permute.xlu0 %3362
    %3364 = vrot.lane.b32.xlu0 %v3119, 32
    %v3365 = vpop.permute.xlu0 %3364
    %3366 = vrot.lane.b32.xlu0 %v3120, 32
    %v3367 = vpop.permute.xlu0 %3366
    %3368 = vrot.lane.b32.xlu0 %v3121, 32
    %v3369 = vpop.permute.xlu0 %3368
    %3370 = vrot.lane.b32.xlu0 %v3122, 32
    %v3371 = vpop.permute.xlu0 %3370
    %3372 = vrot.lane.b32.xlu0 %v3123, 32
    %v3373 = vpop.permute.xlu0 %3372
    %3374 = vrot.lane.b32.xlu0 %v3124, 32
    %v3375 = vpop.permute.xlu0 %3374
    %3376 = vrot.lane.b32.xlu0 %v3125, 32
    %v3377 = vpop.permute.xlu0 %3376
    %3378 = vrot.lane.b32.xlu0 %v3126, 32
    %v3379 = vpop.permute.xlu0 %3378
    %3380 = vrot.lane.b32.xlu0 %v3127, 32
    %v3381 = vpop.permute.xlu0 %3380
    %3382 = vrot.lane.b32.xlu0 %v3128, 32
    %v3383 = vpop.permute.xlu0 %3382
    %3384 = vrot.lane.b32.xlu0 %v3129, 32
    %v3385 = vpop.permute.xlu0 %3384
    %3386 = vrot.lane.b32.xlu0 %v3130, 32
    %v3387 = vpop.permute.xlu0 %3386
    %3388 = vrot.lane.b32.xlu0 %v3131, 32
    %v3389 = vpop.permute.xlu0 %3388
    %3390 = vrot.lane.b32.xlu0 %v3132, 32
    %v3391 = vpop.permute.xlu0 %3390
    %3392 = vrot.lane.b32.xlu0 %v3133, 32
    %v3393 = vpop.permute.xlu0 %3392
    %vm3410 = vcmask 326912
    %3411 = vst.msk [vmem:[#allocation4] sm:$0xff] %vm3410, %v3363
    %3412 = vst.msk [vmem:[#allocation4 + $0x8] sm:$0xff] %vm3410, %v3365
    %3413 = vst.msk [vmem:[#allocation4 + $0x10] sm:$0xff] %vm3410, %v3367
    %3414 = vst.msk [vmem:[#allocation4 + $0x18] sm:$0xff] %vm3410, %v3369
    %3415 = vst.msk [vmem:[#allocation4 + $0x20] sm:$0xff] %vm3410, %v3371
    %3416 = vst.msk [vmem:[#allocation4 + $0x28] sm:$0xff] %vm3410, %v3373
    %3417 = vst.msk [vmem:[#allocation4 + $0x30] sm:$0xff] %vm3410, %v3375
    %3418 = vst.msk [vmem:[#allocation4 + $0x38] sm:$0xff] %vm3410, %v3377
    %3419 = vst.msk [vmem:[#allocation4 + $0x40] sm:$0xff] %vm3410, %v3379
    %3420 = vst.msk [vmem:[#allocation4 + $0x48] sm:$0xff] %vm3410, %v3381
    %3421 = vst.msk [vmem:[#allocation4 + $0x50] sm:$0xff] %vm3410, %v3383
    %3422 = vst.msk [vmem:[#allocation4 + $0x58] sm:$0xff] %vm3410, %v3385
    %3423 = vst.msk [vmem:[#allocation4 + $0x60] sm:$0xff] %vm3410, %v3387
    %3424 = vst.msk [vmem:[#allocation4 + $0x68] sm:$0xff] %vm3410, %v3389
    %3425 = vst.msk [vmem:[#allocation4 + $0x70] sm:$0xff] %vm3410, %v3391
    %3426 = vst.msk [vmem:[#allocation4 + $0x78] sm:$0xff] %vm3410, %v3393
    %3427 = vrot.lane.b32.xlu0 %v3118, 40
    %v3428 = vpop.permute.xlu0 %3427
    %3429 = vrot.lane.b32.xlu0 %v3119, 40
    %v3430 = vpop.permute.xlu0 %3429
    %3431 = vrot.lane.b32.xlu0 %v3120, 40
    %v3432 = vpop.permute.xlu0 %3431
    %3433 = vrot.lane.b32.xlu0 %v3121, 40
    %v3434 = vpop.permute.xlu0 %3433
    %3435 = vrot.lane.b32.xlu0 %v3122, 40
    %v3436 = vpop.permute.xlu0 %3435
    %3437 = vrot.lane.b32.xlu0 %v3123, 40
    %v3438 = vpop.permute.xlu0 %3437
    %3439 = vrot.lane.b32.xlu0 %v3124, 40
    %v3440 = vpop.permute.xlu0 %3439
    %3441 = vrot.lane.b32.xlu0 %v3125, 40
    %v3442 = vpop.permute.xlu0 %3441
    %3443 = vrot.lane.b32.xlu0 %v3126, 40
    %v3444 = vpop.permute.xlu0 %3443
    %3445 = vrot.lane.b32.xlu0 %v3127, 40
    %v3446 = vpop.permute.xlu0 %3445
    %3447 = vrot.lane.b32.xlu0 %v3128, 40
    %v3448 = vpop.permute.xlu0 %3447
    %3449 = vrot.lane.b32.xlu0 %v3129, 40
    %v3450 = vpop.permute.xlu0 %3449
    %3451 = vrot.lane.b32.xlu0 %v3130, 40
    %v3452 = vpop.permute.xlu0 %3451
    %3453 = vrot.lane.b32.xlu0 %v3131, 40
    %v3454 = vpop.permute.xlu0 %3453
    %3455 = vrot.lane.b32.xlu0 %v3132, 40
    %v3456 = vpop.permute.xlu0 %3455
    %3457 = vrot.lane.b32.xlu0 %v3133, 40
    %v3458 = vpop.permute.xlu0 %3457
    %vm3475 = vcmask 392513
    %3476 = vst.msk [vmem:[#allocation4 - $0x1] sm:$0xfe] %vm3475, %v3428
    %3477 = vst.msk [vmem:[#allocation4 + $0x7] sm:$0xfe] %vm3475, %v3430
    %3478 = vst.msk [vmem:[#allocation4 + $0xf] sm:$0xfe] %vm3475, %v3432
    %3479 = vst.msk [vmem:[#allocation4 + $0x17] sm:$0xfe] %vm3475, %v3434
    %3480 = vst.msk [vmem:[#allocation4 + $0x1f] sm:$0xfe] %vm3475, %v3436
    %3481 = vst.msk [vmem:[#allocation4 + $0x27] sm:$0xfe] %vm3475, %v3438
    %3482 = vst.msk [vmem:[#allocation4 + $0x2f] sm:$0xfe] %vm3475, %v3440
    %3483 = vst.msk [vmem:[#allocation4 + $0x37] sm:$0xfe] %vm3475, %v3442
    %3484 = vst.msk [vmem:[#allocation4 + $0x3f] sm:$0xfe] %vm3475, %v3444
    %3485 = vst.msk [vmem:[#allocation4 + $0x47] sm:$0xfe] %vm3475, %v3446
    %3486 = vst.msk [vmem:[#allocation4 + $0x4f] sm:$0xfe] %vm3475, %v3448
    %3487 = vst.msk [vmem:[#allocation4 + $0x57] sm:$0xfe] %vm3475, %v3450
    %3488 = vst.msk [vmem:[#allocation4 + $0x5f] sm:$0xfe] %vm3475, %v3452
    %3489 = vst.msk [vmem:[#allocation4 + $0x67] sm:$0xfe] %vm3475, %v3454
    %3490 = vst.msk [vmem:[#allocation4 + $0x6f] sm:$0xfe] %vm3475, %v3456
    %3491 = vst.msk [vmem:[#allocation4 + $0x77] sm:$0xfe] %vm3475, %v3458
    %3492 = vrot.lane.b32.xlu0 %v3119, 48
    %v3493 = vpop.permute.xlu0 %3492
    %3494 = vrot.lane.b32.xlu0 %v3120, 48
    %v3495 = vpop.permute.xlu0 %3494
    %3496 = vrot.lane.b32.xlu0 %v3121, 48
    %v3497 = vpop.permute.xlu0 %3496
    %3498 = vrot.lane.b32.xlu0 %v3122, 48
    %v3499 = vpop.permute.xlu0 %3498
    %3500 = vrot.lane.b32.xlu0 %v3123, 48
    %v3501 = vpop.permute.xlu0 %3500
    %3502 = vrot.lane.b32.xlu0 %v3124, 48
    %v3503 = vpop.permute.xlu0 %3502
    %3504 = vrot.lane.b32.xlu0 %v3125, 48
    %v3505 = vpop.permute.xlu0 %3504
    %3506 = vrot.lane.b32.xlu0 %v3127, 48
    %v3507 = vpop.permute.xlu0 %3506
    %3508 = vrot.lane.b32.xlu0 %v3128, 48
    %v3509 = vpop.permute.xlu0 %3508
    %3510 = vrot.lane.b32.xlu0 %v3129, 48
    %v3511 = vpop.permute.xlu0 %3510
    %3512 = vrot.lane.b32.xlu0 %v3130, 48
    %v3513 = vpop.permute.xlu0 %3512
    %3514 = vrot.lane.b32.xlu0 %v3131, 48
    %v3515 = vpop.permute.xlu0 %3514
    %3516 = vrot.lane.b32.xlu0 %v3132, 48
    %v3517 = vpop.permute.xlu0 %3516
    %3518 = vrot.lane.b32.xlu0 %v3133, 48
    %v3519 = vpop.permute.xlu0 %3518
    %vm3534 = vcmask 457088
    %3535 = vst.msk [vmem:[#allocation4 + $0x1] sm:$0x7f] %vm3534, %v3493
    %3536 = vst.msk [vmem:[#allocation4 + $0x9] sm:$0x7f] %vm3534, %v3495
    %3537 = vst.msk [vmem:[#allocation4 + $0x11] sm:$0x7f] %vm3534, %v3497
    %3538 = vst.msk [vmem:[#allocation4 + $0x19] sm:$0x7f] %vm3534, %v3499
    %3539 = vst.msk [vmem:[#allocation4 + $0x21] sm:$0x7f] %vm3534, %v3501
    %3540 = vst.msk [vmem:[#allocation4 + $0x29] sm:$0x7f] %vm3534, %v3503
    %3541 = vst.msk [vmem:[#allocation4 + $0x31] sm:$0x7f] %vm3534, %v3505
    %3542 = vst.msk [vmem:[#allocation4 + $0x41] sm:$0x7f] %vm3534, %v3507
    %3543 = vst.msk [vmem:[#allocation4 + $0x49] sm:$0x7f] %vm3534, %v3509
    %3544 = vst.msk [vmem:[#allocation4 + $0x51] sm:$0x7f] %vm3534, %v3511
    %3545 = vst.msk [vmem:[#allocation4 + $0x59] sm:$0x7f] %vm3534, %v3513
    %3546 = vst.msk [vmem:[#allocation4 + $0x61] sm:$0x7f] %vm3534, %v3515
    %3547 = vst.msk [vmem:[#allocation4 + $0x69] sm:$0x7f] %vm3534, %v3517
    %3548 = vst.msk [vmem:[#allocation4 + $0x71] sm:$0x7f] %vm3534, %v3519
    %3549 = vrot.lane.b32.xlu0 %v3119, 56
    %v3550 = vpop.permute.xlu0 %3549
    %3551 = vrot.lane.b32.xlu0 %v3120, 56
    %v3552 = vpop.permute.xlu0 %3551
    %3553 = vrot.lane.b32.xlu0 %v3121, 56
    %v3554 = vpop.permute.xlu0 %3553
    %3555 = vrot.lane.b32.xlu0 %v3122, 56
    %v3556 = vpop.permute.xlu0 %3555
    %3557 = vrot.lane.b32.xlu0 %v3123, 56
    %v3558 = vpop.permute.xlu0 %3557
    %3559 = vrot.lane.b32.xlu0 %v3124, 56
    %v3560 = vpop.permute.xlu0 %3559
    %3561 = vrot.lane.b32.xlu0 %v3125, 56
    %v3562 = vpop.permute.xlu0 %3561
    %3563 = vrot.lane.b32.xlu0 %v3127, 56
    %v3564 = vpop.permute.xlu0 %3563
    %3565 = vrot.lane.b32.xlu0 %v3128, 56
    %v3566 = vpop.permute.xlu0 %3565
    %3567 = vrot.lane.b32.xlu0 %v3129, 56
    %v3568 = vpop.permute.xlu0 %3567
    %3569 = vrot.lane.b32.xlu0 %v3130, 56
    %v3570 = vpop.permute.xlu0 %3569
    %3571 = vrot.lane.b32.xlu0 %v3131, 56
    %v3572 = vpop.permute.xlu0 %3571
    %3573 = vrot.lane.b32.xlu0 %v3132, 56
    %v3574 = vpop.permute.xlu0 %3573
    %3575 = vrot.lane.b32.xlu0 %v3133, 56
    %v3576 = vpop.permute.xlu0 %3575
    %vm3591 = vcmask 523712
    %3592 = vst.msk [vmem:[#allocation4] sm:$0xff] %vm3591, %v3550
    %3593 = vst.msk [vmem:[#allocation4 + $0x8] sm:$0xff] %vm3591, %v3552
    %3594 = vst.msk [vmem:[#allocation4 + $0x10] sm:$0xff] %vm3591, %v3554
    %3595 = vst.msk [vmem:[#allocation4 + $0x18] sm:$0xff] %vm3591, %v3556
    %3596 = vst.msk [vmem:[#allocation4 + $0x20] sm:$0xff] %vm3591, %v3558
    %3597 = vst.msk [vmem:[#allocation4 + $0x28] sm:$0xff] %vm3591, %v3560
    %3598 = vst.msk [vmem:[#allocation4 + $0x30] sm:$0xff] %vm3591, %v3562
    %3599 = vst.msk [vmem:[#allocation4 + $0x40] sm:$0xff] %vm3591, %v3564
    %3600 = vst.msk [vmem:[#allocation4 + $0x48] sm:$0xff] %vm3591, %v3566
    %3601 = vst.msk [vmem:[#allocation4 + $0x50] sm:$0xff] %vm3591, %v3568
    %3602 = vst.msk [vmem:[#allocation4 + $0x58] sm:$0xff] %vm3591, %v3570
    %3603 = vst.msk [vmem:[#allocation4 + $0x60] sm:$0xff] %vm3591, %v3572
    %3604 = vst.msk [vmem:[#allocation4 + $0x68] sm:$0xff] %vm3591, %v3574
    %3605 = vst.msk [vmem:[#allocation4 + $0x70] sm:$0xff] %vm3591, %v3576
    %3606 = vrot.lane.b32.xlu0 %v3119, 64
    %v3607 = vpop.permute.xlu0 %3606
    %3608 = vrot.lane.b32.xlu0 %v3120, 64
    %v3609 = vpop.permute.xlu0 %3608
    %3610 = vrot.lane.b32.xlu0 %v3121, 64
    %v3611 = vpop.permute.xlu0 %3610
    %3612 = vrot.lane.b32.xlu0 %v3122, 64
    %v3613 = vpop.permute.xlu0 %3612
    %3614 = vrot.lane.b32.xlu0 %v3123, 64
    %v3615 = vpop.permute.xlu0 %3614
    %3616 = vrot.lane.b32.xlu0 %v3124, 64
    %v3617 = vpop.permute.xlu0 %3616
    %3618 = vrot.lane.b32.xlu0 %v3125, 64
    %v3619 = vpop.permute.xlu0 %3618
    %3620 = vrot.lane.b32.xlu0 %v3127, 64
    %v3621 = vpop.permute.xlu0 %3620
    %3622 = vrot.lane.b32.xlu0 %v3128, 64
    %v3623 = vpop.permute.xlu0 %3622
    %3624 = vrot.lane.b32.xlu0 %v3129, 64
    %v3625 = vpop.permute.xlu0 %3624
    %3626 = vrot.lane.b32.xlu0 %v3130, 64
    %v3627 = vpop.permute.xlu0 %3626
    %3628 = vrot.lane.b32.xlu0 %v3131, 64
    %v3629 = vpop.permute.xlu0 %3628
    %3630 = vrot.lane.b32.xlu0 %v3132, 64
    %v3631 = vpop.permute.xlu0 %3630
    %3632 = vrot.lane.b32.xlu0 %v3133, 64
    %v3633 = vpop.permute.xlu0 %3632
    %vm3648 = vcmask 589313
    %3649 = vst.msk [vmem:[#allocation4 - $0x1] sm:$0xfe] %vm3648, %v3607
    %3650 = vst.msk [vmem:[#allocation4 + $0x7] sm:$0xfe] %vm3648, %v3609
    %3651 = vst.msk [vmem:[#allocation4 + $0xf] sm:$0xfe] %vm3648, %v3611
    %3652 = vst.msk [vmem:[#allocation4 + $0x17] sm:$0xfe] %vm3648, %v3613
    %3653 = vst.msk [vmem:[#allocation4 + $0x1f] sm:$0xfe] %vm3648, %v3615
    %3654 = vst.msk [vmem:[#allocation4 + $0x27] sm:$0xfe] %vm3648, %v3617
    %3655 = vst.msk [vmem:[#allocation4 + $0x2f] sm:$0xfe] %vm3648, %v3619
    %3656 = vst.msk [vmem:[#allocation4 + $0x3f] sm:$0xfe] %vm3648, %v3621
    %3657 = vst.msk [vmem:[#allocation4 + $0x47] sm:$0xfe] %vm3648, %v3623
    %3658 = vst.msk [vmem:[#allocation4 + $0x4f] sm:$0xfe] %vm3648, %v3625
    %3659 = vst.msk [vmem:[#allocation4 + $0x57] sm:$0xfe] %vm3648, %v3627
    %3660 = vst.msk [vmem:[#allocation4 + $0x5f] sm:$0xfe] %vm3648, %v3629
    %3661 = vst.msk [vmem:[#allocation4 + $0x67] sm:$0xfe] %vm3648, %v3631
    %3662 = vst.msk [vmem:[#allocation4 + $0x6f] sm:$0xfe] %vm3648, %v3633
    %v3663 = vld [vmem:[#allocation4] sm:$0xff]
    %v3664 = vld [vmem:[#allocation4 + $0x8] sm:$0xff]
    %v3665 = vld [vmem:[#allocation4 + $0x10] sm:$0xff]
    %v3666 = vld [vmem:[#allocation4 + $0x18] sm:$0xff]
    %v3667 = vld [vmem:[#allocation4 + $0x20] sm:$0xff]
    %v3668 = vld [vmem:[#allocation4 + $0x28] sm:$0xff]
    %v3669 = vld [vmem:[#allocation4 + $0x30] sm:$0xff]
    %v3670 = vld [vmem:[#allocation4 + $0x38] sm:$0xff]
    %v3671 = vld [vmem:[#allocation4 + $0x40] sm:$0xff]
    %v3672 = vld [vmem:[#allocation4 + $0x48] sm:$0xff]
    %v3673 = vld [vmem:[#allocation4 + $0x50] sm:$0xff]
    %v3674 = vld [vmem:[#allocation4 + $0x58] sm:$0xff]
    %v3675 = vld [vmem:[#allocation4 + $0x60] sm:$0xff]
    %v3676 = vld [vmem:[#allocation4 + $0x68] sm:$0xff]
    %v3677 = vld [vmem:[#allocation4 + $0x70] sm:$0xff]
    %v3678 = vld [vmem:[#allocation4 + $0x78] sm:$0xff]
    %v3679 = vld [vmem:[%s3] sm:$0xff]
    %v3680 = vld [vmem:[%s3 + $0x8] sm:$0xff]
    %v3681 = vld [vmem:[%s3 + $0x10] sm:$0xff]
    %v3682 = vld [vmem:[%s3 + $0x18] sm:$0xff]
    %v3683 = vld [vmem:[%s3 + $0x20] sm:$0xff]
    %v3684 = vld [vmem:[%s3 + $0x28] sm:$0xff]
    %v3685 = vld [vmem:[%s3 + $0x30] sm:$0xff]
    %v3686 = vld [vmem:[%s3 + $0x38] sm:$0xff]
    %v3687 = vld [vmem:[%s3 + $0x40] sm:$0xff]
    %v3688 = vld [vmem:[%s4] sm:$0x1]
    %v3690 = vlaneseq
    %v3691 = vshrl.u32 %v3690, 7
    %v3692 = vsub.s32 0, %v3691
    %v3693 = vrot.slane %v3688, %v3692
    %v3696 = vsel %vm3134, %v3663, 0
    %v3699 = vsel %vm3134, %v3664, 0
    %v3702 = vsel %vm3134, %v3665, 0
    %v3705 = vsel %vm3134, %v3666, 0
    %v3708 = vsel %vm3134, %v3667, 0
    %v3711 = vsel %vm3134, %v3668, 0
    %v3714 = vsel %vm3134, %v3669, 0
    %v3717 = vsel %vm3134, %v3670, 0
    %v3720 = vsel %vm3134, %v3671, 0
    %v3723 = vsel %vm3134, %v3672, 0
    %v3726 = vsel %vm3134, %v3673, 0
    %v3729 = vsel %vm3134, %v3674, 0
    %v3732 = vsel %vm3134, %v3675, 0
    %v3735 = vsel %vm3134, %v3676, 0
    %v3738 = vsel %vm3134, %v3677, 0
    %v3741 = vsel %vm3134, %v3678, 0
    %3743 = vmatprep.subr.mxu0 0.0
    %3744 = vmatpush1.msra.mxu0 0.0
    %3745 = vmatprep.subr.mxu0 0.0
    %3746 = vmatpush1.msra.mxu0 0.0
    %3747 = vmatprep.subr.mxu0 0.0
    %3748 = vmatpush1.msra.mxu0 0.0
    %3749 = vmatprep.subr.mxu0 0.0
    %3750 = vmatpush1.msra.mxu0 0.0
    %3751 = vmatprep.subr.mxu0 0.0
    %3752 = vmatpush1.msra.mxu0 0.0
    %3753 = vmatprep.subr.mxu0 0.0
    %3754 = vmatpush1.msra.mxu0 0.0
    %3755 = vmatprep.subr.mxu0 0.0
    %3756 = vmatpush1.msra.mxu0 0.0
    %3757 = vmatprep.subr.mxu0 0.0
    %3758 = vmatpush1.msra.mxu0 %v3687
    %3759 = vmatprep.subr.mxu0 0.0
    %3760 = vmatpush1.msra.mxu0 %v3686
    %3761 = vmatprep.subr.mxu0 0.0
    %3762 = vmatpush1.msra.mxu0 %v3685
    %3763 = vmatprep.subr.mxu0 0.0
    %3764 = vmatpush1.msra.mxu0 %v3684
    %3765 = vmatprep.subr.mxu0 0.0
    %3766 = vmatpush1.msra.mxu0 %v3683
    %3767 = vmatprep.subr.mxu0 0.0
    %3768 = vmatpush1.msra.mxu0 %v3682
    %3769 = vmatprep.subr.mxu0 0.0
    %3770 = vmatpush1.msra.mxu0 %v3681
    %3771 = vmatprep.subr.mxu0 0.0
    %3772 = vmatpush1.msra.mxu0 %v3680
    %3773 = vmatprep.subr.mxu0 0.0
    %3774 = vmatpush1.msra.mxu0 %v3679
    %3775 = vmatprep.subr.mxu0 0.0
    %3776 = vmatpush2.msra.mxu0 0.0
    %3777 = vmatprep.subr.mxu0 0.0
    %3778 = vmatpush2.msra.mxu0 0.0
    %3779 = vmatprep.subr.mxu0 0.0
    %3780 = vmatpush2.msra.mxu0 0.0
    %3781 = vmatprep.subr.mxu0 0.0
    %3782 = vmatpush2.msra.mxu0 0.0
    %3783 = vmatprep.subr.mxu0 0.0
    %3784 = vmatpush2.msra.mxu0 0.0
    %3785 = vmatprep.subr.mxu0 0.0
    %3786 = vmatpush2.msra.mxu0 0.0
    %3787 = vmatprep.subr.mxu0 0.0
    %3788 = vmatpush2.msra.mxu0 0.0
    %3789 = vmatprep.subr.mxu0 0.0
    %3790 = vmatpush2.msra.mxu0 0.0
    %3791 = vmatprep.subr.mxu0 0.0
    %3792 = vmatpush2.msra.mxu0 0.0
    %3793 = vmatprep.subr.mxu0 0.0
    %3794 = vmatpush2.msra.mxu0 0.0
    %3795 = vmatprep.subr.mxu0 0.0
    %3796 = vmatpush2.msra.mxu0 0.0
    %3797 = vmatprep.subr.mxu0 0.0
    %3798 = vmatpush2.msra.mxu0 0.0
    %3799 = vmatprep.subr.mxu0 0.0
    %3800 = vmatpush2.msra.mxu0 0.0
    %3801 = vmatprep.subr.mxu0 0.0
    %3802 = vmatpush2.msra.mxu0 0.0
    %3803 = vmatprep.subr.mxu0 0.0
    %3804 = vmatpush2.msra.mxu0 0.0
    %3805 = vmatprep.subr.mxu0 0.0
    %3806 = vmatpush2.msra.mxu0 0.0
    %3807 = vmatprep.mubr.f32.mxu0 0.0
    %3808 = vmatmul.mubr.f32.gmra.mxu0 %v3696
    %v3809 = vpop.f32.mrf.mxu0
    %v3810 = vadd.f32 %v3693, %v3809
    %v3811 = vpop.f32.mrf.mxu0
    %3812 = vmatprep.mubr.f32.mxu0 0.0
    %3813 = vmatmul.mubr.f32.gmra.mxu0 %v3699
    %v3814 = vpop.f32.mrf.mxu0
    %v3815 = vadd.f32 %v3693, %v3814
    %v3816 = vpop.f32.mrf.mxu0
    %3817 = vmatprep.mubr.f32.mxu0 0.0
    %3818 = vmatmul.mubr.f32.gmra.mxu0 %v3702
    %v3819 = vpop.f32.mrf.mxu0
    %v3820 = vadd.f32 %v3693, %v3819
    %v3821 = vpop.f32.mrf.mxu0
    %3822 = vmatprep.mubr.f32.mxu0 0.0
    %3823 = vmatmul.mubr.f32.gmra.mxu0 %v3705
    %v3824 = vpop.f32.mrf.mxu0
    %v3825 = vadd.f32 %v3693, %v3824
    %v3826 = vpop.f32.mrf.mxu0
    %3827 = vmatprep.mubr.f32.mxu0 0.0
    %3828 = vmatmul.mubr.f32.gmra.mxu0 %v3708
    %v3829 = vpop.f32.mrf.mxu0
    %v3830 = vadd.f32 %v3693, %v3829
    %v3831 = vpop.f32.mrf.mxu0
    %3832 = vmatprep.mubr.f32.mxu0 0.0
    %3833 = vmatmul.mubr.f32.gmra.mxu0 %v3711
    %v3834 = vpop.f32.mrf.mxu0
    %v3835 = vadd.f32 %v3693, %v3834
    %v3836 = vpop.f32.mrf.mxu0
    %3837 = vmatprep.mubr.f32.mxu0 0.0
    %3838 = vmatmul.mubr.f32.gmra.mxu0 %v3714
    %v3839 = vpop.f32.mrf.mxu0
    %v3840 = vadd.f32 %v3693, %v3839
    %v3841 = vpop.f32.mrf.mxu0
    %3842 = vmatprep.mubr.f32.mxu0 0.0
    %3843 = vmatmul.mubr.f32.gmra.mxu0 %v3717
    %v3844 = vpop.f32.mrf.mxu0
    %v3845 = vadd.f32 %v3693, %v3844
    %v3846 = vpop.f32.mrf.mxu0
    %3847 = vmatprep.mubr.f32.mxu0 0.0
    %3848 = vmatmul.mubr.f32.gmra.mxu0 %v3720
    %v3849 = vpop.f32.mrf.mxu0
    %v3850 = vadd.f32 %v3693, %v3849
    %v3851 = vpop.f32.mrf.mxu0
    %3852 = vmatprep.mubr.f32.mxu0 0.0
    %3853 = vmatmul.mubr.f32.gmra.mxu0 %v3723
    %v3854 = vpop.f32.mrf.mxu0
    %v3855 = vadd.f32 %v3693, %v3854
    %v3856 = vpop.f32.mrf.mxu0
    %3857 = vmatprep.mubr.f32.mxu0 0.0
    %3858 = vmatmul.mubr.f32.gmra.mxu0 %v3726
    %v3859 = vpop.f32.mrf.mxu0
    %v3860 = vadd.f32 %v3693, %v3859
    %v3861 = vpop.f32.mrf.mxu0
    %3862 = vmatprep.mubr.f32.mxu0 0.0
    %3863 = vmatmul.mubr.f32.gmra.mxu0 %v3729
    %v3864 = vpop.f32.mrf.mxu0
    %v3865 = vadd.f32 %v3693, %v3864
    %v3866 = vpop.f32.mrf.mxu0
    %3867 = vmatprep.mubr.f32.mxu0 0.0
    %3868 = vmatmul.mubr.f32.gmra.mxu0 %v3732
    %v3869 = vpop.f32.mrf.mxu0
    %v3870 = vadd.f32 %v3693, %v3869
    %v3871 = vpop.f32.mrf.mxu0
    %3872 = vmatprep.mubr.f32.mxu0 0.0
    %3873 = vmatmul.mubr.f32.gmra.mxu0 %v3735
    %v3874 = vpop.f32.mrf.mxu0
    %v3875 = vadd.f32 %v3693, %v3874
    %v3876 = vpop.f32.mrf.mxu0
    %3877 = vmatprep.mubr.f32.mxu0 0.0
    %3878 = vmatmul.mubr.f32.gmra.mxu0 %v3738
    %v3879 = vpop.f32.mrf.mxu0
    %v3880 = vadd.f32 %v3693, %v3879
    %v3881 = vpop.f32.mrf.mxu0
    %3882 = vmatprep.mubr.f32.mxu0 0.0
    %3883 = vmatmul.mubr.f32.gmra.mxu0 %v3741
    %v3884 = vpop.f32.mrf.mxu0
    %v3885 = vadd.f32 %v3693, %v3884
    %v3886 = vpop.f32.mrf.mxu0
    %3887 = vdwg.mxu0
    %v3888 = vmax.f32 %v3810, 0.0
    %v3889 = vmax.f32 %v3815, 0.0
    %v3890 = vmax.f32 %v3820, 0.0
    %v3891 = vmax.f32 %v3825, 0.0
    %v3892 = vmax.f32 %v3830, 0.0
    %v3893 = vmax.f32 %v3835, 0.0
    %v3894 = vmax.f32 %v3840, 0.0
    %v3895 = vmax.f32 %v3845, 0.0
    %v3896 = vmax.f32 %v3850, 0.0
    %v3897 = vmax.f32 %v3855, 0.0
    %v3898 = vmax.f32 %v3860, 0.0
    %v3899 = vmax.f32 %v3865, 0.0
    %v3900 = vmax.f32 %v3870, 0.0
    %v3901 = vmax.f32 %v3875, 0.0
    %v3902 = vmax.f32 %v3880, 0.0
    %v3903 = vmax.f32 %v3885, 0.0
    %v3904 = vmax.f32 %v3888, %v3889
    %v3905 = vmax.f32 %v3890, %v3891
    %v3906 = vmax.f32 %v3892, %v3893
    %v3907 = vmax.f32 %v3894, %v3895
    %v3908 = vmax.f32 %v3896, %v3897
    %v3909 = vmax.f32 %v3898, %v3899
    %v3910 = vmax.f32 %v3900, %v3901
    %v3911 = vmax.f32 %v3902, %v3903
    %vm3912 = vcmask 130048
    %3913 = vst.msk [vmem:[#allocation5] sm:$0xff] %vm3912, %v3904
    %3914 = vst.msk [vmem:[#allocation5 + $0x8] sm:$0xff] %vm3912, %v3905
    %3915 = vst.msk [vmem:[#allocation5 + $0x10] sm:$0xff] %vm3912, %v3906
    %3916 = vst.msk [vmem:[#allocation5 + $0x18] sm:$0xff] %vm3912, %v3907
    %3917 = vst.msk [vmem:[#allocation5 + $0x20] sm:$0xff] %vm3912, %v3908
    %3918 = vst.msk [vmem:[#allocation5 + $0x28] sm:$0xff] %vm3912, %v3909
    %3919 = vst.msk [vmem:[#allocation5 + $0x30] sm:$0xff] %vm3912, %v3910
    %3920 = vst.msk [vmem:[#allocation5 + $0x38] sm:$0xff] %vm3912, %v3911
    %v3921 = vld [vmem:[#allocation5] ss:$2 sm:$0xff]
    %s3922 = scalar_lea.vmem [#allocation5], 16
    %v3923 = vld [vmem:[%s3922] ss:$2 sm:$0xff]
    %s3924 = scalar_lea.vmem [#allocation5], 32
    %v3925 = vld [vmem:[%s3924] ss:$2 sm:$0xff]
    %s3926 = scalar_lea.vmem [#allocation5], 48
    %v3927 = vld [vmem:[%s3926] ss:$2 sm:$0xff]
    %s3928 = scalar_lea.vmem [#allocation5], 1
    %v3929 = vld [vmem:[%s3928] ss:$2 sm:$0xff]
    %s3930 = scalar_lea.vmem [#allocation5], 17
    %v3931 = vld [vmem:[%s3930] ss:$2 sm:$0xff]
    %s3932 = scalar_lea.vmem [#allocation5], 33
    %v3933 = vld [vmem:[%s3932] ss:$2 sm:$0xff]
    %s3934 = scalar_lea.vmem [#allocation5], 49
    %v3935 = vld [vmem:[%s3934] ss:$2 sm:$0xff]
    %v3936 = vmax.f32 %v3921, %v3929
    %v3937 = vmax.f32 %v3923, %v3931
    %v3938 = vmax.f32 %v3925, %v3933
    %v3939 = vmax.f32 %v3927, %v3935
    %v3942 = vrot.slane %v3936, 1
    %v3943 = vrot.slane %v3938, 1
    %v3946 = vadd.f32 %v3936, %v3942
    %v3947 = vadd.f32 %v3938, %v3943
    %v3948 = vrot.slane %v3936, 4
    %v3949 = vrot.slane %v3938, 4
    %v3952 = vadd.f32 %v3946, %v3948
    %v3953 = vadd.f32 %v3947, %v3949
    %v3954 = vrot.slane %v3936, 5
    %v3955 = vrot.slane %v3938, 5
    %v3958 = vadd.f32 %v3952, %v3954
    %v3959 = vadd.f32 %v3953, %v3955
    %v3960 = vmul.f32 %v3958, 0.25
    %v3961 = vmul.f32 %v3959, 0.25
    %v3964 = vrot.slane %v3961, 7
    %vm3965 = vcmask 1041409
    %v3966 = vsel %vm3965, %v3964, %v3960
    %vm3968 = vcmask 123904
    %3969 = vst.msk [vmem:[#allocation6] sm:$0x3] %vm3968, %v3966
    %vm3970 = vcmask 1043459
    %v3971 = vsel %vm3970, %v3964, %v3960
    %3972 = vrot.lane.b32.xlu0 %v3971, 16
    %v3973 = vpop.permute.xlu0 %3972
    %vm3975 = vcmask 257154
    %3976 = vst.msk [vmem:[#allocation6 - $0x2] sm:$0xc] %vm3975, %v3973
    %v3979 = vrot.slane %v3937, 1
    %v3980 = vrot.slane %v3939, 1
    %v3983 = vadd.f32 %v3937, %v3979
    %v3984 = vadd.f32 %v3939, %v3980
    %v3985 = vrot.slane %v3937, 4
    %v3986 = vrot.slane %v3939, 4
    %v3989 = vadd.f32 %v3983, %v3985
    %v3990 = vadd.f32 %v3984, %v3986
    %v3991 = vrot.slane %v3937, 5
    %v3992 = vrot.slane %v3939, 5
    %v3995 = vadd.f32 %v3989, %v3991
    %v3996 = vadd.f32 %v3990, %v3992
    %v3997 = vmul.f32 %v3995, 0.25
    %v3998 = vmul.f32 %v3996, 0.25
    %v4001 = vrot.slane %v3998, 7
    %v4002 = vsel %vm3965, %v4001, %v3997
    %4003 = vrot.lane.b32.xlu0 %v4002, 32
    %v4004 = vpop.permute.xlu0 %4003
    %vm4006 = vcmask 386304
    %4007 = vst.msk [vmem:[#allocation6] sm:$0x3] %vm4006, %v4004
    %v4008 = vsel %vm3970, %v4001, %v3997
    %4009 = vrot.lane.b32.xlu0 %v4008, 48
    %v4010 = vpop.permute.xlu0 %4009
    %vm4012 = vcmask 519554
    %4013 = vst.msk [vmem:[#allocation6 - $0x2] sm:$0xc] %vm4012, %v4010
    %v4014 = vld [vmem:[#allocation6] sm:$0x3]
    %v4015 = vld [vmem:[%s5] sm:$0xff]
    %v4016 = vld [vmem:[%s5 + $0x8] sm:$0xff]
    %v4017 = vld [vmem:[%s5 + $0x10] sm:$0xff]
    %v4018 = vld [vmem:[%s5 + $0x18] sm:$0xff]
    %v4019 = vld [vmem:[%s5 + $0x20] sm:$0xff]
    %v4020 = vld [vmem:[%s5 + $0x28] sm:$0xff]
    %v4021 = vld [vmem:[%s5 + $0x30] sm:$0xff]
    %v4022 = vld [vmem:[%s5 + $0x38] sm:$0xff]
    %v4023 = vld [vmem:[%s6] sm:$0x1]
    %v4025 = vlaneseq
    %v4026 = vshrl.u32 %v4025, 7
    %v4027 = vsub.s32 0, %v4026
    %v4028 = vrot.slane %v4023, %v4027
    %vm4030 = vcmask 523264
    %v4032 = vsel %vm4030, %v4014, 0
    %4034 = vmatprep.subr.mxu0 0.0
    %4035 = vmatpush1.msra.mxu0 0.0
    %4036 = vmatprep.subr.mxu0 0.0
    %4037 = vmatpush1.msra.mxu0 0.0
    %4038 = vmatprep.subr.mxu0 0.0
    %4039 = vmatpush1.msra.mxu0 0.0
    %4040 = vmatprep.subr.mxu0 0.0
    %4041 = vmatpush1.msra.mxu0 0.0
    %4042 = vmatprep.subr.mxu0 0.0
    %4043 = vmatpush1.msra.mxu0 0.0
    %4044 = vmatprep.subr.mxu0 0.0
    %4045 = vmatpush1.msra.mxu0 0.0
    %4046 = vmatprep.subr.mxu0 0.0
    %4047 = vmatpush1.msra.mxu0 0.0
    %4048 = vmatprep.subr.mxu0 0.0
    %4049 = vmatpush1.msra.mxu0 0.0
    %4050 = vmatprep.subr.mxu0 0.0
    %4051 = vmatpush1.msra.mxu0 %v4022
    %4052 = vmatprep.subr.mxu0 0.0
    %4053 = vmatpush1.msra.mxu0 %v4021
    %4054 = vmatprep.subr.mxu0 0.0
    %4055 = vmatpush1.msra.mxu0 %v4020
    %4056 = vmatprep.subr.mxu0 0.0
    %4057 = vmatpush1.msra.mxu0 %v4019
    %4058 = vmatprep.subr.mxu0 0.0
    %4059 = vmatpush1.msra.mxu0 %v4018
    %4060 = vmatprep.subr.mxu0 0.0
    %4061 = vmatpush1.msra.mxu0 %v4017
    %4062 = vmatprep.subr.mxu0 0.0
    %4063 = vmatpush1.msra.mxu0 %v4016
    %4064 = vmatprep.subr.mxu0 0.0
    %4065 = vmatpush1.msra.mxu0 %v4015
    %4066 = vmatprep.subr.mxu0 0.0
    %4067 = vmatpush2.msra.mxu0 0.0
    %4068 = vmatprep.subr.mxu0 0.0
    %4069 = vmatpush2.msra.mxu0 0.0
    %4070 = vmatprep.subr.mxu0 0.0
    %4071 = vmatpush2.msra.mxu0 0.0
    %4072 = vmatprep.subr.mxu0 0.0
    %4073 = vmatpush2.msra.mxu0 0.0
    %4074 = vmatprep.subr.mxu0 0.0
    %4075 = vmatpush2.msra.mxu0 0.0
    %4076 = vmatprep.subr.mxu0 0.0
    %4077 = vmatpush2.msra.mxu0 0.0
    %4078 = vmatprep.subr.mxu0 0.0
    %4079 = vmatpush2.msra.mxu0 0.0
    %4080 = vmatprep.subr.mxu0 0.0
    %4081 = vmatpush2.msra.mxu0 0.0
    %4082 = vmatprep.subr.mxu0 0.0
    %4083 = vmatpush2.msra.mxu0 0.0
    %4084 = vmatprep.subr.mxu0 0.0
    %4085 = vmatpush2.msra.mxu0 0.0
    %4086 = vmatprep.subr.mxu0 0.0
    %4087 = vmatpush2.msra.mxu0 0.0
    %4088 = vmatprep.subr.mxu0 0.0
    %4089 = vmatpush2.msra.mxu0 0.0
    %4090 = vmatprep.subr.mxu0 0.0
    %4091 = vmatpush2.msra.mxu0 0.0
    %4092 = vmatprep.subr.mxu0 0.0
    %4093 = vmatpush2.msra.mxu0 0.0
    %4094 = vmatprep.subr.mxu0 0.0
    %4095 = vmatpush2.msra.mxu0 0.0
    %4096 = vmatprep.subr.mxu0 0.0
    %4097 = vmatpush2.msra.mxu0 0.0
    %4098 = vmatprep.mubr.f32.mxu0 0.0
    %4099 = vmatmul.mubr.f32.gmra.mxu0 %v4032
    %v4100 = vpop.f32.mrf.mxu0
    %v4101 = vadd.f32 %v4028, %v4100
    %v4102 = vpop.f32.mrf.mxu0
    %4103 = vdwg.mxu0
    %v4104 = vmax.f32 %v4101, 0.0
    %v4105 = vld [vmem:[%s7] sm:$0xff]
    %v4106 = vld [vmem:[%s7 + $0x8] sm:$0xff]
    %v4107 = vld [vmem:[%s7 + $0x10] sm:$0xff]
    %v4108 = vld [vmem:[%s7 + $0x18] sm:$0xff]
    %v4109 = vld [vmem:[%s8] sm:$0x1]
    %v4111 = vlaneseq
    %v4112 = vshrl.u32 %v4111, 7
    %v4113 = vsub.s32 0, %v4112
    %v4114 = vrot.slane %v4109, %v4113
    %vm4116 = vcmask 261120
    %v4118 = vsel %vm4116, %v4104, 0
    %4120 = vmatprep.subr.mxu0 0.0
    %4121 = vmatpush1.msra.mxu0 0.0
    %4122 = vmatprep.subr.mxu0 0.0
    %4123 = vmatpush1.msra.mxu0 0.0
    %4124 = vmatprep.subr.mxu0 0.0
    %4125 = vmatpush1.msra.mxu0 0.0
    %4126 = vmatprep.subr.mxu0 0.0
    %4127 = vmatpush1.msra.mxu0 0.0
    %4128 = vmatprep.subr.mxu0 0.0
    %4129 = vmatpush1.msra.mxu0 0.0
    %4130 = vmatprep.subr.mxu0 0.0
    %4131 = vmatpush1.msra.mxu0 0.0
    %4132 = vmatprep.subr.mxu0 0.0
    %4133 = vmatpush1.msra.mxu0 0.0
    %4134 = vmatprep.subr.mxu0 0.0
    %4135 = vmatpush1.msra.mxu0 0.0
    %4136 = vmatprep.subr.mxu0 0.0
    %4137 = vmatpush1.msra.mxu0 0.0
    %4138 = vmatprep.subr.mxu0 0.0
    %4139 = vmatpush1.msra.mxu0 0.0
    %4140 = vmatprep.subr.mxu0 0.0
    %4141 = vmatpush1.msra.mxu0 0.0
    %4142 = vmatprep.subr.mxu0 0.0
    %4143 = vmatpush1.msra.mxu0 0.0
    %4144 = vmatprep.subr.mxu0 0.0
    %4145 = vmatpush1.msra.mxu0 %v4108
    %4146 = vmatprep.subr.mxu0 0.0
    %4147 = vmatpush1.msra.mxu0 %v4107
    %4148 = vmatprep.subr.mxu0 0.0
    %4149 = vmatpush1.msra.mxu0 %v4106
    %4150 = vmatprep.subr.mxu0 0.0
    %4151 = vmatpush1.msra.mxu0 %v4105
    %4152 = vmatprep.subr.mxu0 0.0
    %4153 = vmatpush2.msra.mxu0 0.0
    %4154 = vmatprep.subr.mxu0 0.0
    %4155 = vmatpush2.msra.mxu0 0.0
    %4156 = vmatprep.subr.mxu0 0.0
    %4157 = vmatpush2.msra.mxu0 0.0
    %4158 = vmatprep.subr.mxu0 0.0
    %4159 = vmatpush2.msra.mxu0 0.0
    %4160 = vmatprep.subr.mxu0 0.0
    %4161 = vmatpush2.msra.mxu0 0.0
    %4162 = vmatprep.subr.mxu0 0.0
    %4163 = vmatpush2.msra.mxu0 0.0
    %4164 = vmatprep.subr.mxu0 0.0
    %4165 = vmatpush2.msra.mxu0 0.0
    %4166 = vmatprep.subr.mxu0 0.0
    %4167 = vmatpush2.msra.mxu0 0.0
    %4168 = vmatprep.subr.mxu0 0.0
    %4169 = vmatpush2.msra.mxu0 0.0
    %4170 = vmatprep.subr.mxu0 0.0
    %4171 = vmatpush2.msra.mxu0 0.0
    %4172 = vmatprep.subr.mxu0 0.0
    %4173 = vmatpush2.msra.mxu0 0.0
    %4174 = vmatprep.subr.mxu0 0.0
    %4175 = vmatpush2.msra.mxu0 0.0
    %4176 = vmatprep.subr.mxu0 0.0
    %4177 = vmatpush2.msra.mxu0 0.0
    %4178 = vmatprep.subr.mxu0 0.0
    %4179 = vmatpush2.msra.mxu0 0.0
    %4180 = vmatprep.subr.mxu0 0.0
    %4181 = vmatpush2.msra.mxu0 0.0
    %4182 = vmatprep.subr.mxu0 0.0
    %4183 = vmatpush2.msra.mxu0 0.0
    %4184 = vmatprep.mubr.f32.mxu0 0.0
    %4185 = vmatmul.mubr.f32.gmra.mxu0 %v4118
    %v4186 = vpop.f32.mrf.mxu0
    %v4187 = vadd.f32 %v4114, %v4186
    %v4188 = vpop.f32.mrf.mxu0
    %4189 = vdwg.mxu0
    %vm4190 = vcmask 254976
    %4191 = vst.msk [vmem:[#allocation7] sm:$0x3] %vm4190, %v4187
    // Predicated region
    $region38: #{feature_extractor.1} parent=1 // pred_check
      _
    $region39: #{feature_extractor.1} parent=1 // pred_check_branch
      %4193 = sbr.rel (0) target = $region41
    $region40: #{feature_extractor.1} parent=1 // pred_region
      %s4195 = ssub.s32 32, 32
      %4196 = vsyncadd [#allocation8], %s4195
      %s4198 = sshll.u32 [#allocation7], 4
      %s4199 = int_to_ptr.vmem [resolvable:$true] %s4198
      %4201 = dma.vmem_to_hbm [thread:$0]  %s4199, 32, %s9, [#allocation8]
    $region41: #{feature_extractor.1} parent=1 // pred_fallthru
      _
    // Predicated region
    $region42: #{feature_extractor.1} parent=1 // pred_check
      _
    $region43: #{feature_extractor.1} parent=1 // pred_check_branch
      %4203 = sbr.rel (0) target = $region45
    $region44: #{feature_extractor.1} parent=1 // pred_region
      %4204 = dma.done [#allocation8], 32
    $region45: #{feature_extractor.1} parent=1 // pred_fallthru
      _
    %4205 = vsyncpa [#allocation8], 1

</llo_original>
